<compile_context>
chip_gen: v7x
topology: tpu7x:2x2x1
jax: 0.10.0
libtpu: 0.0.40
codegen_flags: <defaults>
</compile_context>

<pallas_src>
import functools

import jax
import jax.numpy as jnp
from jax.experimental import pallas as pl
from jax.experimental.pallas import tpu as pltpu

EPS = 1e-5
LANES = 128
SUBLANES = 8


def _round_up(x, m):
    return (x + m - 1) // m * m


# ----------------------------- Pallas kernels ------------------------------

def _conv1_relu_kernel(x_ref, w_ref, o_ref):
    """Layer 1: stride-2 k=4 conv as ONE packed-K MXU matmul, fused ReLU."""
    y = jnp.dot(x_ref[...], w_ref[...], preferred_element_type=jnp.float32)
    o_ref[...] = jnp.maximum(y, 0.0).astype(o_ref.dtype)


def _conv_bn_relu_kernel(x_ref, w_ref, g_ref, b_ref, mask_ref, o_ref, acc_ref,
                         *, whp, rows_out, m_valid, eps):
    """Stride-2 / k=4 / pad=1 conv + training-mode BatchNorm + ReLU, fused.

    Grid axis 0 = the 4 (h, w) phases of the space-to-depth decomposition
    ("arbitrary" reduction axis).  Each step matmuls the whole (aligned)
    phase slab against its 4 tap matrices and applies the (dh, dw) tap
    offsets to the f32 results (32-bit relayouts) so no packed-bf16 operand
    is ever loaded at an unaligned sublane offset.  The accumulator init is
    folded into step 0; the last step computes masked two-pass batch
    statistics, applies BN + ReLU and stores bf16.
    """
    p = pl.program_id(0)

    win = x_ref[0, :, :]                      # whole bf16 phase slab, aligned
    acc = None
    for j, (dh, dw) in enumerate(((0, 0), (0, 1), (1, 0), (1, 1))):
        d = jnp.dot(win, w_ref[j], preferred_element_type=jnp.float32)
        off = dh * whp + dw                   # static; shift the f32 result
        d = d[off:off + rows_out]
        acc = d if acc is None else acc + d

    @pl.when(p == 0)
    def _init():                              # fold init into first step
        acc_ref[...] = acc

    @pl.when(p != 0)
    def _accum():
        acc_ref[...] += acc

    @pl.when(p == pl.num_programs(0) - 1)
    def _finalize():
        y = acc_ref[...]
        msk = mask_ref[...]                   # 1.0 on valid (n, ho, wo) rows
        inv_m = 1.0 / float(m_valid)
        mean = jnp.sum(y * msk, axis=0, keepdims=True) * inv_m
        dev = (y - mean) * msk                # exact two-pass variance
        var = jnp.sum(dev * dev, axis=0, keepdims=True) * inv_m
        yn = (y - mean) * jax.lax.rsqrt(var + eps) * g_ref[...] + b_ref[...]
        o_ref[...] = jnp.maximum(yn, 0.0).astype(o_ref.dtype)


def _fc_kernel(x_ref, w_ref, b_ref, o_ref):
    o_ref[...] = (jnp.dot(x_ref[...].astype(jnp.bfloat16), w_ref[...],
                          preferred_element_type=jnp.float32) + b_ref[...])


# ------------------------------ Pallas wrappers -----------------------------

def conv1_relu_pallas(cols, w, *, tm):
    M, K = cols.shape
    N = w.shape[1]
    return pl.pallas_call(
        _conv1_relu_kernel,
        out_shape=jax.ShapeDtypeStruct((M, N), jnp.bfloat16),
        grid=(M // tm,),
        in_specs=[pl.BlockSpec((tm, K), lambda i: (i, 0)),
                  pl.BlockSpec((K, N), lambda i: (0, 0))],
        out_specs=pl.BlockSpec((tm, N), lambda i: (i, 0)),
        compiler_params=pltpu.CompilerParams(
            dimension_semantics=("parallel",)),
    )(cols, w)


def conv_bn_relu_pallas(slabs, w_taps, gamma, beta, mask, *, whp, rows_out,
                        m_valid):
    _, rows_in, cin = slabs.shape
    cout = w_taps.shape[-1]
    kernel = functools.partial(_conv_bn_relu_kernel, whp=whp,
                               rows_out=rows_out, m_valid=m_valid, eps=EPS)
    return pl.pallas_call(
        kernel,
        out_shape=jax.ShapeDtypeStruct((rows_out, cout), jnp.bfloat16),
        grid=(4,),
        in_specs=[
            # one bf16 phase slab per step (each slab DMA'd exactly once)
            pl.BlockSpec((1, rows_in, cin), lambda p: (p, 0, 0)),
            # the 4 bf16 tap matrices of this phase (each DMA'd exactly once)
            pl.BlockSpec((4, cin, cout), lambda p: (p, 0, 0)),
            pl.BlockSpec((1, cout), lambda p: (0, 0)),
            pl.BlockSpec((1, cout), lambda p: (0, 0)),
            pl.BlockSpec((rows_out, 1), lambda p: (0, 0)),
        ],
        out_specs=pl.BlockSpec((rows_out, cout), lambda p: (0, 0)),
        scratch_shapes=[pltpu.VMEM((rows_out, cout), jnp.float32)],
        # NOTE: at realistic N*H*W, tile M with partial-sum BN stats and set
        # pltpu.CompilerParams(vmem_limit_bytes=...) explicitly.
        compiler_params=pltpu.CompilerParams(
            dimension_semantics=("arbitrary",)),
    )(slabs, w_taps, gamma, beta, mask)


def fc_pallas(x, w_bf16, bias_row):
    M, K = x.shape
    N = w_bf16.shape[1]
    tm = M if M < 128 else 128
    return pl.pallas_call(
        _fc_kernel,
        out_shape=jax.ShapeDtypeStruct((M, N), jnp.float32),
        grid=(pl.cdiv(M, tm),),
        in_specs=[pl.BlockSpec((tm, K), lambda i: (i, 0)),
                  pl.BlockSpec((K, N), lambda i: (0, 0)),
                  pl.BlockSpec((1, N), lambda i: (0, 0))],
        out_specs=pl.BlockSpec((tm, N), lambda i: (i, 0)),
        compiler_params=pltpu.CompilerParams(
            dimension_semantics=("parallel",)),
    )(x, w_bf16, bias_row)


# ------------------------------- glue (JAX) ---------------------------------

def _im2col_stride2(x):
    """(N, H, W, Cin) -> (N*Ho*Wo, 16*Cin): layer-1 taps packed along K,
    ordered (kh, kw) major / cin minor to match the packed weight."""
    n, h, w, cin = x.shape
    ho, wo = h // 2, w // 2
    xp = jnp.pad(x, ((0, 0), (1, 1), (1, 1), (0, 0)))
    taps = [xp[:, kh::2, kw::2, :][:, :ho, :wo, :]
            for kh in range(4) for kw in range(4)]
    return jnp.stack(taps, axis=3).reshape(n * ho * wo, 16 * cin)


def repack_to_slabs(img, meta):
    """(N, H, W, C) bf16 image -> (4, rows_in, C) bf16 phase slabs.

    Phase (ph, pw) holds the zero-padded rows 2i+ph / cols 2j+pw, flattened
    over (n, i, j) with the row pitch padded to Whp (multiple of 8 sublanes)
    plus trailing zero halo rows, so the conv kernel can address tap (dh, dw)
    as flat offset dh*Whp + dw.  Single bf16 copy-fusion per layer."""
    n, h, w, c = img.shape
    hh, wh, whp, rows_in = meta["Hh"], meta["Wh"], meta["Whp"], meta["rows_in"]
    yp = jnp.pad(img, ((0, 0), (1, 1), (1, 1), (0, 0)))
    slabs = []
    for ph in (0, 1):
        for pw in (0, 1):
            s = yp[:, ph::2, pw::2, :][:, :hh, :wh, :]
            s = jnp.pad(s, ((0, 0), (0, 0), (0, whp - wh), (0, 0)))
            s = s.reshape(n * hh * whp, c)
            slabs.append(jnp.pad(s, ((0, rows_in - n * hh * whp), (0, 0))))
    return jnp.stack(slabs)


def prepare_params(params, n_channel, dim_h, n_z):
    """One-time conversion of PyTorch-layout weights to kernel layout."""
    def pad2(a, r, c):
        return jnp.pad(a, ((0, r - a.shape[0]), (0, c - a.shape[1])))

    def row_vec(v, c):
        return jnp.pad(v.astype(jnp.float32).reshape(1, -1),
                       ((0, 0), (0, c - v.shape[0])))

    def conv_taps(w_oihw, cin_p, cout_p):
        taps = []
        for ph in (0, 1):
            for pw in (0, 1):
                for dh in (0, 1):
                    for dw in (0, 1):
                        kh, kw = 2 * dh + ph, 2 * dw + pw
                        taps.append(pad2(w_oihw[:, :, kh, kw].T, cin_p, cout_p))
        return jnp.stack(taps).astype(jnp.bfloat16)

    # layer 1: all 16 taps packed along K (K = 16*cin zero-padded to 128).
    w1 = params["w1"]
    cout1_p = _round_up(w1.shape[0], LANES)
    k1 = 16 * n_channel
    k1_p = _round_up(k1, LANES)
    w1_rows = jnp.transpose(w1, (2, 3, 1, 0)).reshape(k1, w1.shape[0])
    prep = {"n_z": n_z, "k1": k1, "k1_p": k1_p,
            "w1": pad2(w1_rows, k1_p, cout1_p).astype(jnp.bfloat16),
            "conv": []}

    cin_p = cout1_p
    for wk, gk, bk in (("w2", "g2", "b2"), ("w3", "g3", "b3"),
                       ("w4", "g4", "b4")):
        w = params[wk]
        cout_p = _round_up(w.shape[0], LANES)
        prep["conv"].append({
            "w": conv_taps(w, cin_p, cout_p),
            # zero-padded gamma/beta keep padded channels exactly 0
            "g": row_vec(params[gk], cout_p),
            "b": row_vec(params[bk], cout_p),
        })
        cin_p = cout_p
    nz_p = _round_up(n_z, LANES)
    prep["fc_w"] = pad2(params["fc_w"].T, cin_p, nz_p).astype(jnp.bfloat16)
    prep["fc_b"] = row_vec(params["fc_b"], nz_p)
    return prep


def build_plan(batch, spatial):
    """Static per-layer geometry (halo-grid shapes, BN masks), built once."""
    plan = {"conv": []}
    ho1 = spatial // 2
    m1 = batch * ho1 * ho1
    plan["l1"] = dict(Ho=ho1, Wo=ho1, M=m1, Mp=_round_up(m1, 128), tm=128)

    h = ho1                                   # input spatial of layer 2
    for _ in range(3):                        # layers 2, 3, 4
        ho = h // 2
        hh = wh = ho + 1
        whp = _round_up(wh, SUBLANES)         # sublane-aligned row pitch
        rows_out = batch * hh * whp
        rows_in = rows_out + whp + 16         # room for dh/dw result shifts
        mask = jnp.pad(jnp.ones((batch, ho, ho), jnp.float32),
                       ((0, 0), (0, hh - ho), (0, whp - ho))
                       ).reshape(rows_out, 1)
        plan["conv"].append(dict(Ho=ho, Wo=ho, Hh=hh, Wh=wh, Whp=whp,
                                 rows_out=rows_out, rows_in=rows_in,
                                 m_valid=batch * ho * ho, mask=mask))
        h = ho
    return plan


def encoder_forward(x_nchw, prep, plan):
    n = x_nchw.shape[0]
    x = jnp.transpose(x_nchw, (0, 2, 3, 1)).astype(jnp.float32)

    # ---- layer 1: packed-K conv + ReLU (M-tiled, "parallel") ----
    l1 = plan["l1"]
    cols = _im2col_stride2(x)
    cols = jnp.pad(cols, ((0, l1["Mp"] - l1["M"]),
                          (0, prep["k1_p"] - prep["k1"])))
    y1 = conv1_relu_pallas(cols.astype(jnp.bfloat16), prep["w1"], tm=l1["tm"])
    img = y1[:l1["M"]].reshape(n, l1["Ho"], l1["Wo"], -1)      # bf16 carry

    # ---- layers 2-4: fused conv + BN + ReLU ----
    for layer, meta in zip(prep["conv"], plan["conv"]):
        slabs = repack_to_slabs(img, meta)
        y = conv_bn_relu_pallas(slabs, layer["w"], layer["g"], layer["b"],
                                meta["mask"], whp=meta["Whp"],
                                rows_out=meta["rows_out"],
                                m_valid=meta["m_valid"])
        img = (y.reshape(n, meta["Hh"], meta["Whp"], -1)
               [:, :meta["Ho"], :meta["Wo"], :])

    # final spatial is 1x1 (== x.squeeze() in the PyTorch module)
    feat = img.reshape(n, -1)
    out = fc_pallas(feat, prep["fc_w"], prep["fc_b"])
    return out[:, :prep["n_z"]]


# --------------------------- reference (pure JAX) ---------------------------
# Same precision policy as the kernels: bf16 matmul operands, f32
# accumulation, f32 BatchNorm statistics.

def reference_forward(x_nchw, params):
    def conv(h, w):
        return jax.lax.conv_general_dilated(
            h.astype(jnp.bfloat16), w.astype(jnp.bfloat16),
            window_strides=(2, 2), padding=((1, 1), (1, 1)),
            dimension_numbers=("NCHW", "OIHW", "NCHW"),
            preferred_element_type=jnp.float32)

    def bn(h, g, b):
        mean = jnp.mean(h, axis=(0, 2, 3), keepdims=True)
        var = jnp.mean(jnp.square(h - mean), axis=(0, 2, 3), keepdims=True)
        return ((h - mean) * jax.lax.rsqrt(var + EPS)
                * g.reshape(1, -1, 1, 1) + b.reshape(1, -1, 1, 1))

    h = jax.nn.relu(conv(x_nchw.astype(jnp.float32), params["w1"]))
    h = jax.nn.relu(bn(conv(h, params["w2"]), params["g2"], params["b2"]))
    h = jax.nn.relu(bn(conv(h, params["w3"]), params["g3"], params["b3"]))
    h = jax.nn.relu(bn(conv(h, params["w4"]), params["g4"], params["b4"]))
    feat = h.reshape(h.shape[0], -1)          # squeeze of (N, C, 1, 1)
    return (jnp.dot(feat.astype(jnp.bfloat16),
                    params["fc_w"].T.astype(jnp.bfloat16),
                    preferred_element_type=jnp.float32) + params["fc_b"])


# --------------------------------- main -------------------------------------

def make_params(key, n_channel, dim_h, n_z):
    ks = jax.random.split(key, 12)
    f32 = jnp.float32

    def w(k, shape, fan_in):
        return jax.random.normal(k, shape, f32) * (1.0 / jnp.sqrt(fan_in))

    return {
        "w1": w(ks[0], (dim_h, n_channel, 4, 4), n_channel * 16),
        "w2": w(ks[1], (dim_h * 2, dim_h, 4, 4), dim_h * 16),
        "w3": w(ks[2], (dim_h * 4, dim_h * 2, 4, 4), dim_h * 2 * 16),
        "w4": w(ks[3], (dim_h * 8, dim_h * 4, 4, 4), dim_h * 4 * 16),
        "g2": 1.0 + 0.1 * jax.random.normal(ks[4], (dim_h * 2,), f32),
        "b2": 0.1 * jax.random.normal(ks[5], (dim_h * 2,), f32),
        "g3": 1.0 + 0.1 * jax.random.normal(ks[6], (dim_h * 4,), f32),
        "b3": 0.1 * jax.random.normal(ks[7], (dim_h * 4,), f32),
        "g4": 1.0 + 0.1 * jax.random.normal(ks[8], (dim_h * 8,), f32),
        "b4": 0.1 * jax.random.normal(ks[9], (dim_h * 8,), f32),
        "fc_w": w(ks[10], (n_z, dim_h * 8), dim_h * 8),
        "fc_b": 0.1 * jax.random.normal(ks[11], (n_z,), f32),
    }


if __name__ == "__main__":
    # args: n_channel=1 (MNIST-like), dim_h=8, n_z=8; 16x16 input so that four
    # stride-2 convs give 1x1 spatial and fc input dim = dim_h * 2**3.
    n_channel, dim_h, n_z = 1, 8, 8
    batch, spatial = 2, 16

    key = jax.random.PRNGKey(0)
    k_x, k_p = jax.random.split(key)
    x = jax.random.normal(k_x, (batch, n_channel, spatial, spatial),
                          jnp.float32)
    params = make_params(k_p, n_channel, dim_h, n_z)
    prep = prepare_params(params, n_channel, dim_h, n_z)   # weight layouts, once
    plan = build_plan(batch, spatial)                      # geometry/masks, once

    fwd = jax.jit(lambda inp: encoder_forward(inp, prep, plan))
    out = jax.block_until_ready(fwd(x))
    assert out.shape == (batch, n_z), out.shape

    ref = jax.block_until_ready(reference_forward(x, params))
    err = float(jnp.max(jnp.abs(out - ref)))
    assert jnp.allclose(out, ref, rtol=2e-2, atol=2e-2), err

    print("KERNEL_OK")
</pallas_src>

<mosaic_0001>
module attributes {stable_mosaic.version = 11 : i64} {
  func.func @_conv1_relu_kernel(%arg0: i32, %arg1: memref<128x128xbf16, #tpu.memory_space<vmem>>, %arg2: memref<128x128xbf16, #tpu.memory_space<vmem>>, %arg3: memref<128x128xbf16, #tpu.memory_space<vmem>>) attributes {dimension_semantics = [#tpu.dimension_semantics<parallel>], iteration_bounds = array<i64: 1>, scalar_prefetch = 0 : i64, scratch_operands = 0 : i64, tpu.core_type = #tpu.core_type<tc>, window_params = [{transform_indices = @transform_0, window_bounds = array<i64: 128, 128>}, {pipeline_mode = #tpu.pipeline_mode<synchronous>, transform_indices = @transform_1, window_bounds = array<i64: 128, 128>}, {transform_indices = @transform_2, window_bounds = array<i64: 128, 128>}]} {
    %c0 = arith.constant 0 : index
    %c0_0 = arith.constant 0 : index
    %0 = vector.load %arg1[%c0, %c0_0] : memref<128x128xbf16, #tpu.memory_space<vmem>>, vector<128x128xbf16>
    %c0_1 = arith.constant 0 : index
    %c0_2 = arith.constant 0 : index
    %1 = vector.load %arg2[%c0_1, %c0_2] : memref<128x128xbf16, #tpu.memory_space<vmem>>, vector<128x128xbf16>
    %cst = arith.constant dense<0.000000e+00> : vector<128x128xf32>
    %2 = tpu.matmul %0, %1, %cst {dimension_numbers = #tpu.dot_dimension_numbers<[1], [0], [0], [1], [0, 0, 1, 1], [], []>} : vector<128x128xbf16>, vector<128x128xbf16>, vector<128x128xf32> -> vector<128x128xf32>
    %cst_3 = arith.constant 0.000000e+00 : f32
    %3 = vector.broadcast %cst_3 : f32 to vector<128x128xf32>
    %4 = arith.maximumf %2, %3 : vector<128x128xf32>
    %5 = arith.truncf %4 : vector<128x128xf32> to vector<128x128xbf16>
    %c0_4 = arith.constant 0 : index
    %c0_5 = arith.constant 0 : index
    %6 = vector.load %arg3[%c0_4, %c0_5] : memref<128x128xbf16, #tpu.memory_space<vmem>>, vector<128x128xbf16>
    tpu.vector_store %arg3[%c0_4, %c0_5], %5 {strides = array<i32>} : memref<128x128xbf16, #tpu.memory_space<vmem>>, vector<128x128xbf16>,
    return
  }
  func.func @transform_0(%arg0: i32) -> (i32, i32) {
    %c0_i32 = arith.constant 0 : i32
    %c0_i32_0 = arith.constant 0 : i32
    return %arg0, %c0_i32 : i32, i32
  }
  func.func @transform_1(%arg0: i32) -> (i32, i32) {
    %c0_i32 = arith.constant 0 : i32
    %c0_i32_0 = arith.constant 0 : i32
    %c0_i32_1 = arith.constant 0 : i32
    return %c0_i32, %c0_i32_0 : i32, i32
  }
  func.func @transform_2(%arg0: i32) -> (i32, i32) {
    %c0_i32 = arith.constant 0 : i32
    %c0_i32_0 = arith.constant 0 : i32
    return %arg0, %c0_i32 : i32, i32
  }
}

module attributes {stable_mosaic.version = 11 : i64} {
  func.func @_conv_bn_relu_kernel(%arg0: i32, %arg1: memref<1x104x128xbf16, #tpu.memory_space<vmem>>, %arg2: memref<4x128x128xbf16, #tpu.memory_space<vmem>>, %arg3: memref<1x128xf32, #tpu.memory_space<vmem>>, %arg4: memref<1x128xf32, #tpu.memory_space<vmem>>, %arg5: memref<80x1xf32, #tpu.memory_space<vmem>>, %arg6: memref<80x128xbf16, #tpu.memory_space<vmem>>, %arg7: memref<80x128xf32, #tpu.memory_space<vmem>>) attributes {dimension_semantics = [#tpu.dimension_semantics<arbitrary>], iteration_bounds = array<i64: 4>, scalar_prefetch = 0 : i64, scratch_operands = 1 : i64, tpu.core_type = #tpu.core_type<tc>, window_params = [{transform_indices = @transform_0, window_bounds = array<i64: 1, 104, 128>}, {transform_indices = @transform_1, window_bounds = array<i64: 4, 128, 128>}, {pipeline_mode = #tpu.pipeline_mode<synchronous>, transform_indices = @transform_2, window_bounds = array<i64: 1, 128>}, {pipeline_mode = #tpu.pipeline_mode<synchronous>, transform_indices = @transform_3, window_bounds = array<i64: 1, 128>}, {pipeline_mode = #tpu.pipeline_mode<synchronous>, transform_indices = @transform_4, window_bounds = array<i64: 80, 1>}, {pipeline_mode = #tpu.pipeline_mode<synchronous>, transform_indices = @transform_5, window_bounds = array<i64: 80, 128>}]} {
    %c0 = arith.constant 0 : index
    %c0_0 = arith.constant 0 : index
    %c0_1 = arith.constant 0 : index
    %0 = vector.load %arg1[%c0, %c0_0, %c0_1] : memref<1x104x128xbf16, #tpu.memory_space<vmem>>, vector<1x104x128xbf16>
    %1 = vector.shape_cast %0 : vector<1x104x128xbf16> to vector<104x128xbf16>
    %c0_2 = arith.constant 0 : index
    %c0_3 = arith.constant 0 : index
    %c0_4 = arith.constant 0 : index
    %2 = vector.load %arg2[%c0_2, %c0_3, %c0_4] : memref<4x128x128xbf16, #tpu.memory_space<vmem>>, vector<1x128x128xbf16>
    %3 = vector.shape_cast %2 : vector<1x128x128xbf16> to vector<128x128xbf16>
    %cst = arith.constant dense<0.000000e+00> : vector<104x128xf32>
    %4 = tpu.matmul %1, %3, %cst {dimension_numbers = #tpu.dot_dimension_numbers<[1], [0], [0], [1], [0, 0, 1, 1], [], []>} : vector<104x128xbf16>, vector<128x128xbf16>, vector<104x128xf32> -> vector<104x128xf32>
    %5 = vector.extract_strided_slice %4 {offsets = [0, 0], sizes = [80, 128], strides = [1, 1]} : vector<104x128xf32> to vector<80x128xf32>
    %c1 = arith.constant 1 : index
    %c0_5 = arith.constant 0 : index
    %c0_6 = arith.constant 0 : index
    %6 = vector.load %arg2[%c1, %c0_5, %c0_6] : memref<4x128x128xbf16, #tpu.memory_space<vmem>>, vector<1x128x128xbf16>
    %7 = vector.shape_cast %6 : vector<1x128x128xbf16> to vector<128x128xbf16>
    %cst_7 = arith.constant dense<0.000000e+00> : vector<104x128xf32>
    %8 = tpu.matmul %1, %7, %cst_7 {dimension_numbers = #tpu.dot_dimension_numbers<[1], [0], [0], [1], [0, 0, 1, 1], [], []>} : vector<104x128xbf16>, vector<128x128xbf16>, vector<104x128xf32> -> vector<104x128xf32>
    %9 = vector.extract_strided_slice %8 {offsets = [1, 0], sizes = [80, 128], strides = [1, 1]} : vector<104x128xf32> to vector<80x128xf32>
    %10 = arith.addf %5, %9 : vector<80x128xf32>
    %c2 = arith.constant 2 : index
    %c0_8 = arith.constant 0 : index
    %c0_9 = arith.constant 0 : index
    %11 = vector.load %arg2[%c2, %c0_8, %c0_9] : memref<4x128x128xbf16, #tpu.memory_space<vmem>>, vector<1x128x128xbf16>
    %12 = vector.shape_cast %11 : vector<1x128x128xbf16> to vector<128x128xbf16>
    %cst_10 = arith.constant dense<0.000000e+00> : vector<104x128xf32>
    %13 = tpu.matmul %1, %12, %cst_10 {dimension_numbers = #tpu.dot_dimension_numbers<[1], [0], [0], [1], [0, 0, 1, 1], [], []>} : vector<104x128xbf16>, vector<128x128xbf16>, vector<104x128xf32> -> vector<104x128xf32>
    %14 = vector.extract_strided_slice %13 {offsets = [8, 0], sizes = [80, 128], strides = [1, 1]} : vector<104x128xf32> to vector<80x128xf32>
    %15 = arith.addf %10, %14 : vector<80x128xf32>
    %c3 = arith.constant 3 : index
    %c0_11 = arith.constant 0 : index
    %c0_12 = arith.constant 0 : index
    %16 = vector.load %arg2[%c3, %c0_11, %c0_12] : memref<4x128x128xbf16, #tpu.memory_space<vmem>>, vector<1x128x128xbf16>
    %17 = vector.shape_cast %16 : vector<1x128x128xbf16> to vector<128x128xbf16>
    %cst_13 = arith.constant dense<0.000000e+00> : vector<104x128xf32>
    %18 = tpu.matmul %1, %17, %cst_13 {dimension_numbers = #tpu.dot_dimension_numbers<[1], [0], [0], [1], [0, 0, 1, 1], [], []>} : vector<104x128xbf16>, vector<128x128xbf16>, vector<104x128xf32> -> vector<104x128xf32>
    %19 = vector.extract_strided_slice %18 {offsets = [9, 0], sizes = [80, 128], strides = [1, 1]} : vector<104x128xf32> to vector<80x128xf32>
    %20 = arith.addf %15, %19 : vector<80x128xf32>
    %c0_i32 = arith.constant 0 : i32
    %21 = arith.cmpi eq, %arg0, %c0_i32 : i32
    %22 = arith.extui %21 : i1 to i32
    %c0_i32_14 = arith.constant 0 : i32
    %23 = arith.cmpi ne, %22, %c0_i32_14 : i32
    scf.if %23 {
      %c0_18 = arith.constant 0 : index
      %c0_19 = arith.constant 0 : index
      %30 = vector.load %arg7[%c0_18, %c0_19] : memref<80x128xf32, #tpu.memory_space<vmem>>, vector<80x128xf32>
      tpu.vector_store %arg7[%c0_18, %c0_19], %20 {strides = array<i32>} : memref<80x128xf32, #tpu.memory_space<vmem>>, vector<80x128xf32>,
    } else {
    }
    %c0_i32_15 = arith.constant 0 : i32
    %24 = arith.cmpi ne, %arg0, %c0_i32_15 : i32
    %25 = arith.extui %24 : i1 to i32
    %c0_i32_16 = arith.constant 0 : i32
    %26 = arith.cmpi ne, %25, %c0_i32_16 : i32
    scf.if %26 {
      %c0_18 = arith.constant 0 : index
      %c0_19 = arith.constant 0 : index
      %30 = vector.load %arg7[%c0_18, %c0_19] : memref<80x128xf32, #tpu.memory_space<vmem>>, vector<80x128xf32>
      %31 = arith.addf %30, %20 : vector<80x128xf32>
      %c0_20 = arith.constant 0 : index
      %c0_21 = arith.constant 0 : index
      %32 = vector.load %arg7[%c0_20, %c0_21] : memref<80x128xf32, #tpu.memory_space<vmem>>, vector<80x128xf32>
      tpu.vector_store %arg7[%c0_20, %c0_21], %31 {strides = array<i32>} : memref<80x128xf32, #tpu.memory_space<vmem>>, vector<80x128xf32>,
    } else {
    }
    %c3_i32 = arith.constant 3 : i32
    %27 = arith.cmpi eq, %arg0, %c3_i32 : i32
    %28 = arith.extui %27 : i1 to i32
    %c0_i32_17 = arith.constant 0 : i32
    %29 = arith.cmpi ne, %28, %c0_i32_17 : i32
    scf.if %29 {
      %c0_18 = arith.constant 0 : index
      %c0_19 = arith.constant 0 : index
      %30 = vector.load %arg7[%c0_18, %c0_19] : memref<80x128xf32, #tpu.memory_space<vmem>>, vector<80x128xf32>
      %c0_20 = arith.constant 0 : index
      %c0_21 = arith.constant 0 : index
      %31 = vector.load %arg5[%c0_20, %c0_21] : memref<80x1xf32, #tpu.memory_space<vmem>>, vector<80x1xf32>
      %32 = vector.broadcast %31 : vector<80x1xf32> to vector<80x128xf32>
      %33 = arith.mulf %30, %32 : vector<80x128xf32>
      %cst_22 = arith.constant dense<0.000000e+00> : vector<128xf32>
      %34 = vector.multi_reduction <add>, %33, %cst_22 [0] : vector<80x128xf32> to vector<128xf32>
      %35 = vector.shape_cast %34 : vector<128xf32> to vector<1x128xf32>
      %cst_23 = arith.constant 3.125000e-02 : f32
      %36 = vector.broadcast %cst_23 : f32 to vector<1x128xf32>
      %37 = arith.mulf %35, %36 : vector<1x128xf32>
      %38 = vector.broadcast %37 : vector<1x128xf32> to vector<80x128xf32>
      %39 = arith.subf %30, %38 : vector<80x128xf32>
      %40 = vector.broadcast %31 : vector<80x1xf32> to vector<80x128xf32>
      %41 = arith.mulf %39, %40 : vector<80x128xf32>
      %42 = arith.mulf %41, %41 : vector<80x128xf32>
      %cst_24 = arith.constant dense<0.000000e+00> : vector<128xf32>
      %43 = vector.multi_reduction <add>, %42, %cst_24 [0] : vector<80x128xf32> to vector<128xf32>
      %44 = vector.shape_cast %43 : vector<128xf32> to vector<1x128xf32>
      %cst_25 = arith.constant 3.125000e-02 : f32
      %45 = vector.broadcast %cst_25 : f32 to vector<1x128xf32>
      %46 = arith.mulf %44, %45 : vector<1x128xf32>
      %47 = vector.broadcast %37 : vector<1x128xf32> to vector<80x128xf32>
      %48 = arith.subf %30, %47 : vector<80x128xf32>
      %cst_26 = arith.constant 9.99999974E-6 : f32
      %49 = vector.broadcast %cst_26 : f32 to vector<1x128xf32>
      %50 = arith.addf %46, %49 : vector<1x128xf32>
      %51 = math.rsqrt %50 : vector<1x128xf32>
      %52 = vector.broadcast %51 : vector<1x128xf32> to vector<80x128xf32>
      %53 = arith.mulf %48, %52 : vector<80x128xf32>
      %c0_27 = arith.constant 0 : index
      %c0_28 = arith.constant 0 : index
      %54 = vector.load %arg3[%c0_27, %c0_28] : memref<1x128xf32, #tpu.memory_space<vmem>>, vector<1x128xf32>
      %55 = vector.broadcast %54 : vector<1x128xf32> to vector<80x128xf32>
      %56 = arith.mulf %53, %55 : vector<80x128xf32>
      %c0_29 = arith.constant 0 : index
      %c0_30 = arith.constant 0 : index
      %57 = vector.load %arg4[%c0_29, %c0_30] : memref<1x128xf32, #tpu.memory_space<vmem>>, vector<1x128xf32>
      %58 = vector.broadcast %57 : vector<1x128xf32> to vector<80x128xf32>
      %59 = arith.addf %56, %58 : vector<80x128xf32>
      %cst_31 = arith.constant 0.000000e+00 : f32
      %60 = vector.broadcast %cst_31 : f32 to vector<80x128xf32>
      %61 = arith.maximumf %59, %60 : vector<80x128xf32>
      %62 = arith.truncf %61 : vector<80x128xf32> to vector<80x128xbf16>
      %c0_32 = arith.constant 0 : index
      %c0_33 = arith.constant 0 : index
      %63 = vector.load %arg6[%c0_32, %c0_33] : memref<80x128xbf16, #tpu.memory_space<vmem>>, vector<80x128xbf16>
      tpu.vector_store %arg6[%c0_32, %c0_33], %62 {strides = array<i32>} : memref<80x128xbf16, #tpu.memory_space<vmem>>, vector<80x128xbf16>,
    } else {
    }
    return
  }
  func.func @transform_0(%arg0: i32) -> (i32, i32, i32) {
    %c0_i32 = arith.constant 0 : i32
    %c0_i32_0 = arith.constant 0 : i32
    %c0_i32_1 = arith.constant 0 : i32
    return %arg0, %c0_i32, %c0_i32_0 : i32, i32, i32
  }
  func.func @transform_1(%arg0: i32) -> (i32, i32, i32) {
    %c0_i32 = arith.constant 0 : i32
    %c0_i32_0 = arith.constant 0 : i32
    %c0_i32_1 = arith.constant 0 : i32
    return %arg0, %c0_i32, %c0_i32_0 : i32, i32, i32
  }
  func.func @transform_2(%arg0: i32) -> (i32, i32) {
    %c0_i32 = arith.constant 0 : i32
    %c0_i32_0 = arith.constant 0 : i32
    %c0_i32_1 = arith.constant 0 : i32
    return %c0_i32, %c0_i32_0 : i32, i32
  }
  func.func @transform_3(%arg0: i32) -> (i32, i32) {
    %c0_i32 = arith.constant 0 : i32
    %c0_i32_0 = arith.constant 0 : i32
    %c0_i32_1 = arith.constant 0 : i32
    return %c0_i32, %c0_i32_0 : i32, i32
  }
  func.func @transform_4(%arg0: i32) -> (i32, i32) {
    %c0_i32 = arith.constant 0 : i32
    %c0_i32_0 = arith.constant 0 : i32
    %c0_i32_1 = arith.constant 0 : i32
    return %c0_i32, %c0_i32_0 : i32, i32
  }
  func.func @transform_5(%arg0: i32) -> (i32, i32) {
    %c0_i32 = arith.constant 0 : i32
    %c0_i32_0 = arith.constant 0 : i32
    %c0_i32_1 = arith.constant 0 : i32
    return %c0_i32, %c0_i32_0 : i32, i32
  }
}

module attributes {stable_mosaic.version = 11 : i64} {
  func.func @_conv_bn_relu_kernel(%arg0: i32, %arg1: memref<1x72x128xbf16, #tpu.memory_space<vmem>>, %arg2: memref<4x128x128xbf16, #tpu.memory_space<vmem>>, %arg3: memref<1x128xf32, #tpu.memory_space<vmem>>, %arg4: memref<1x128xf32, #tpu.memory_space<vmem>>, %arg5: memref<48x1xf32, #tpu.memory_space<vmem>>, %arg6: memref<48x128xbf16, #tpu.memory_space<vmem>>, %arg7: memref<48x128xf32, #tpu.memory_space<vmem>>) attributes {dimension_semantics = [#tpu.dimension_semantics<arbitrary>], iteration_bounds = array<i64: 4>, scalar_prefetch = 0 : i64, scratch_operands = 1 : i64, tpu.core_type = #tpu.core_type<tc>, window_params = [{transform_indices = @transform_0, window_bounds = array<i64: 1, 72, 128>}, {transform_indices = @transform_1, window_bounds = array<i64: 4, 128, 128>}, {pipeline_mode = #tpu.pipeline_mode<synchronous>, transform_indices = @transform_2, window_bounds = array<i64: 1, 128>}, {pipeline_mode = #tpu.pipeline_mode<synchronous>, transform_indices = @transform_3, window_bounds = array<i64: 1, 128>}, {pipeline_mode = #tpu.pipeline_mode<synchronous>, transform_indices = @transform_4, window_bounds = array<i64: 48, 1>}, {pipeline_mode = #tpu.pipeline_mode<synchronous>, transform_indices = @transform_5, window_bounds = array<i64: 48, 128>}]} {
    %c0 = arith.constant 0 : index
    %c0_0 = arith.constant 0 : index
    %c0_1 = arith.constant 0 : index
    %0 = vector.load %arg1[%c0, %c0_0, %c0_1] : memref<1x72x128xbf16, #tpu.memory_space<vmem>>, vector<1x72x128xbf16>
    %1 = vector.shape_cast %0 : vector<1x72x128xbf16> to vector<72x128xbf16>
    %c0_2 = arith.constant 0 : index
    %c0_3 = arith.constant 0 : index
    %c0_4 = arith.constant 0 : index
    %2 = vector.load %arg2[%c0_2, %c0_3, %c0_4] : memref<4x128x128xbf16, #tpu.memory_space<vmem>>, vector<1x128x128xbf16>
    %3 = vector.shape_cast %2 : vector<1x128x128xbf16> to vector<128x128xbf16>
    %cst = arith.constant dense<0.000000e+00> : vector<72x128xf32>
    %4 = tpu.matmul %1, %3, %cst {dimension_numbers = #tpu.dot_dimension_numbers<[1], [0], [0], [1], [0, 0, 1, 1], [], []>} : vector<72x128xbf16>, vector<128x128xbf16>, vector<72x128xf32> -> vector<72x128xf32>
    %5 = vector.extract_strided_slice %4 {offsets = [0, 0], sizes = [48, 128], strides = [1, 1]} : vector<72x128xf32> to vector<48x128xf32>
    %c1 = arith.constant 1 : index
    %c0_5 = arith.constant 0 : index
    %c0_6 = arith.constant 0 : index
    %6 = vector.load %arg2[%c1, %c0_5, %c0_6] : memref<4x128x128xbf16, #tpu.memory_space<vmem>>, vector<1x128x128xbf16>
    %7 = vector.shape_cast %6 : vector<1x128x128xbf16> to vector<128x128xbf16>
    %cst_7 = arith.constant dense<0.000000e+00> : vector<72x128xf32>
    %8 = tpu.matmul %1, %7, %cst_7 {dimension_numbers = #tpu.dot_dimension_numbers<[1], [0], [0], [1], [0, 0, 1, 1], [], []>} : vector<72x128xbf16>, vector<128x128xbf16>, vector<72x128xf32> -> vector<72x128xf32>
    %9 = vector.extract_strided_slice %8 {offsets = [1, 0], sizes = [48, 128], strides = [1, 1]} : vector<72x128xf32> to vector<48x128xf32>
    %10 = arith.addf %5, %9 : vector<48x128xf32>
    %c2 = arith.constant 2 : index
    %c0_8 = arith.constant 0 : index
    %c0_9 = arith.constant 0 : index
    %11 = vector.load %arg2[%c2, %c0_8, %c0_9] : memref<4x128x128xbf16, #tpu.memory_space<vmem>>, vector<1x128x128xbf16>
    %12 = vector.shape_cast %11 : vector<1x128x128xbf16> to vector<128x128xbf16>
    %cst_10 = arith.constant dense<0.000000e+00> : vector<72x128xf32>
    %13 = tpu.matmul %1, %12, %cst_10 {dimension_numbers = #tpu.dot_dimension_numbers<[1], [0], [0], [1], [0, 0, 1, 1], [], []>} : vector<72x128xbf16>, vector<128x128xbf16>, vector<72x128xf32> -> vector<72x128xf32>
    %14 = vector.extract_strided_slice %13 {offsets = [8, 0], sizes = [48, 128], strides = [1, 1]} : vector<72x128xf32> to vector<48x128xf32>
    %15 = arith.addf %10, %14 : vector<48x128xf32>
    %c3 = arith.constant 3 : index
    %c0_11 = arith.constant 0 : index
    %c0_12 = arith.constant 0 : index
    %16 = vector.load %arg2[%c3, %c0_11, %c0_12] : memref<4x128x128xbf16, #tpu.memory_space<vmem>>, vector<1x128x128xbf16>
    %17 = vector.shape_cast %16 : vector<1x128x128xbf16> to vector<128x128xbf16>
    %cst_13 = arith.constant dense<0.000000e+00> : vector<72x128xf32>
    %18 = tpu.matmul %1, %17, %cst_13 {dimension_numbers = #tpu.dot_dimension_numbers<[1], [0], [0], [1], [0, 0, 1, 1], [], []>} : vector<72x128xbf16>, vector<128x128xbf16>, vector<72x128xf32> -> vector<72x128xf32>
    %19 = vector.extract_strided_slice %18 {offsets = [9, 0], sizes = [48, 128], strides = [1, 1]} : vector<72x128xf32> to vector<48x128xf32>
    %20 = arith.addf %15, %19 : vector<48x128xf32>
    %c0_i32 = arith.constant 0 : i32
    %21 = arith.cmpi eq, %arg0, %c0_i32 : i32
    %22 = arith.extui %21 : i1 to i32
    %c0_i32_14 = arith.constant 0 : i32
    %23 = arith.cmpi ne, %22, %c0_i32_14 : i32
    scf.if %23 {
      %c0_18 = arith.constant 0 : index
      %c0_19 = arith.constant 0 : index
      %30 = vector.load %arg7[%c0_18, %c0_19] : memref<48x128xf32, #tpu.memory_space<vmem>>, vector<48x128xf32>
      tpu.vector_store %arg7[%c0_18, %c0_19], %20 {strides = array<i32>} : memref<48x128xf32, #tpu.memory_space<vmem>>, vector<48x128xf32>,
    } else {
    }
    %c0_i32_15 = arith.constant 0 : i32
    %24 = arith.cmpi ne, %arg0, %c0_i32_15 : i32
    %25 = arith.extui %24 : i1 to i32
    %c0_i32_16 = arith.constant 0 : i32
    %26 = arith.cmpi ne, %25, %c0_i32_16 : i32
    scf.if %26 {
      %c0_18 = arith.constant 0 : index
      %c0_19 = arith.constant 0 : index
      %30 = vector.load %arg7[%c0_18, %c0_19] : memref<48x128xf32, #tpu.memory_space<vmem>>, vector<48x128xf32>
      %31 = arith.addf %30, %20 : vector<48x128xf32>
      %c0_20 = arith.constant 0 : index
      %c0_21 = arith.constant 0 : index
      %32 = vector.load %arg7[%c0_20, %c0_21] : memref<48x128xf32, #tpu.memory_space<vmem>>, vector<48x128xf32>
      tpu.vector_store %arg7[%c0_20, %c0_21], %31 {strides = array<i32>} : memref<48x128xf32, #tpu.memory_space<vmem>>, vector<48x128xf32>,
    } else {
    }
    %c3_i32 = arith.constant 3 : i32
    %27 = arith.cmpi eq, %arg0, %c3_i32 : i32
    %28 = arith.extui %27 : i1 to i32
    %c0_i32_17 = arith.constant 0 : i32
    %29 = arith.cmpi ne, %28, %c0_i32_17 : i32
    scf.if %29 {
      %c0_18 = arith.constant 0 : index
      %c0_19 = arith.constant 0 : index
      %30 = vector.load %arg7[%c0_18, %c0_19] : memref<48x128xf32, #tpu.memory_space<vmem>>, vector<48x128xf32>
      %c0_20 = arith.constant 0 : index
      %c0_21 = arith.constant 0 : index
      %31 = vector.load %arg5[%c0_20, %c0_21] : memref<48x1xf32, #tpu.memory_space<vmem>>, vector<48x1xf32>
      %32 = vector.broadcast %31 : vector<48x1xf32> to vector<48x128xf32>
      %33 = arith.mulf %30, %32 : vector<48x128xf32>
      %cst_22 = arith.constant dense<0.000000e+00> : vector<128xf32>
      %34 = vector.multi_reduction <add>, %33, %cst_22 [0] : vector<48x128xf32> to vector<128xf32>
      %35 = vector.shape_cast %34 : vector<128xf32> to vector<1x128xf32>
      %cst_23 = arith.constant 1.250000e-01 : f32
      %36 = vector.broadcast %cst_23 : f32 to vector<1x128xf32>
      %37 = arith.mulf %35, %36 : vector<1x128xf32>
      %38 = vector.broadcast %37 : vector<1x128xf32> to vector<48x128xf32>
      %39 = arith.subf %30, %38 : vector<48x128xf32>
      %40 = vector.broadcast %31 : vector<48x1xf32> to vector<48x128xf32>
      %41 = arith.mulf %39, %40 : vector<48x128xf32>
      %42 = arith.mulf %41, %41 : vector<48x128xf32>
      %cst_24 = arith.constant dense<0.000000e+00> : vector<128xf32>
      %43 = vector.multi_reduction <add>, %42, %cst_24 [0] : vector<48x128xf32> to vector<128xf32>
      %44 = vector.shape_cast %43 : vector<128xf32> to vector<1x128xf32>
      %cst_25 = arith.constant 1.250000e-01 : f32
      %45 = vector.broadcast %cst_25 : f32 to vector<1x128xf32>
      %46 = arith.mulf %44, %45 : vector<1x128xf32>
      %47 = vector.broadcast %37 : vector<1x128xf32> to vector<48x128xf32>
      %48 = arith.subf %30, %47 : vector<48x128xf32>
      %cst_26 = arith.constant 9.99999974E-6 : f32
      %49 = vector.broadcast %cst_26 : f32 to vector<1x128xf32>
      %50 = arith.addf %46, %49 : vector<1x128xf32>
      %51 = math.rsqrt %50 : vector<1x128xf32>
      %52 = vector.broadcast %51 : vector<1x128xf32> to vector<48x128xf32>
      %53 = arith.mulf %48, %52 : vector<48x128xf32>
      %c0_27 = arith.constant 0 : index
      %c0_28 = arith.constant 0 : index
      %54 = vector.load %arg3[%c0_27, %c0_28] : memref<1x128xf32, #tpu.memory_space<vmem>>, vector<1x128xf32>
      %55 = vector.broadcast %54 : vector<1x128xf32> to vector<48x128xf32>
      %56 = arith.mulf %53, %55 : vector<48x128xf32>
      %c0_29 = arith.constant 0 : index
      %c0_30 = arith.constant 0 : index
      %57 = vector.load %arg4[%c0_29, %c0_30] : memref<1x128xf32, #tpu.memory_space<vmem>>, vector<1x128xf32>
      %58 = vector.broadcast %57 : vector<1x128xf32> to vector<48x128xf32>
      %59 = arith.addf %56, %58 : vector<48x128xf32>
      %cst_31 = arith.constant 0.000000e+00 : f32
      %60 = vector.broadcast %cst_31 : f32 to vector<48x128xf32>
      %61 = arith.maximumf %59, %60 : vector<48x128xf32>
      %62 = arith.truncf %61 : vector<48x128xf32> to vector<48x128xbf16>
      %c0_32 = arith.constant 0 : index
      %c0_33 = arith.constant 0 : index
      %63 = vector.load %arg6[%c0_32, %c0_33] : memref<48x128xbf16, #tpu.memory_space<vmem>>, vector<48x128xbf16>
      tpu.vector_store %arg6[%c0_32, %c0_33], %62 {strides = array<i32>} : memref<48x128xbf16, #tpu.memory_space<vmem>>, vector<48x128xbf16>,
    } else {
    }
    return
  }
  func.func @transform_0(%arg0: i32) -> (i32, i32, i32) {
    %c0_i32 = arith.constant 0 : i32
    %c0_i32_0 = arith.constant 0 : i32
    %c0_i32_1 = arith.constant 0 : i32
    return %arg0, %c0_i32, %c0_i32_0 : i32, i32, i32
  }
  func.func @transform_1(%arg0: i32) -> (i32, i32, i32) {
    %c0_i32 = arith.constant 0 : i32
    %c0_i32_0 = arith.constant 0 : i32
    %c0_i32_1 = arith.constant 0 : i32
    return %arg0, %c0_i32, %c0_i32_0 : i32, i32, i32
  }
  func.func @transform_2(%arg0: i32) -> (i32, i32) {
    %c0_i32 = arith.constant 0 : i32
    %c0_i32_0 = arith.constant 0 : i32
    %c0_i32_1 = arith.constant 0 : i32
    return %c0_i32, %c0_i32_0 : i32, i32
  }
  func.func @transform_3(%arg0: i32) -> (i32, i32) {
    %c0_i32 = arith.constant 0 : i32
    %c0_i32_0 = arith.constant 0 : i32
    %c0_i32_1 = arith.constant 0 : i32
    return %c0_i32, %c0_i32_0 : i32, i32
  }
  func.func @transform_4(%arg0: i32) -> (i32, i32) {
    %c0_i32 = arith.constant 0 : i32
    %c0_i32_0 = arith.constant 0 : i32
    %c0_i32_1 = arith.constant 0 : i32
    return %c0_i32, %c0_i32_0 : i32, i32
  }
  func.func @transform_5(%arg0: i32) -> (i32, i32) {
    %c0_i32 = arith.constant 0 : i32
    %c0_i32_0 = arith.constant 0 : i32
    %c0_i32_1 = arith.constant 0 : i32
    return %c0_i32, %c0_i32_0 : i32, i32
  }
}

module attributes {stable_mosaic.version = 11 : i64} {
  func.func @_conv_bn_relu_kernel(%arg0: i32, %arg1: memref<1x56x128xbf16, #tpu.memory_space<vmem>>, %arg2: memref<4x128x128xbf16, #tpu.memory_space<vmem>>, %arg3: memref<1x128xf32, #tpu.memory_space<vmem>>, %arg4: memref<1x128xf32, #tpu.memory_space<vmem>>, %arg5: memref<32x1xf32, #tpu.memory_space<vmem>>, %arg6: memref<32x128xbf16, #tpu.memory_space<vmem>>, %arg7: memref<32x128xf32, #tpu.memory_space<vmem>>) attributes {dimension_semantics = [#tpu.dimension_semantics<arbitrary>], iteration_bounds = array<i64: 4>, scalar_prefetch = 0 : i64, scratch_operands = 1 : i64, tpu.core_type = #tpu.core_type<tc>, window_params = [{transform_indices = @transform_0, window_bounds = array<i64: 1, 56, 128>}, {transform_indices = @transform_1, window_bounds = array<i64: 4, 128, 128>}, {pipeline_mode = #tpu.pipeline_mode<synchronous>, transform_indices = @transform_2, window_bounds = array<i64: 1, 128>}, {pipeline_mode = #tpu.pipeline_mode<synchronous>, transform_indices = @transform_3, window_bounds = array<i64: 1, 128>}, {pipeline_mode = #tpu.pipeline_mode<synchronous>, transform_indices = @transform_4, window_bounds = array<i64: 32, 1>}, {pipeline_mode = #tpu.pipeline_mode<synchronous>, transform_indices = @transform_5, window_bounds = array<i64: 32, 128>}]} {
    %c0 = arith.constant 0 : index
    %c0_0 = arith.constant 0 : index
    %c0_1 = arith.constant 0 : index
    %0 = vector.load %arg1[%c0, %c0_0, %c0_1] : memref<1x56x128xbf16, #tpu.memory_space<vmem>>, vector<1x56x128xbf16>
    %1 = vector.shape_cast %0 : vector<1x56x128xbf16> to vector<56x128xbf16>
    %c0_2 = arith.constant 0 : index
    %c0_3 = arith.constant 0 : index
    %c0_4 = arith.constant 0 : index
    %2 = vector.load %arg2[%c0_2, %c0_3, %c0_4] : memref<4x128x128xbf16, #tpu.memory_space<vmem>>, vector<1x128x128xbf16>
    %3 = vector.shape_cast %2 : vector<1x128x128xbf16> to vector<128x128xbf16>
    %cst = arith.constant dense<0.000000e+00> : vector<56x128xf32>
    %4 = tpu.matmul %1, %3, %cst {dimension_numbers = #tpu.dot_dimension_numbers<[1], [0], [0], [1], [0, 0, 1, 1], [], []>} : vector<56x128xbf16>, vector<128x128xbf16>, vector<56x128xf32> -> vector<56x128xf32>
    %5 = vector.extract_strided_slice %4 {offsets = [0, 0], sizes = [32, 128], strides = [1, 1]} : vector<56x128xf32> to vector<32x128xf32>
    %c1 = arith.constant 1 : index
    %c0_5 = arith.constant 0 : index
    %c0_6 = arith.constant 0 : index
    %6 = vector.load %arg2[%c1, %c0_5, %c0_6] : memref<4x128x128xbf16, #tpu.memory_space<vmem>>, vector<1x128x128xbf16>
    %7 = vector.shape_cast %6 : vector<1x128x128xbf16> to vector<128x128xbf16>
    %cst_7 = arith.constant dense<0.000000e+00> : vector<56x128xf32>
    %8 = tpu.matmul %1, %7, %cst_7 {dimension_numbers = #tpu.dot_dimension_numbers<[1], [0], [0], [1], [0, 0, 1, 1], [], []>} : vector<56x128xbf16>, vector<128x128xbf16>, vector<56x128xf32> -> vector<56x128xf32>
    %9 = vector.extract_strided_slice %8 {offsets = [1, 0], sizes = [32, 128], strides = [1, 1]} : vector<56x128xf32> to vector<32x128xf32>
    %10 = arith.addf %5, %9 : vector<32x128xf32>
    %c2 = arith.constant 2 : index
    %c0_8 = arith.constant 0 : index
    %c0_9 = arith.constant 0 : index
    %11 = vector.load %arg2[%c2, %c0_8, %c0_9] : memref<4x128x128xbf16, #tpu.memory_space<vmem>>, vector<1x128x128xbf16>
    %12 = vector.shape_cast %11 : vector<1x128x128xbf16> to vector<128x128xbf16>
    %cst_10 = arith.constant dense<0.000000e+00> : vector<56x128xf32>
    %13 = tpu.matmul %1, %12, %cst_10 {dimension_numbers = #tpu.dot_dimension_numbers<[1], [0], [0], [1], [0, 0, 1, 1], [], []>} : vector<56x128xbf16>, vector<128x128xbf16>, vector<56x128xf32> -> vector<56x128xf32>
    %14 = vector.extract_strided_slice %13 {offsets = [8, 0], sizes = [32, 128], strides = [1, 1]} : vector<56x128xf32> to vector<32x128xf32>
    %15 = arith.addf %10, %14 : vector<32x128xf32>
    %c3 = arith.constant 3 : index
    %c0_11 = arith.constant 0 : index
    %c0_12 = arith.constant 0 : index
    %16 = vector.load %arg2[%c3, %c0_11, %c0_12] : memref<4x128x128xbf16, #tpu.memory_space<vmem>>, vector<1x128x128xbf16>
    %17 = vector.shape_cast %16 : vector<1x128x128xbf16> to vector<128x128xbf16>
    %cst_13 = arith.constant dense<0.000000e+00> : vector<56x128xf32>
    %18 = tpu.matmul %1, %17, %cst_13 {dimension_numbers = #tpu.dot_dimension_numbers<[1], [0], [0], [1], [0, 0, 1, 1], [], []>} : vector<56x128xbf16>, vector<128x128xbf16>, vector<56x128xf32> -> vector<56x128xf32>
    %19 = vector.extract_strided_slice %18 {offsets = [9, 0], sizes = [32, 128], strides = [1, 1]} : vector<56x128xf32> to vector<32x128xf32>
    %20 = arith.addf %15, %19 : vector<32x128xf32>
    %c0_i32 = arith.constant 0 : i32
    %21 = arith.cmpi eq, %arg0, %c0_i32 : i32
    %22 = arith.extui %21 : i1 to i32
    %c0_i32_14 = arith.constant 0 : i32
    %23 = arith.cmpi ne, %22, %c0_i32_14 : i32
    scf.if %23 {
      %c0_18 = arith.constant 0 : index
      %c0_19 = arith.constant 0 : index
      %30 = vector.load %arg7[%c0_18, %c0_19] : memref<32x128xf32, #tpu.memory_space<vmem>>, vector<32x128xf32>
      tpu.vector_store %arg7[%c0_18, %c0_19], %20 {strides = array<i32>} : memref<32x128xf32, #tpu.memory_space<vmem>>, vector<32x128xf32>,
    } else {
    }
    %c0_i32_15 = arith.constant 0 : i32
    %24 = arith.cmpi ne, %arg0, %c0_i32_15 : i32
    %25 = arith.extui %24 : i1 to i32
    %c0_i32_16 = arith.constant 0 : i32
    %26 = arith.cmpi ne, %25, %c0_i32_16 : i32
    scf.if %26 {
      %c0_18 = arith.constant 0 : index
      %c0_19 = arith.constant 0 : index
      %30 = vector.load %arg7[%c0_18, %c0_19] : memref<32x128xf32, #tpu.memory_space<vmem>>, vector<32x128xf32>
      %31 = arith.addf %30, %20 : vector<32x128xf32>
      %c0_20 = arith.constant 0 : index
      %c0_21 = arith.constant 0 : index
      %32 = vector.load %arg7[%c0_20, %c0_21] : memref<32x128xf32, #tpu.memory_space<vmem>>, vector<32x128xf32>
      tpu.vector_store %arg7[%c0_20, %c0_21], %31 {strides = array<i32>} : memref<32x128xf32, #tpu.memory_space<vmem>>, vector<32x128xf32>,
    } else {
    }
    %c3_i32 = arith.constant 3 : i32
    %27 = arith.cmpi eq, %arg0, %c3_i32 : i32
    %28 = arith.extui %27 : i1 to i32
    %c0_i32_17 = arith.constant 0 : i32
    %29 = arith.cmpi ne, %28, %c0_i32_17 : i32
    scf.if %29 {
      %c0_18 = arith.constant 0 : index
      %c0_19 = arith.constant 0 : index
      %30 = vector.load %arg7[%c0_18, %c0_19] : memref<32x128xf32, #tpu.memory_space<vmem>>, vector<32x128xf32>
      %c0_20 = arith.constant 0 : index
      %c0_21 = arith.constant 0 : index
      %31 = vector.load %arg5[%c0_20, %c0_21] : memref<32x1xf32, #tpu.memory_space<vmem>>, vector<32x1xf32>
      %32 = vector.broadcast %31 : vector<32x1xf32> to vector<32x128xf32>
      %33 = arith.mulf %30, %32 : vector<32x128xf32>
      %cst_22 = arith.constant dense<0.000000e+00> : vector<128xf32>
      %34 = vector.multi_reduction <add>, %33, %cst_22 [0] : vector<32x128xf32> to vector<128xf32>
      %35 = vector.shape_cast %34 : vector<128xf32> to vector<1x128xf32>
      %cst_23 = arith.constant 5.000000e-01 : f32
      %36 = vector.broadcast %cst_23 : f32 to vector<1x128xf32>
      %37 = arith.mulf %35, %36 : vector<1x128xf32>
      %38 = vector.broadcast %37 : vector<1x128xf32> to vector<32x128xf32>
      %39 = arith.subf %30, %38 : vector<32x128xf32>
      %40 = vector.broadcast %31 : vector<32x1xf32> to vector<32x128xf32>
      %41 = arith.mulf %39, %40 : vector<32x128xf32>
      %42 = arith.mulf %41, %41 : vector<32x128xf32>
      %cst_24 = arith.constant dense<0.000000e+00> : vector<128xf32>
      %43 = vector.multi_reduction <add>, %42, %cst_24 [0] : vector<32x128xf32> to vector<128xf32>
      %44 = vector.shape_cast %43 : vector<128xf32> to vector<1x128xf32>
      %cst_25 = arith.constant 5.000000e-01 : f32
      %45 = vector.broadcast %cst_25 : f32 to vector<1x128xf32>
      %46 = arith.mulf %44, %45 : vector<1x128xf32>
      %47 = vector.broadcast %37 : vector<1x128xf32> to vector<32x128xf32>
      %48 = arith.subf %30, %47 : vector<32x128xf32>
      %cst_26 = arith.constant 9.99999974E-6 : f32
      %49 = vector.broadcast %cst_26 : f32 to vector<1x128xf32>
      %50 = arith.addf %46, %49 : vector<1x128xf32>
      %51 = math.rsqrt %50 : vector<1x128xf32>
      %52 = vector.broadcast %51 : vector<1x128xf32> to vector<32x128xf32>
      %53 = arith.mulf %48, %52 : vector<32x128xf32>
      %c0_27 = arith.constant 0 : index
      %c0_28 = arith.constant 0 : index
      %54 = vector.load %arg3[%c0_27, %c0_28] : memref<1x128xf32, #tpu.memory_space<vmem>>, vector<1x128xf32>
      %55 = vector.broadcast %54 : vector<1x128xf32> to vector<32x128xf32>
      %56 = arith.mulf %53, %55 : vector<32x128xf32>
      %c0_29 = arith.constant 0 : index
      %c0_30 = arith.constant 0 : index
      %57 = vector.load %arg4[%c0_29, %c0_30] : memref<1x128xf32, #tpu.memory_space<vmem>>, vector<1x128xf32>
      %58 = vector.broadcast %57 : vector<1x128xf32> to vector<32x128xf32>
      %59 = arith.addf %56, %58 : vector<32x128xf32>
      %cst_31 = arith.constant 0.000000e+00 : f32
      %60 = vector.broadcast %cst_31 : f32 to vector<32x128xf32>
      %61 = arith.maximumf %59, %60 : vector<32x128xf32>
      %62 = arith.truncf %61 : vector<32x128xf32> to vector<32x128xbf16>
      %c0_32 = arith.constant 0 : index
      %c0_33 = arith.constant 0 : index
      %63 = vector.load %arg6[%c0_32, %c0_33] : memref<32x128xbf16, #tpu.memory_space<vmem>>, vector<32x128xbf16>
      tpu.vector_store %arg6[%c0_32, %c0_33], %62 {strides = array<i32>} : memref<32x128xbf16, #tpu.memory_space<vmem>>, vector<32x128xbf16>,
    } else {
    }
    return
  }
  func.func @transform_0(%arg0: i32) -> (i32, i32, i32) {
    %c0_i32 = arith.constant 0 : i32
    %c0_i32_0 = arith.constant 0 : i32
    %c0_i32_1 = arith.constant 0 : i32
    return %arg0, %c0_i32, %c0_i32_0 : i32, i32, i32
  }
  func.func @transform_1(%arg0: i32) -> (i32, i32, i32) {
    %c0_i32 = arith.constant 0 : i32
    %c0_i32_0 = arith.constant 0 : i32
    %c0_i32_1 = arith.constant 0 : i32
    return %arg0, %c0_i32, %c0_i32_0 : i32, i32, i32
  }
  func.func @transform_2(%arg0: i32) -> (i32, i32) {
    %c0_i32 = arith.constant 0 : i32
    %c0_i32_0 = arith.constant 0 : i32
    %c0_i32_1 = arith.constant 0 : i32
    return %c0_i32, %c0_i32_0 : i32, i32
  }
  func.func @transform_3(%arg0: i32) -> (i32, i32) {
    %c0_i32 = arith.constant 0 : i32
    %c0_i32_0 = arith.constant 0 : i32
    %c0_i32_1 = arith.constant 0 : i32
    return %c0_i32, %c0_i32_0 : i32, i32
  }
  func.func @transform_4(%arg0: i32) -> (i32, i32) {
    %c0_i32 = arith.constant 0 : i32
    %c0_i32_0 = arith.constant 0 : i32
    %c0_i32_1 = arith.constant 0 : i32
    return %c0_i32, %c0_i32_0 : i32, i32
  }
  func.func @transform_5(%arg0: i32) -> (i32, i32) {
    %c0_i32 = arith.constant 0 : i32
    %c0_i32_0 = arith.constant 0 : i32
    %c0_i32_1 = arith.constant 0 : i32
    return %c0_i32, %c0_i32_0 : i32, i32
  }
}

module attributes {stable_mosaic.version = 11 : i64} {
  func.func @_fc_kernel(%arg0: i32, %arg1: memref<2x128xbf16, #tpu.memory_space<vmem>>, %arg2: memref<128x128xbf16, #tpu.memory_space<vmem>>, %arg3: memref<1x128xf32, #tpu.memory_space<vmem>>, %arg4: memref<2x128xf32, #tpu.memory_space<vmem>>) attributes {dimension_semantics = [#tpu.dimension_semantics<parallel>], iteration_bounds = array<i64: 1>, scalar_prefetch = 0 : i64, scratch_operands = 0 : i64, tpu.core_type = #tpu.core_type<tc>, window_params = [{transform_indices = @transform_0, window_bounds = array<i64: 2, 128>}, {pipeline_mode = #tpu.pipeline_mode<synchronous>, transform_indices = @transform_1, window_bounds = array<i64: 128, 128>}, {pipeline_mode = #tpu.pipeline_mode<synchronous>, transform_indices = @transform_2, window_bounds = array<i64: 1, 128>}, {transform_indices = @transform_3, window_bounds = array<i64: 2, 128>}]} {
    %c0 = arith.constant 0 : index
    %c0_0 = arith.constant 0 : index
    %0 = vector.load %arg1[%c0, %c0_0] : memref<2x128xbf16, #tpu.memory_space<vmem>>, vector<2x128xbf16>
    %c0_1 = arith.constant 0 : index
    %c0_2 = arith.constant 0 : index
    %1 = vector.load %arg2[%c0_1, %c0_2] : memref<128x128xbf16, #tpu.memory_space<vmem>>, vector<128x128xbf16>
    %cst = arith.constant dense<0.000000e+00> : vector<2x128xf32>
    %2 = tpu.matmul %0, %1, %cst {dimension_numbers = #tpu.dot_dimension_numbers<[1], [0], [0], [1], [0, 0, 1, 1], [], []>} : vector<2x128xbf16>, vector<128x128xbf16>, vector<2x128xf32> -> vector<2x128xf32>
    %c0_3 = arith.constant 0 : index
    %c0_4 = arith.constant 0 : index
    %3 = vector.load %arg3[%c0_3, %c0_4] : memref<1x128xf32, #tpu.memory_space<vmem>>, vector<1x128xf32>
    %4 = vector.broadcast %3 : vector<1x128xf32> to vector<2x128xf32>
    %5 = arith.addf %2, %4 : vector<2x128xf32>
    %c0_5 = arith.constant 0 : index
    %c0_6 = arith.constant 0 : index
    %6 = vector.load %arg4[%c0_5, %c0_6] : memref<2x128xf32, #tpu.memory_space<vmem>>, vector<2x128xf32>
    tpu.vector_store %arg4[%c0_5, %c0_6], %5 {strides = array<i32>} : memref<2x128xf32, #tpu.memory_space<vmem>>, vector<2x128xf32>,
    return
  }
  func.func @transform_0(%arg0: i32) -> (i32, i32) {
    %c0_i32 = arith.constant 0 : i32
    %c0_i32_0 = arith.constant 0 : i32
    return %arg0, %c0_i32 : i32, i32
  }
  func.func @transform_1(%arg0: i32) -> (i32, i32) {
    %c0_i32 = arith.constant 0 : i32
    %c0_i32_0 = arith.constant 0 : i32
    %c0_i32_1 = arith.constant 0 : i32
    return %c0_i32, %c0_i32_0 : i32, i32
  }
  func.func @transform_2(%arg0: i32) -> (i32, i32) {
    %c0_i32 = arith.constant 0 : i32
    %c0_i32_0 = arith.constant 0 : i32
    %c0_i32_1 = arith.constant 0 : i32
    return %c0_i32, %c0_i32_0 : i32, i32
  }
  func.func @transform_3(%arg0: i32) -> (i32, i32) {
    %c0_i32 = arith.constant 0 : i32
    %c0_i32_0 = arith.constant 0 : i32
    return %arg0, %c0_i32 : i32, i32
  }
}

</mosaic_0001>

<llo_original>
// kernel: _lambda_.5
$region0: #{_lambda_.5}
  #allocation0 [shape = 'u32[]', space=smem, size = 0x4, offset = 0x4, fixed_abs, tag = 'smem constant byte address 0x4 - core index']
  #allocation1 [shape = 'u32[144,128]{1,0:T(1,128)}', space=vmem, size = 0x12000, scoped, tag = 'internal scratch']
  %s0 = inlined_call_operand.vmem [shape: bf16[128,128], index: 0, kind: input, shape index: {}]
  %s1 = inlined_call_operand.vmem [shape: bf16[128,128], index: 1, kind: input, shape index: {}]
  %s2 = inlined_call_operand.vmem [shape: bf16[128,128], index: 2, kind: output, shape index: {}]
  %s3 = sld [smem:[#allocation0]]
  $region18: #{_lambda_.5} parent=0
    _
  %s5 = ssub.s32 1, %s3
  %s6 = scalar_select 0, %s5, %s3
  // Predicated region
  $region2: #{_lambda_.5} parent=0 // pred_check
    _
  $region3: #{_lambda_.5} parent=0 // pred_check_branch
    %8 = sbr.rel (0) target = $region5
  $region4: #{_lambda_.5} parent=0 // pred_region
    _
  $region5: #{_lambda_.5} parent=0 // pred_fallthru
    _
  // Predicated region
  $region6: #{_lambda_.5} parent=0 // pred_check
    _
  $region7: #{_lambda_.5} parent=0 // pred_check_branch
    %10 = sbr.rel (0) target = $region9
  $region8: #{_lambda_.5} parent=0 // pred_region
    _
  $region9: #{_lambda_.5} parent=0 // pred_fallthru
    _
  %v12 = vld [vmem:[%s0] sm:$0xf]
  %v13 = vld [vmem:[%s0 + $0x4] sm:$0xf]
  %v14 = vld [vmem:[%s0 + $0x8] sm:$0xf]
  %v15 = vld [vmem:[%s0 + $0xc] sm:$0xf]
  %v16 = vld [vmem:[%s0 + $0x10] sm:$0xf]
  %v17 = vld [vmem:[%s0 + $0x14] sm:$0xf]
  %v18 = vld [vmem:[%s0 + $0x18] sm:$0xf]
  %v19 = vld [vmem:[%s0 + $0x1c] sm:$0xf]
  %v20 = vld [vmem:[%s0 + $0x20] sm:$0xf]
  %v21 = vld [vmem:[%s0 + $0x24] sm:$0xf]
  %v22 = vld [vmem:[%s0 + $0x28] sm:$0xf]
  %v23 = vld [vmem:[%s0 + $0x2c] sm:$0xf]
  %v24 = vld [vmem:[%s0 + $0x30] sm:$0xf]
  %v25 = vld [vmem:[%s0 + $0x34] sm:$0xf]
  %v26 = vld [vmem:[%s0 + $0x38] sm:$0xf]
  %v27 = vld [vmem:[%s0 + $0x3c] sm:$0xf]
  %v28 = vld [vmem:[%s1] sm:$0xf]
  %v29 = vld [vmem:[%s1 + $0x4] sm:$0xf]
  %v30 = vld [vmem:[%s1 + $0x8] sm:$0xf]
  %v31 = vld [vmem:[%s1 + $0xc] sm:$0xf]
  %v32 = vld [vmem:[%s1 + $0x10] sm:$0xf]
  %v33 = vld [vmem:[%s1 + $0x14] sm:$0xf]
  %v34 = vld [vmem:[%s1 + $0x18] sm:$0xf]
  %v35 = vld [vmem:[%s1 + $0x1c] sm:$0xf]
  %v36 = vld [vmem:[%s1 + $0x20] sm:$0xf]
  %v37 = vld [vmem:[%s1 + $0x24] sm:$0xf]
  %v38 = vld [vmem:[%s1 + $0x28] sm:$0xf]
  %v39 = vld [vmem:[%s1 + $0x2c] sm:$0xf]
  %v40 = vld [vmem:[%s1 + $0x30] sm:$0xf]
  %v41 = vld [vmem:[%s1 + $0x34] sm:$0xf]
  %v42 = vld [vmem:[%s1 + $0x38] sm:$0xf]
  %v43 = vld [vmem:[%s1 + $0x3c] sm:$0xf]
  %v60 = vunpack.c.l.b16 %v12
  %v61 = vunpack.c.l.b16 %v13
  %v62 = vunpack.c.l.b16 %v14
  %v63 = vunpack.c.l.b16 %v15
  %v64 = vunpack.c.l.b16 %v16
  %v65 = vunpack.c.l.b16 %v17
  %v66 = vunpack.c.l.b16 %v18
  %v67 = vunpack.c.l.b16 %v19
  %v68 = vunpack.c.l.b16 %v20
  %v69 = vunpack.c.l.b16 %v21
  %v70 = vunpack.c.l.b16 %v22
  %v71 = vunpack.c.l.b16 %v23
  %v72 = vunpack.c.l.b16 %v24
  %v73 = vunpack.c.l.b16 %v25
  %v74 = vunpack.c.l.b16 %v26
  %v75 = vunpack.c.l.b16 %v27
  %v76 = vpack.c.b16 %v61, %v60
  %v77 = vpack.c.b16 %v63, %v62
  %v78 = vpack.c.b16 %v65, %v64
  %v79 = vpack.c.b16 %v67, %v66
  %v80 = vpack.c.b16 %v69, %v68
  %v81 = vpack.c.b16 %v71, %v70
  %v82 = vpack.c.b16 %v73, %v72
  %v83 = vpack.c.b16 %v75, %v74
  %v108 = vunpack.c.l.b16 %v28
  %v109 = vunpack.c.l.b16 %v29
  %v110 = vunpack.c.l.b16 %v30
  %v111 = vunpack.c.l.b16 %v31
  %v112 = vunpack.c.l.b16 %v32
  %v113 = vunpack.c.l.b16 %v33
  %v114 = vunpack.c.l.b16 %v34
  %v115 = vunpack.c.l.b16 %v35
  %v116 = vunpack.c.l.b16 %v36
  %v117 = vunpack.c.l.b16 %v37
  %v118 = vunpack.c.l.b16 %v38
  %v119 = vunpack.c.l.b16 %v39
  %v120 = vunpack.c.l.b16 %v40
  %v121 = vunpack.c.l.b16 %v41
  %v122 = vunpack.c.l.b16 %v42
  %v123 = vunpack.c.l.b16 %v43
  %v124 = vpack.c.b16 %v109, %v108
  %v125 = vpack.c.b16 %v111, %v110
  %v126 = vpack.c.b16 %v113, %v112
  %v127 = vpack.c.b16 %v115, %v114
  %v128 = vpack.c.b16 %v117, %v116
  %v129 = vpack.c.b16 %v119, %v118
  %v130 = vpack.c.b16 %v121, %v120
  %v131 = vpack.c.b16 %v123, %v122
  %140 = vmatprep.subr.bf16.mxu0 0
  %141 = vmatpush1.bf16.msra.mxu0 %v124
  %142 = vmatprep.subr.bf16.mxu0 0
  %143 = vmatpush1.bf16.msra.mxu0 %v125
  %144 = vmatprep.subr.bf16.mxu0 0
  %145 = vmatpush1.bf16.msra.mxu0 %v126
  %146 = vmatprep.subr.bf16.mxu0 0
  %147 = vmatpush1.bf16.msra.mxu0 %v127
  %148 = vmatprep.subr.bf16.mxu0 0
  %149 = vmatpush1.bf16.msra.mxu0 %v128
  %150 = vmatprep.subr.bf16.mxu0 0
  %151 = vmatpush1.bf16.msra.mxu0 %v129
  %152 = vmatprep.subr.bf16.mxu0 0
  %153 = vmatpush1.bf16.msra.mxu0 %v130
  %154 = vmatprep.subr.bf16.mxu0 0
  %155 = vmatpush1.bf16.msra.mxu0 %v131
  %156 = vmatprep.subr.bf16.mxu0 0
  %157 = vmatpush1.bf16.msra.mxu0 0
  %158 = vmatprep.subr.bf16.mxu0 0
  %159 = vmatpush1.bf16.msra.mxu0 0
  %160 = vmatprep.subr.bf16.mxu0 0
  %161 = vmatpush1.bf16.msra.mxu0 0
  %162 = vmatprep.subr.bf16.mxu0 0
  %163 = vmatpush1.bf16.msra.mxu0 0
  %164 = vmatprep.subr.bf16.mxu0 0
  %165 = vmatpush1.bf16.msra.mxu0 0
  %166 = vmatprep.subr.bf16.mxu0 0
  %167 = vmatpush1.bf16.msra.mxu0 0
  %168 = vmatprep.subr.bf16.mxu0 0
  %169 = vmatpush1.bf16.msra.mxu0 0
  %170 = vmatprep.subr.bf16.mxu0 0
  %171 = vmatpush1.bf16.msra.mxu0 0
  %172 = vmatprep.mubr.bf16.mxu0 0
  %173 = vmatmul.mubr.bf16.gmra.mrb[0].mxu0 %v76
  %v174 = vpop.f32.mrb[0].mxu0
  %v175 = vadd.f32 0.0, %v174
  %v176 = vpop.f32.mrb[0].mxu0
  %v177 = vpop.f32.mrb[0].mxu0
  %v178 = vadd.f32 0.0, %v177
  %v179 = vpop.f32.mrb[0].mxu0
  %180 = vmatprep.mubr.bf16.mxu0 0
  %181 = vmatmul.mubr.bf16.gmra.mrb[0].mxu0 %v77
  %v182 = vpop.f32.mrb[0].mxu0
  %v183 = vadd.f32 0.0, %v182
  %v184 = vpop.f32.mrb[0].mxu0
  %v185 = vpop.f32.mrb[0].mxu0
  %v186 = vadd.f32 0.0, %v185
  %v187 = vpop.f32.mrb[0].mxu0
  %188 = vmatprep.mubr.bf16.mxu0 0
  %189 = vmatmul.mubr.bf16.gmra.mrb[0].mxu0 %v78
  %v190 = vpop.f32.mrb[0].mxu0
  %v191 = vadd.f32 0.0, %v190
  %v192 = vpop.f32.mrb[0].mxu0
  %v193 = vpop.f32.mrb[0].mxu0
  %v194 = vadd.f32 0.0, %v193
  %v195 = vpop.f32.mrb[0].mxu0
  %196 = vmatprep.mubr.bf16.mxu0 0
  %197 = vmatmul.mubr.bf16.gmra.mrb[0].mxu0 %v79
  %v198 = vpop.f32.mrb[0].mxu0
  %v199 = vadd.f32 0.0, %v198
  %v200 = vpop.f32.mrb[0].mxu0
  %v201 = vpop.f32.mrb[0].mxu0
  %v202 = vadd.f32 0.0, %v201
  %v203 = vpop.f32.mrb[0].mxu0
  %204 = vmatprep.mubr.bf16.mxu0 0
  %205 = vmatmul.mubr.bf16.gmra.mrb[0].mxu0 %v80
  %v206 = vpop.f32.mrb[0].mxu0
  %v207 = vadd.f32 0.0, %v206
  %v208 = vpop.f32.mrb[0].mxu0
  %v209 = vpop.f32.mrb[0].mxu0
  %v210 = vadd.f32 0.0, %v209
  %v211 = vpop.f32.mrb[0].mxu0
  %212 = vmatprep.mubr.bf16.mxu0 0
  %213 = vmatmul.mubr.bf16.gmra.mrb[0].mxu0 %v81
  %v214 = vpop.f32.mrb[0].mxu0
  %v215 = vadd.f32 0.0, %v214
  %v216 = vpop.f32.mrb[0].mxu0
  %v217 = vpop.f32.mrb[0].mxu0
  %v218 = vadd.f32 0.0, %v217
  %v219 = vpop.f32.mrb[0].mxu0
  %220 = vmatprep.mubr.bf16.mxu0 0
  %221 = vmatmul.mubr.bf16.gmra.mrb[0].mxu0 %v82
  %v222 = vpop.f32.mrb[0].mxu0
  %v223 = vadd.f32 0.0, %v222
  %v224 = vpop.f32.mrb[0].mxu0
  %v225 = vpop.f32.mrb[0].mxu0
  %v226 = vadd.f32 0.0, %v225
  %v227 = vpop.f32.mrb[0].mxu0
  %228 = vmatprep.mubr.bf16.mxu0 0
  %229 = vmatmul.mubr.bf16.gmra.mrb[0].mxu0 %v83
  %v230 = vpop.f32.mrb[0].mxu0
  %v231 = vadd.f32 0.0, %v230
  %v232 = vpop.f32.mrb[0].mxu0
  %v233 = vpop.f32.mrb[0].mxu0
  %v234 = vadd.f32 0.0, %v233
  %v235 = vpop.f32.mrb[0].mxu0
  %236 = vdwg.mxu0
  %v237 = vmax.f32 %v175, 0.0
  %v238 = vmax.f32 %v178, 0.0
  %v239 = vmax.f32 %v183, 0.0
  %v240 = vmax.f32 %v186, 0.0
  %v241 = vmax.f32 %v191, 0.0
  %v242 = vmax.f32 %v194, 0.0
  %v243 = vmax.f32 %v199, 0.0
  %v244 = vmax.f32 %v202, 0.0
  %v245 = vmax.f32 %v207, 0.0
  %v246 = vmax.f32 %v210, 0.0
  %v247 = vmax.f32 %v215, 0.0
  %v248 = vmax.f32 %v218, 0.0
  %v249 = vmax.f32 %v223, 0.0
  %v250 = vmax.f32 %v226, 0.0
  %v251 = vmax.f32 %v231, 0.0
  %v252 = vmax.f32 %v234, 0.0
  %v253 = vpack.c.bf16 %v238, %v237
  %v254 = vpack.c.bf16 %v240, %v239
  %v255 = vpack.c.bf16 %v242, %v241
  %v256 = vpack.c.bf16 %v244, %v243
  %v257 = vpack.c.bf16 %v246, %v245
  %v258 = vpack.c.bf16 %v248, %v247
  %v259 = vpack.c.bf16 %v250, %v249
  %v260 = vpack.c.bf16 %v252, %v251
  %v269 = vunpack.c.l.b16 %v253
  %v270 = vunpack.c.h.b16 %v253
  %v271 = vunpack.c.l.b16 %v254
  %v272 = vunpack.c.h.b16 %v254
  %v273 = vunpack.c.l.b16 %v255
  %v274 = vunpack.c.h.b16 %v255
  %v275 = vunpack.c.l.b16 %v256
  %v276 = vunpack.c.h.b16 %v256
  %v277 = vunpack.c.l.b16 %v257
  %v278 = vunpack.c.h.b16 %v257
  %v279 = vunpack.c.l.b16 %v258
  %v280 = vunpack.c.h.b16 %v258
  %v281 = vunpack.c.l.b16 %v259
  %v282 = vunpack.c.h.b16 %v259
  %v283 = vunpack.c.l.b16 %v260
  %v284 = vunpack.c.h.b16 %v260
  %v285 = vpack.c.b16 %v269, %v269
  %v286 = vpack.c.b16 %v270, %v270
  %v287 = vpack.c.b16 %v271, %v271
  %v288 = vpack.c.b16 %v272, %v272
  %v289 = vpack.c.b16 %v273, %v273
  %v290 = vpack.c.b16 %v274, %v274
  %v291 = vpack.c.b16 %v275, %v275
  %v292 = vpack.c.b16 %v276, %v276
  %v293 = vpack.c.b16 %v277, %v277
  %v294 = vpack.c.b16 %v278, %v278
  %v295 = vpack.c.b16 %v279, %v279
  %v296 = vpack.c.b16 %v280, %v280
  %v297 = vpack.c.b16 %v281, %v281
  %v298 = vpack.c.b16 %v282, %v282
  %v299 = vpack.c.b16 %v283, %v283
  %v300 = vpack.c.b16 %v284, %v284
  %317 = vst [vmem:[%s2] sm:$0xf] %v285
  %318 = vst [vmem:[%s2 + $0x4] sm:$0xf] %v286
  %319 = vst [vmem:[%s2 + $0x8] sm:$0xf] %v287
  %320 = vst [vmem:[%s2 + $0xc] sm:$0xf] %v288
  %321 = vst [vmem:[%s2 + $0x10] sm:$0xf] %v289
  %322 = vst [vmem:[%s2 + $0x14] sm:$0xf] %v290
  %323 = vst [vmem:[%s2 + $0x18] sm:$0xf] %v291
  %324 = vst [vmem:[%s2 + $0x1c] sm:$0xf] %v292
  %325 = vst [vmem:[%s2 + $0x20] sm:$0xf] %v293
  %326 = vst [vmem:[%s2 + $0x24] sm:$0xf] %v294
  %327 = vst [vmem:[%s2 + $0x28] sm:$0xf] %v295
  %328 = vst [vmem:[%s2 + $0x2c] sm:$0xf] %v296
  %329 = vst [vmem:[%s2 + $0x30] sm:$0xf] %v297
  %330 = vst [vmem:[%s2 + $0x34] sm:$0xf] %v298
  %331 = vst [vmem:[%s2 + $0x38] sm:$0xf] %v299
  %332 = vst [vmem:[%s2 + $0x3c] sm:$0xf] %v300
  // Predicated region
  $region10: #{_lambda_.5} parent=0 // pred_check
    _
  $region11: #{_lambda_.5} parent=0 // pred_check_branch
    %334 = sbr.rel (0) target = $region13
  $region12: #{_lambda_.5} parent=0 // pred_region
    _
  $region13: #{_lambda_.5} parent=0 // pred_fallthru
    _
  // Predicated region
  $region14: #{_lambda_.5} parent=0 // pred_check
    _
  $region15: #{_lambda_.5} parent=0 // pred_check_branch
    %336 = sbr.rel (0) target = $region17
  $region16: #{_lambda_.5} parent=0 // pred_region
    _
  $region17: #{_lambda_.5} parent=0 // pred_fallthru
    _

// kernel: _lambda_.6
$region0: #{_lambda_.6}
  #allocation0 [shape = 'u32[]', space=smem, size = 0x4, offset = 0x4, fixed_abs, tag = 'smem constant byte address 0x4 - core index']
  #allocation1 [shape = 'u32[144,128]{1,0:T(1,128)}', space=vmem, size = 0x12000, scoped, tag = 'internal scratch']
  #allocation2 [shape = 'f32[80,128]{1,0:T(8,128)}', space=vmem, size = 0xa000, scoped, tag = 'scratch operand']
  %s0 = inlined_call_operand.vmem [shape: bf16[4,104,128], index: 0, kind: input, shape index: {}]
  %s1 = inlined_call_operand.vmem [shape: bf16[16,128,128], index: 1, kind: input, shape index: {}]
  %s2 = inlined_call_operand.vmem [shape: f32[1,128], index: 2, kind: input, shape index: {}]
  %s3 = inlined_call_operand.vmem [shape: f32[1,128], index: 3, kind: input, shape index: {}]
  %s4 = inlined_call_operand.vmem [shape: f32[80,1], index: 4, kind: input, shape index: {}]
  %s5 = inlined_call_operand.vmem [shape: bf16[80,128], index: 5, kind: output, shape index: {}]
  %s6 = sld [smem:[#allocation0]]
  $region65: #{_lambda_.6} parent=0
    _
  %s8 = ssub.s32 1, %s6
  %s9 = scalar_select 0, %s8, %s6
  loop: start=0, step=1, limit=6
  $region2: #{_lambda_.6} parent=0 // loop_pre_header
    _
  $region3: #{_lambda_.6} parent=0 // loop_header
    %s11 = sphi 0, %s15
    %p12 = scmp.ge.s32.totalorder %s11, 6
    %s21 = sphi 0, %s23
    %s24 = sphi 0, %s21
    %s25 = sphi 0, %s24
    %s41 = sphi 0, %s25
    %s47 = sphi 0, %s49
    %s50 = sphi 0, %s47
    %s51 = sphi 0, %s50
    %s67 = sphi 0, %s51
    %s71 = sphi 0, %s71
    %s73 = sphi 0, %s71
    %s74 = sphi 0, %s73
    %s88 = sphi 0, %s74
    %s92 = sphi 0, %s92
    %s94 = sphi 0, %s92
    %s95 = sphi 0, %s94
    %s109 = sphi 0, %s95
    %s113 = sphi 0, %s113
    %s115 = sphi 0, %s113
    %s116 = sphi 0, %s115
    %s130 = sphi 0, %s116
    %s134 = sphi 0, %s134
    %s136 = sphi 0, %s134
    %s137 = sphi 0, %s136
    %s151 = sphi 0, %s137
  $region4: #{_lambda_.6} parent=0 // loop_header_branch
    %14 = sbr.rel (%p12) target = $region8
  $region5: #{_lambda_.6} parent=0 // loop_body
    %s16 = ssub.s32 %s11, 1
    %s17 = ssub.s32 %s11, 2
    %s18 = sadd.s32 %s11, 1
    %s19 = ssub.s32 %s11, %s18
    %p20 = scmp.eq.s32.totalorder %s19, 0
    %s22 = sadd.s32 %s21, 1
    %s23 = scalar_select %p20, %s21, %s22
    %p26 = pneg %p20
    %p27 = scmp.eq.s32.totalorder %s11, 3
    %p28 = por %p26, %p27
    %p29 = scmp.ne.s32.totalorder %s21, %s24
    %p30 = scmp.eq.s32.totalorder %s11, 0
    %p31 = por %p29, %p30
    %p32 = scmp.ne.s32.totalorder %s21, %s24
    %p33 = scmp.eq.s32.totalorder %s16, 3
    %p34 = por %p32, %p33
    %p35 = scmp.ne.s32.totalorder %s24, %s25
    %p36 = scmp.eq.s32.totalorder %s16, 0
    %p37 = por %p35, %p36
    %p38 = scmp.ne.s32.totalorder %s24, %s25
    %p39 = scmp.eq.s32.totalorder %s17, 3
    %p40 = por %p38, %p39
    %p42 = scmp.ne.s32.totalorder %s25, %s41
    %p43 = scmp.eq.s32.totalorder %s17, 0
    %p44 = por %p42, %p43
    %s45 = ssub.s32 %s11, %s18
    %p46 = scmp.eq.s32.totalorder %s45, 0
    %s48 = sadd.s32 %s47, 1
    %s49 = scalar_select %p46, %s47, %s48
    %p52 = pneg %p46
    %p53 = scmp.eq.s32.totalorder %s11, 3
    %p54 = por %p52, %p53
    %p55 = scmp.ne.s32.totalorder %s47, %s50
    %p56 = scmp.eq.s32.totalorder %s11, 0
    %p57 = por %p55, %p56
    %p58 = scmp.ne.s32.totalorder %s47, %s50
    %p59 = scmp.eq.s32.totalorder %s16, 3
    %p60 = por %p58, %p59
    %p61 = scmp.ne.s32.totalorder %s50, %s51
    %p62 = scmp.eq.s32.totalorder %s16, 0
    %p63 = por %p61, %p62
    %p64 = scmp.ne.s32.totalorder %s50, %s51
    %p65 = scmp.eq.s32.totalorder %s17, 3
    %p66 = por %p64, %p65
    %p68 = scmp.ne.s32.totalorder %s51, %s67
    %p69 = scmp.eq.s32.totalorder %s17, 0
    %p70 = por %p68, %p69
    %s72 = sadd.s32 %s71, 1
    %p75 = scmp.eq.s32.totalorder %s11, 3
    %p76 = scmp.ne.s32.totalorder %s71, %s73
    %p77 = scmp.eq.s32.totalorder %s11, 0
    %p78 = por %p76, %p77
    %p79 = scmp.ne.s32.totalorder %s71, %s73
    %p80 = scmp.eq.s32.totalorder %s16, 3
    %p81 = por %p79, %p80
    %p82 = scmp.ne.s32.totalorder %s73, %s74
    %p83 = scmp.eq.s32.totalorder %s16, 0
    %p84 = por %p82, %p83
    %p85 = scmp.ne.s32.totalorder %s73, %s74
    %p86 = scmp.eq.s32.totalorder %s17, 3
    %p87 = por %p85, %p86
    %p89 = scmp.ne.s32.totalorder %s74, %s88
    %p90 = scmp.eq.s32.totalorder %s17, 0
    %p91 = por %p89, %p90
    %s93 = sadd.s32 %s92, 1
    %p96 = scmp.eq.s32.totalorder %s11, 3
    %p97 = scmp.ne.s32.totalorder %s92, %s94
    %p98 = scmp.eq.s32.totalorder %s11, 0
    %p99 = por %p97, %p98
    %p100 = scmp.ne.s32.totalorder %s92, %s94
    %p101 = scmp.eq.s32.totalorder %s16, 3
    %p102 = por %p100, %p101
    %p103 = scmp.ne.s32.totalorder %s94, %s95
    %p104 = scmp.eq.s32.totalorder %s16, 0
    %p105 = por %p103, %p104
    %p106 = scmp.ne.s32.totalorder %s94, %s95
    %p107 = scmp.eq.s32.totalorder %s17, 3
    %p108 = por %p106, %p107
    %p110 = scmp.ne.s32.totalorder %s95, %s109
    %p111 = scmp.eq.s32.totalorder %s17, 0
    %p112 = por %p110, %p111
    %s114 = sadd.s32 %s113, 1
    %p117 = scmp.eq.s32.totalorder %s11, 3
    %p118 = scmp.ne.s32.totalorder %s113, %s115
    %p119 = scmp.eq.s32.totalorder %s11, 0
    %p120 = por %p118, %p119
    %p121 = scmp.ne.s32.totalorder %s113, %s115
    %p122 = scmp.eq.s32.totalorder %s16, 3
    %p123 = por %p121, %p122
    %p124 = scmp.ne.s32.totalorder %s115, %s116
    %p125 = scmp.eq.s32.totalorder %s16, 0
    %p126 = por %p124, %p125
    %p127 = scmp.ne.s32.totalorder %s115, %s116
    %p128 = scmp.eq.s32.totalorder %s17, 3
    %p129 = por %p127, %p128
    %p131 = scmp.ne.s32.totalorder %s116, %s130
    %p132 = scmp.eq.s32.totalorder %s17, 0
    %p133 = por %p131, %p132
    %s135 = sadd.s32 %s134, 1
    %p138 = scmp.eq.s32.totalorder %s11, 3
    %p139 = scmp.ne.s32.totalorder %s134, %s136
    %p140 = scmp.eq.s32.totalorder %s11, 0
    %p141 = por %p139, %p140
    %p142 = scmp.ne.s32.totalorder %s134, %s136
    %p143 = scmp.eq.s32.totalorder %s16, 3
    %p144 = por %p142, %p143
    %p145 = scmp.ne.s32.totalorder %s136, %s137
    %p146 = scmp.eq.s32.totalorder %s16, 0
    %p147 = por %p145, %p146
    %p148 = scmp.ne.s32.totalorder %s136, %s137
    %p149 = scmp.eq.s32.totalorder %s17, 3
    %p150 = por %p148, %p149
    %p152 = scmp.ne.s32.totalorder %s137, %s151
    %p153 = scmp.eq.s32.totalorder %s17, 0
    %p154 = por %p152, %p153
    %p155 = scmp.le.s32.totalorder 1, %s11
    %p156 = scmp.lt.s32.totalorder %s11, 5
    %p157 = pnand %p155, %p156
    %p158 = pneg %p157
    // Predicated region
    $region9: #{_lambda_.6} parent=5 // pred_check
      _
    $region10: #{_lambda_.6} parent=5 // pred_check_branch
      %160 = sbr.rel (%p157) target = $region12
    $region11: #{_lambda_.6} parent=5 // pred_region
      %s161 = ssub.s32 %s11, 1
      // Predicated region
      $region13: #{_lambda_.6} parent=11 // pred_check
        %p162 = pneg %p84
      $region14: #{_lambda_.6} parent=11 // pred_check_branch
        %164 = sbr.rel (%p162) target = $region16
      $region15: #{_lambda_.6} parent=11 // pred_region
        _
      $region16: #{_lambda_.6} parent=11 // pred_fallthru
        _
      // Predicated region
      $region17: #{_lambda_.6} parent=11 // pred_check
        %p165 = pneg %p105
      $region18: #{_lambda_.6} parent=11 // pred_check_branch
        %167 = sbr.rel (%p165) target = $region20
      $region19: #{_lambda_.6} parent=11 // pred_region
        _
      $region20: #{_lambda_.6} parent=11 // pred_fallthru
        _
      // Predicated region
      $region21: #{_lambda_.6} parent=11 // pred_check
        %p168 = pneg %p126
      $region22: #{_lambda_.6} parent=11 // pred_check_branch
        %170 = sbr.rel (%p168) target = $region24
      $region23: #{_lambda_.6} parent=11 // pred_region
        _
      $region24: #{_lambda_.6} parent=11 // pred_fallthru
        _
    $region12: #{_lambda_.6} parent=5 // pred_fallthru
      _
    %p171 = scmp.lt.s32.totalorder %s11, 4
    // Predicated region
    $region25: #{_lambda_.6} parent=5 // pred_check
      %p172 = pneg %p171
    $region26: #{_lambda_.6} parent=5 // pred_check_branch
      %174 = sbr.rel (%p172) target = $region28
    $region27: #{_lambda_.6} parent=5 // pred_region
      // Predicated region
      $region29: #{_lambda_.6} parent=27 // pred_check
        %p175 = pneg %p31
      $region30: #{_lambda_.6} parent=27 // pred_check_branch
        %177 = sbr.rel (%p175) target = $region32
      $region31: #{_lambda_.6} parent=27 // pred_region
        %p178 = scmp.lt.s32.totalorder %s11, 3
        %s179 = scalar_select %p178, %s11, 3
        %s180 = smul.addr %s179, 13
        %s181 = smul.addr %s180, 4
        %s182 = scalar_lea.vmem %s0, %s181
      $region32: #{_lambda_.6} parent=27 // pred_fallthru
        _
      // Predicated region
      $region33: #{_lambda_.6} parent=27 // pred_check
        %p183 = pneg %p57
      $region34: #{_lambda_.6} parent=27 // pred_check_branch
        %185 = sbr.rel (%p183) target = $region36
      $region35: #{_lambda_.6} parent=27 // pred_region
        %s186 = smul.u32 4, %s11
        %p187 = scmp.lt.s32.totalorder %s186, 15
        %s188 = scalar_select %p187, %s186, 15
        %s189 = smul.addr %s188, 16
        %s190 = smul.addr %s189, 4
        %s191 = scalar_lea.vmem %s1, %s190
        %s192 = smul.u32 4, %s11
      $region36: #{_lambda_.6} parent=27 // pred_fallthru
        _
    $region28: #{_lambda_.6} parent=5 // pred_fallthru
      _
    %p193 = scmp.le.s32.totalorder 1, %s11
    %p194 = scmp.lt.s32.totalorder %s11, 5
    %p195 = pnand %p193, %p194
    %p196 = pneg %p195
    // Predicated region
    $region37: #{_lambda_.6} parent=5 // pred_check
      _
    $region38: #{_lambda_.6} parent=5 // pred_check_branch
      %198 = sbr.rel (%p195) target = $region40
    $region39: #{_lambda_.6} parent=5 // pred_region
      %s199 = ssub.s32 %s11, 1
      %p200 = scmp.lt.s32.totalorder %s16, 3
      %s201 = scalar_select %p200, %s16, 3
      %s202 = smul.addr %s201, 13
      %s203 = smul.addr %s202, 4
      %s204 = scalar_lea.vmem %s0, %s203
      %p205 = pneg %p37
      %p206 = pneg %p34
      %s207 = smul.u32 4, %s16
      %p208 = scmp.lt.s32.totalorder %s207, 15
      %s209 = scalar_select %p208, %s207, 15
      %s210 = smul.addr %s209, 16
      %s211 = smul.addr %s210, 4
      %s212 = scalar_lea.vmem %s1, %s211
      %p213 = pneg %p63
      %p214 = pneg %p60
      %p215 = pneg %p84
      %p216 = pneg %p81
      %p217 = pneg %p105
      %p218 = pneg %p102
      %p219 = pneg %p126
      %p220 = pneg %p123
      %p221 = pneg %p147
      %p222 = pneg %p144
      %p223 = scmp.lt.s32.totalorder %s16, 3
      %s224 = scalar_select %p223, %s16, 3
      %s225 = smul.addr %s224, 13
      %s226 = smul.addr %s225, 4
      %s227 = scalar_lea.vmem %s0, %s226
      %s228 = smul.u32 4, %s16
      %p229 = scmp.lt.s32.totalorder %s228, 15
      %s230 = scalar_select %p229, %s228, 15
      %s231 = smul.addr %s230, 16
      %s232 = smul.addr %s231, 4
      %s233 = scalar_lea.vmem %s1, %s232
      %s234 = smul.u32 4, %s16
      %v236 = vld [vmem:[%s227] sm:$0xf]
      %v237 = vld [vmem:[%s227 + $0x4] sm:$0xf]
      %v238 = vld [vmem:[%s227 + $0x8] sm:$0xf]
      %v239 = vld [vmem:[%s227 + $0xc] sm:$0xf]
      %v240 = vld [vmem:[%s227 + $0x10] sm:$0xf]
      %v241 = vld [vmem:[%s227 + $0x14] sm:$0xf]
      %v242 = vld [vmem:[%s227 + $0x18] sm:$0xf]
      %v243 = vld [vmem:[%s227 + $0x1c] sm:$0xf]
      %v244 = vld [vmem:[%s227 + $0x20] sm:$0xf]
      %v245 = vld [vmem:[%s227 + $0x24] sm:$0xf]
      %v246 = vld [vmem:[%s227 + $0x28] sm:$0xf]
      %v247 = vld [vmem:[%s227 + $0x2c] sm:$0xf]
      %v248 = vld [vmem:[%s227 + $0x30] sm:$0xf]
      %v249 = vld [vmem:[%s233] sm:$0xf]
      %v250 = vld [vmem:[%s233 + $0x4] sm:$0xf]
      %v251 = vld [vmem:[%s233 + $0x8] sm:$0xf]
      %v252 = vld [vmem:[%s233 + $0xc] sm:$0xf]
      %v253 = vld [vmem:[%s233 + $0x10] sm:$0xf]
      %v254 = vld [vmem:[%s233 + $0x14] sm:$0xf]
      %v255 = vld [vmem:[%s233 + $0x18] sm:$0xf]
      %v256 = vld [vmem:[%s233 + $0x1c] sm:$0xf]
      %v257 = vld [vmem:[%s233 + $0x20] sm:$0xf]
      %v258 = vld [vmem:[%s233 + $0x24] sm:$0xf]
      %v259 = vld [vmem:[%s233 + $0x28] sm:$0xf]
      %v260 = vld [vmem:[%s233 + $0x2c] sm:$0xf]
      %v261 = vld [vmem:[%s233 + $0x30] sm:$0xf]
      %v262 = vld [vmem:[%s233 + $0x34] sm:$0xf]
      %v263 = vld [vmem:[%s233 + $0x38] sm:$0xf]
      %v264 = vld [vmem:[%s233 + $0x3c] sm:$0xf]
      %v278 = vunpack.c.l.b16 %v236
      %v279 = vunpack.c.l.b16 %v237
      %v280 = vunpack.c.l.b16 %v238
      %v281 = vunpack.c.l.b16 %v239
      %v282 = vunpack.c.l.b16 %v240
      %v283 = vunpack.c.l.b16 %v241
      %v284 = vunpack.c.l.b16 %v242
      %v285 = vunpack.c.l.b16 %v243
      %v286 = vunpack.c.l.b16 %v244
      %v287 = vunpack.c.l.b16 %v245
      %v288 = vunpack.c.l.b16 %v246
      %v289 = vunpack.c.l.b16 %v247
      %v290 = vunpack.c.l.b16 %v248
      %v291 = vpack.c.b16 %v279, %v278
      %v292 = vpack.c.b16 %v281, %v280
      %v293 = vpack.c.b16 %v283, %v282
      %v294 = vpack.c.b16 %v285, %v284
      %v295 = vpack.c.b16 %v287, %v286
      %v296 = vpack.c.b16 %v289, %v288
      %v297 = vpack.c.b16 %v290, %v290
      %v321 = vunpack.c.l.b16 %v249
      %v322 = vunpack.c.l.b16 %v250
      %v323 = vunpack.c.l.b16 %v251
      %v324 = vunpack.c.l.b16 %v252
      %v325 = vunpack.c.l.b16 %v253
      %v326 = vunpack.c.l.b16 %v254
      %v327 = vunpack.c.l.b16 %v255
      %v328 = vunpack.c.l.b16 %v256
      %v329 = vunpack.c.l.b16 %v257
      %v330 = vunpack.c.l.b16 %v258
      %v331 = vunpack.c.l.b16 %v259
      %v332 = vunpack.c.l.b16 %v260
      %v333 = vunpack.c.l.b16 %v261
      %v334 = vunpack.c.l.b16 %v262
      %v335 = vunpack.c.l.b16 %v263
      %v336 = vunpack.c.l.b16 %v264
      %v337 = vpack.c.b16 %v322, %v321
      %v338 = vpack.c.b16 %v324, %v323
      %v339 = vpack.c.b16 %v326, %v325
      %v340 = vpack.c.b16 %v328, %v327
      %v341 = vpack.c.b16 %v330, %v329
      %v342 = vpack.c.b16 %v332, %v331
      %v343 = vpack.c.b16 %v334, %v333
      %v344 = vpack.c.b16 %v336, %v335
      %353 = vmatprep.subr.bf16.mxu0 0
      %354 = vmatpush1.bf16.msra.mxu0 %v337
      %355 = vmatprep.subr.bf16.mxu0 0
      %356 = vmatpush1.bf16.msra.mxu0 %v338
      %357 = vmatprep.subr.bf16.mxu0 0
      %358 = vmatpush1.bf16.msra.mxu0 %v339
      %359 = vmatprep.subr.bf16.mxu0 0
      %360 = vmatpush1.bf16.msra.mxu0 %v340
      %361 = vmatprep.subr.bf16.mxu0 0
      %362 = vmatpush1.bf16.msra.mxu0 %v341
      %363 = vmatprep.subr.bf16.mxu0 0
      %364 = vmatpush1.bf16.msra.mxu0 %v342
      %365 = vmatprep.subr.bf16.mxu0 0
      %366 = vmatpush1.bf16.msra.mxu0 %v343
      %367 = vmatprep.subr.bf16.mxu0 0
      %368 = vmatpush1.bf16.msra.mxu0 %v344
      %369 = vmatprep.subr.bf16.mxu0 0
      %370 = vmatpush1.bf16.msra.mxu0 0
      %371 = vmatprep.subr.bf16.mxu0 0
      %372 = vmatpush1.bf16.msra.mxu0 0
      %373 = vmatprep.subr.bf16.mxu0 0
      %374 = vmatpush1.bf16.msra.mxu0 0
      %375 = vmatprep.subr.bf16.mxu0 0
      %376 = vmatpush1.bf16.msra.mxu0 0
      %377 = vmatprep.subr.bf16.mxu0 0
      %378 = vmatpush1.bf16.msra.mxu0 0
      %379 = vmatprep.subr.bf16.mxu0 0
      %380 = vmatpush1.bf16.msra.mxu0 0
      %381 = vmatprep.subr.bf16.mxu0 0
      %382 = vmatpush1.bf16.msra.mxu0 0
      %383 = vmatprep.subr.bf16.mxu0 0
      %384 = vmatpush1.bf16.msra.mxu0 0
      %385 = vmatprep.mubr.bf16.mxu0 0
      %386 = vmatmul.mubr.bf16.gmra.mrb[0].mxu0 %v291
      %v387 = vpop.f32.mrb[0].mxu0
      %v388 = vadd.f32 0.0, %v387
      %v389 = vpop.f32.mrb[0].mxu0
      %v390 = vpop.f32.mrb[0].mxu0
      %v391 = vadd.f32 0.0, %v390
      %v392 = vpop.f32.mrb[0].mxu0
      %393 = vmatprep.mubr.bf16.mxu0 0
      %394 = vmatmul.mubr.bf16.gmra.mrb[0].mxu0 %v292
      %v395 = vpop.f32.mrb[0].mxu0
      %v396 = vadd.f32 0.0, %v395
      %v397 = vpop.f32.mrb[0].mxu0
      %v398 = vpop.f32.mrb[0].mxu0
      %v399 = vadd.f32 0.0, %v398
      %v400 = vpop.f32.mrb[0].mxu0
      %401 = vmatprep.mubr.bf16.mxu0 0
      %402 = vmatmul.mubr.bf16.gmra.mrb[0].mxu0 %v293
      %v403 = vpop.f32.mrb[0].mxu0
      %v404 = vadd.f32 0.0, %v403
      %v405 = vpop.f32.mrb[0].mxu0
      %v406 = vpop.f32.mrb[0].mxu0
      %v407 = vadd.f32 0.0, %v406
      %v408 = vpop.f32.mrb[0].mxu0
      %409 = vmatprep.mubr.bf16.mxu0 0
      %410 = vmatmul.mubr.bf16.gmra.mrb[0].mxu0 %v294
      %v411 = vpop.f32.mrb[0].mxu0
      %v412 = vadd.f32 0.0, %v411
      %v413 = vpop.f32.mrb[0].mxu0
      %v414 = vpop.f32.mrb[0].mxu0
      %v415 = vadd.f32 0.0, %v414
      %v416 = vpop.f32.mrb[0].mxu0
      %417 = vmatprep.mubr.bf16.mxu0 0
      %418 = vmatmul.mubr.bf16.gmra.mrb[0].mxu0 %v295
      %v419 = vpop.f32.mrb[0].mxu0
      %v420 = vadd.f32 0.0, %v419
      %v421 = vpop.f32.mrb[0].mxu0
      %v422 = vpop.f32.mrb[0].mxu0
      %v423 = vadd.f32 0.0, %v422
      %v424 = vpop.f32.mrb[0].mxu0
      %425 = vmatprep.mubr.bf16.mxu0 0
      %426 = vmatmul.mubr.bf16.gmra.mrb[0].mxu0 %v296
      %v427 = vpop.f32.mrb[0].mxu0
      %v428 = vpop.f32.mrb[0].mxu0
      %v429 = vpop.f32.mrb[0].mxu0
      %v430 = vpop.f32.mrb[0].mxu0
      %431 = vmatprep.mubr.bf16.mxu0 0
      %432 = vmatmul.mubr.bf16.gmra.mrb[0].mxu0 %v297
      %v433 = vpop.f32.mrb[0].mxu0
      %v434 = vpop.f32.mrb[0].mxu0
      %v435 = vpop.f32.mrb[0].mxu0
      %v436 = vpop.f32.mrb[0].mxu0
      %437 = vdwg.mxu0
      %s438 = scalar_lea.vmem %s233, 64
      %v439 = vld [vmem:[%s438] sm:$0xf]
      %v440 = vld [vmem:[%s438 + $0x4] sm:$0xf]
      %v441 = vld [vmem:[%s438 + $0x8] sm:$0xf]
      %v442 = vld [vmem:[%s438 + $0xc] sm:$0xf]
      %v443 = vld [vmem:[%s438 + $0x10] sm:$0xf]
      %v444 = vld [vmem:[%s438 + $0x14] sm:$0xf]
      %v445 = vld [vmem:[%s438 + $0x18] sm:$0xf]
      %v446 = vld [vmem:[%s438 + $0x1c] sm:$0xf]
      %v447 = vld [vmem:[%s438 + $0x20] sm:$0xf]
      %v448 = vld [vmem:[%s438 + $0x24] sm:$0xf]
      %v449 = vld [vmem:[%s438 + $0x28] sm:$0xf]
      %v450 = vld [vmem:[%s438 + $0x2c] sm:$0xf]
      %v451 = vld [vmem:[%s438 + $0x30] sm:$0xf]
      %v452 = vld [vmem:[%s438 + $0x34] sm:$0xf]
      %v453 = vld [vmem:[%s438 + $0x38] sm:$0xf]
      %v454 = vld [vmem:[%s438 + $0x3c] sm:$0xf]
      %v471 = vunpack.c.l.b16 %v439
      %v472 = vunpack.c.l.b16 %v440
      %v473 = vunpack.c.l.b16 %v441
      %v474 = vunpack.c.l.b16 %v442
      %v475 = vunpack.c.l.b16 %v443
      %v476 = vunpack.c.l.b16 %v444
      %v477 = vunpack.c.l.b16 %v445
      %v478 = vunpack.c.l.b16 %v446
      %v479 = vunpack.c.l.b16 %v447
      %v480 = vunpack.c.l.b16 %v448
      %v481 = vunpack.c.l.b16 %v449
      %v482 = vunpack.c.l.b16 %v450
      %v483 = vunpack.c.l.b16 %v451
      %v484 = vunpack.c.l.b16 %v452
      %v485 = vunpack.c.l.b16 %v453
      %v486 = vunpack.c.l.b16 %v454
      %v487 = vpack.c.b16 %v472, %v471
      %v488 = vpack.c.b16 %v474, %v473
      %v489 = vpack.c.b16 %v476, %v475
      %v490 = vpack.c.b16 %v478, %v477
      %v491 = vpack.c.b16 %v480, %v479
      %v492 = vpack.c.b16 %v482, %v481
      %v493 = vpack.c.b16 %v484, %v483
      %v494 = vpack.c.b16 %v486, %v485
      %503 = vmatprep.subr.bf16.mxu0 0
      %504 = vmatpush1.bf16.msra.mxu0 %v487
      %505 = vmatprep.subr.bf16.mxu0 0
      %506 = vmatpush1.bf16.msra.mxu0 %v488
      %507 = vmatprep.subr.bf16.mxu0 0
      %508 = vmatpush1.bf16.msra.mxu0 %v489
      %509 = vmatprep.subr.bf16.mxu0 0
      %510 = vmatpush1.bf16.msra.mxu0 %v490
      %511 = vmatprep.subr.bf16.mxu0 0
      %512 = vmatpush1.bf16.msra.mxu0 %v491
      %513 = vmatprep.subr.bf16.mxu0 0
      %514 = vmatpush1.bf16.msra.mxu0 %v492
      %515 = vmatprep.subr.bf16.mxu0 0
      %516 = vmatpush1.bf16.msra.mxu0 %v493
      %517 = vmatprep.subr.bf16.mxu0 0
      %518 = vmatpush1.bf16.msra.mxu0 %v494
      %519 = vmatprep.subr.bf16.mxu0 0
      %520 = vmatpush1.bf16.msra.mxu0 0
      %521 = vmatprep.subr.bf16.mxu0 0
      %522 = vmatpush1.bf16.msra.mxu0 0
      %523 = vmatprep.subr.bf16.mxu0 0
      %524 = vmatpush1.bf16.msra.mxu0 0
      %525 = vmatprep.subr.bf16.mxu0 0
      %526 = vmatpush1.bf16.msra.mxu0 0
      %527 = vmatprep.subr.bf16.mxu0 0
      %528 = vmatpush1.bf16.msra.mxu0 0
      %529 = vmatprep.subr.bf16.mxu0 0
      %530 = vmatpush1.bf16.msra.mxu0 0
      %531 = vmatprep.subr.bf16.mxu0 0
      %532 = vmatpush1.bf16.msra.mxu0 0
      %533 = vmatprep.subr.bf16.mxu0 0
      %534 = vmatpush1.bf16.msra.mxu0 0
      %535 = vmatprep.mubr.bf16.mxu0 0
      %536 = vmatmul.mubr.bf16.gmra.mrb[0].mxu0 %v291
      %v537 = vpop.f32.mrb[0].mxu0
      %v538 = vadd.f32 0.0, %v537
      %v539 = vpop.f32.mrb[0].mxu0
      %v540 = vpop.f32.mrb[0].mxu0
      %v541 = vadd.f32 0.0, %v540
      %v542 = vpop.f32.mrb[0].mxu0
      %543 = vmatprep.mubr.bf16.mxu0 0
      %544 = vmatmul.mubr.bf16.gmra.mrb[0].mxu0 %v292
      %v545 = vpop.f32.mrb[0].mxu0
      %v546 = vadd.f32 0.0, %v545
      %v547 = vpop.f32.mrb[0].mxu0
      %v548 = vpop.f32.mrb[0].mxu0
      %v549 = vadd.f32 0.0, %v548
      %v550 = vpop.f32.mrb[0].mxu0
      %551 = vmatprep.mubr.bf16.mxu0 0
      %552 = vmatmul.mubr.bf16.gmra.mrb[0].mxu0 %v293
      %v553 = vpop.f32.mrb[0].mxu0
      %v554 = vadd.f32 0.0, %v553
      %v555 = vpop.f32.mrb[0].mxu0
      %v556 = vpop.f32.mrb[0].mxu0
      %v557 = vadd.f32 0.0, %v556
      %v558 = vpop.f32.mrb[0].mxu0
      %559 = vmatprep.mubr.bf16.mxu0 0
      %560 = vmatmul.mubr.bf16.gmra.mrb[0].mxu0 %v294
      %v561 = vpop.f32.mrb[0].mxu0
      %v562 = vadd.f32 0.0, %v561
      %v563 = vpop.f32.mrb[0].mxu0
      %v564 = vpop.f32.mrb[0].mxu0
      %v565 = vadd.f32 0.0, %v564
      %v566 = vpop.f32.mrb[0].mxu0
      %567 = vmatprep.mubr.bf16.mxu0 0
      %568 = vmatmul.mubr.bf16.gmra.mrb[0].mxu0 %v295
      %v569 = vpop.f32.mrb[0].mxu0
      %v570 = vadd.f32 0.0, %v569
      %v571 = vpop.f32.mrb[0].mxu0
      %v572 = vpop.f32.mrb[0].mxu0
      %v573 = vadd.f32 0.0, %v572
      %v574 = vpop.f32.mrb[0].mxu0
      %575 = vmatprep.mubr.bf16.mxu0 0
      %576 = vmatmul.mubr.bf16.gmra.mrb[0].mxu0 %v296
      %v577 = vpop.f32.mrb[0].mxu0
      %v578 = vadd.f32 0.0, %v577
      %v579 = vpop.f32.mrb[0].mxu0
      %v580 = vpop.f32.mrb[0].mxu0
      %v581 = vpop.f32.mrb[0].mxu0
      %582 = vmatprep.mubr.bf16.mxu0 0
      %583 = vmatmul.mubr.bf16.gmra.mrb[0].mxu0 %v297
      %v584 = vpop.f32.mrb[0].mxu0
      %v585 = vpop.f32.mrb[0].mxu0
      %v586 = vpop.f32.mrb[0].mxu0
      %v587 = vpop.f32.mrb[0].mxu0
      %588 = vdwg.mxu0
      %vm600 = vcmask 1046528
      %v601 = vrot.slane %v538, 1
      %v602 = vrot.slane %v541, 1
      %v603 = vsel %vm600, %v601, %v602
      %v604 = vrot.slane %v546, 1
      %v605 = vsel %vm600, %v602, %v604
      %v606 = vrot.slane %v549, 1
      %v607 = vsel %vm600, %v604, %v606
      %v608 = vrot.slane %v554, 1
      %v609 = vsel %vm600, %v606, %v608
      %v610 = vrot.slane %v557, 1
      %v611 = vsel %vm600, %v608, %v610
      %v612 = vrot.slane %v562, 1
      %v613 = vsel %vm600, %v610, %v612
      %v614 = vrot.slane %v565, 1
      %v615 = vsel %vm600, %v612, %v614
      %v616 = vrot.slane %v570, 1
      %v617 = vsel %vm600, %v614, %v616
      %v618 = vrot.slane %v573, 1
      %v619 = vsel %vm600, %v616, %v618
      %v620 = vrot.slane %v578, 1
      %v621 = vsel %vm600, %v618, %v620
      %v632 = vadd.f32 %v388, %v603
      %v633 = vadd.f32 %v391, %v605
      %v634 = vadd.f32 %v396, %v607
      %v635 = vadd.f32 %v399, %v609
      %v636 = vadd.f32 %v404, %v611
      %v637 = vadd.f32 %v407, %v613
      %v638 = vadd.f32 %v412, %v615
      %v639 = vadd.f32 %v415, %v617
      %v640 = vadd.f32 %v420, %v619
      %v641 = vadd.f32 %v423, %v621
      %s642 = scalar_lea.vmem %s233, 128
      %v643 = vld [vmem:[%s642] sm:$0xf]
      %v644 = vld [vmem:[%s642 + $0x4] sm:$0xf]
      %v645 = vld [vmem:[%s642 + $0x8] sm:$0xf]
      %v646 = vld [vmem:[%s642 + $0xc] sm:$0xf]
      %v647 = vld [vmem:[%s642 + $0x10] sm:$0xf]
      %v648 = vld [vmem:[%s642 + $0x14] sm:$0xf]
      %v649 = vld [vmem:[%s642 + $0x18] sm:$0xf]
      %v650 = vld [vmem:[%s642 + $0x1c] sm:$0xf]
      %v651 = vld [vmem:[%s642 + $0x20] sm:$0xf]
      %v652 = vld [vmem:[%s642 + $0x24] sm:$0xf]
      %v653 = vld [vmem:[%s642 + $0x28] sm:$0xf]
      %v654 = vld [vmem:[%s642 + $0x2c] sm:$0xf]
      %v655 = vld [vmem:[%s642 + $0x30] sm:$0xf]
      %v656 = vld [vmem:[%s642 + $0x34] sm:$0xf]
      %v657 = vld [vmem:[%s642 + $0x38] sm:$0xf]
      %v658 = vld [vmem:[%s642 + $0x3c] sm:$0xf]
      %v675 = vunpack.c.l.b16 %v643
      %v676 = vunpack.c.l.b16 %v644
      %v677 = vunpack.c.l.b16 %v645
      %v678 = vunpack.c.l.b16 %v646
      %v679 = vunpack.c.l.b16 %v647
      %v680 = vunpack.c.l.b16 %v648
      %v681 = vunpack.c.l.b16 %v649
      %v682 = vunpack.c.l.b16 %v650
      %v683 = vunpack.c.l.b16 %v651
      %v684 = vunpack.c.l.b16 %v652
      %v685 = vunpack.c.l.b16 %v653
      %v686 = vunpack.c.l.b16 %v654
      %v687 = vunpack.c.l.b16 %v655
      %v688 = vunpack.c.l.b16 %v656
      %v689 = vunpack.c.l.b16 %v657
      %v690 = vunpack.c.l.b16 %v658
      %v691 = vpack.c.b16 %v676, %v675
      %v692 = vpack.c.b16 %v678, %v677
      %v693 = vpack.c.b16 %v680, %v679
      %v694 = vpack.c.b16 %v682, %v681
      %v695 = vpack.c.b16 %v684, %v683
      %v696 = vpack.c.b16 %v686, %v685
      %v697 = vpack.c.b16 %v688, %v687
      %v698 = vpack.c.b16 %v690, %v689
      %707 = vmatprep.subr.bf16.mxu0 0
      %708 = vmatpush1.bf16.msra.mxu0 %v691
      %709 = vmatprep.subr.bf16.mxu0 0
      %710 = vmatpush1.bf16.msra.mxu0 %v692
      %711 = vmatprep.subr.bf16.mxu0 0
      %712 = vmatpush1.bf16.msra.mxu0 %v693
      %713 = vmatprep.subr.bf16.mxu0 0
      %714 = vmatpush1.bf16.msra.mxu0 %v694
      %715 = vmatprep.subr.bf16.mxu0 0
      %716 = vmatpush1.bf16.msra.mxu0 %v695
      %717 = vmatprep.subr.bf16.mxu0 0
      %718 = vmatpush1.bf16.msra.mxu0 %v696
      %719 = vmatprep.subr.bf16.mxu0 0
      %720 = vmatpush1.bf16.msra.mxu0 %v697
      %721 = vmatprep.subr.bf16.mxu0 0
      %722 = vmatpush1.bf16.msra.mxu0 %v698
      %723 = vmatprep.subr.bf16.mxu0 0
      %724 = vmatpush1.bf16.msra.mxu0 0
      %725 = vmatprep.subr.bf16.mxu0 0
      %726 = vmatpush1.bf16.msra.mxu0 0
      %727 = vmatprep.subr.bf16.mxu0 0
      %728 = vmatpush1.bf16.msra.mxu0 0
      %729 = vmatprep.subr.bf16.mxu0 0
      %730 = vmatpush1.bf16.msra.mxu0 0
      %731 = vmatprep.subr.bf16.mxu0 0
      %732 = vmatpush1.bf16.msra.mxu0 0
      %733 = vmatprep.subr.bf16.mxu0 0
      %734 = vmatpush1.bf16.msra.mxu0 0
      %735 = vmatprep.subr.bf16.mxu0 0
      %736 = vmatpush1.bf16.msra.mxu0 0
      %737 = vmatprep.subr.bf16.mxu0 0
      %738 = vmatpush1.bf16.msra.mxu0 0
      %739 = vmatprep.mubr.bf16.mxu0 0
      %740 = vmatmul.mubr.bf16.gmra.mrb[0].mxu0 %v291
      %v741 = vpop.f32.mrb[0].mxu0
      %v742 = vpop.f32.mrb[0].mxu0
      %v743 = vpop.f32.mrb[0].mxu0
      %v744 = vadd.f32 0.0, %v743
      %v745 = vpop.f32.mrb[0].mxu0
      %746 = vmatprep.mubr.bf16.mxu0 0
      %747 = vmatmul.mubr.bf16.gmra.mrb[0].mxu0 %v292
      %v748 = vpop.f32.mrb[0].mxu0
      %v749 = vadd.f32 0.0, %v748
      %v750 = vpop.f32.mrb[0].mxu0
      %v751 = vpop.f32.mrb[0].mxu0
      %v752 = vadd.f32 0.0, %v751
      %v753 = vpop.f32.mrb[0].mxu0
      %754 = vmatprep.mubr.bf16.mxu0 0
      %755 = vmatmul.mubr.bf16.gmra.mrb[0].mxu0 %v293
      %v756 = vpop.f32.mrb[0].mxu0
      %v757 = vadd.f32 0.0, %v756
      %v758 = vpop.f32.mrb[0].mxu0
      %v759 = vpop.f32.mrb[0].mxu0
      %v760 = vadd.f32 0.0, %v759
      %v761 = vpop.f32.mrb[0].mxu0
      %762 = vmatprep.mubr.bf16.mxu0 0
      %763 = vmatmul.mubr.bf16.gmra.mrb[0].mxu0 %v294
      %v764 = vpop.f32.mrb[0].mxu0
      %v765 = vadd.f32 0.0, %v764
      %v766 = vpop.f32.mrb[0].mxu0
      %v767 = vpop.f32.mrb[0].mxu0
      %v768 = vadd.f32 0.0, %v767
      %v769 = vpop.f32.mrb[0].mxu0
      %770 = vmatprep.mubr.bf16.mxu0 0
      %771 = vmatmul.mubr.bf16.gmra.mrb[0].mxu0 %v295
      %v772 = vpop.f32.mrb[0].mxu0
      %v773 = vadd.f32 0.0, %v772
      %v774 = vpop.f32.mrb[0].mxu0
      %v775 = vpop.f32.mrb[0].mxu0
      %v776 = vadd.f32 0.0, %v775
      %v777 = vpop.f32.mrb[0].mxu0
      %778 = vmatprep.mubr.bf16.mxu0 0
      %779 = vmatmul.mubr.bf16.gmra.mrb[0].mxu0 %v296
      %v780 = vpop.f32.mrb[0].mxu0
      %v781 = vadd.f32 0.0, %v780
      %v782 = vpop.f32.mrb[0].mxu0
      %v783 = vpop.f32.mrb[0].mxu0
      %v784 = vpop.f32.mrb[0].mxu0
      %785 = vmatprep.mubr.bf16.mxu0 0
      %786 = vmatmul.mubr.bf16.gmra.mrb[0].mxu0 %v297
      %v787 = vpop.f32.mrb[0].mxu0
      %v788 = vpop.f32.mrb[0].mxu0
      %v789 = vpop.f32.mrb[0].mxu0
      %v790 = vpop.f32.mrb[0].mxu0
      %791 = vdwg.mxu0
      %v792 = vadd.f32 %v632, %v744
      %v793 = vadd.f32 %v633, %v749
      %v794 = vadd.f32 %v634, %v752
      %v795 = vadd.f32 %v635, %v757
      %v796 = vadd.f32 %v636, %v760
      %v797 = vadd.f32 %v637, %v765
      %v798 = vadd.f32 %v638, %v768
      %v799 = vadd.f32 %v639, %v773
      %v800 = vadd.f32 %v640, %v776
      %v801 = vadd.f32 %v641, %v781
      %s802 = scalar_lea.vmem %s233, 192
      %v803 = vld [vmem:[%s802] sm:$0xf]
      %v804 = vld [vmem:[%s802 + $0x4] sm:$0xf]
      %v805 = vld [vmem:[%s802 + $0x8] sm:$0xf]
      %v806 = vld [vmem:[%s802 + $0xc] sm:$0xf]
      %v807 = vld [vmem:[%s802 + $0x10] sm:$0xf]
      %v808 = vld [vmem:[%s802 + $0x14] sm:$0xf]
      %v809 = vld [vmem:[%s802 + $0x18] sm:$0xf]
      %v810 = vld [vmem:[%s802 + $0x1c] sm:$0xf]
      %v811 = vld [vmem:[%s802 + $0x20] sm:$0xf]
      %v812 = vld [vmem:[%s802 + $0x24] sm:$0xf]
      %v813 = vld [vmem:[%s802 + $0x28] sm:$0xf]
      %v814 = vld [vmem:[%s802 + $0x2c] sm:$0xf]
      %v815 = vld [vmem:[%s802 + $0x30] sm:$0xf]
      %v816 = vld [vmem:[%s802 + $0x34] sm:$0xf]
      %v817 = vld [vmem:[%s802 + $0x38] sm:$0xf]
      %v818 = vld [vmem:[%s802 + $0x3c] sm:$0xf]
      %v835 = vunpack.c.l.b16 %v803
      %v836 = vunpack.c.l.b16 %v804
      %v837 = vunpack.c.l.b16 %v805
      %v838 = vunpack.c.l.b16 %v806
      %v839 = vunpack.c.l.b16 %v807
      %v840 = vunpack.c.l.b16 %v808
      %v841 = vunpack.c.l.b16 %v809
      %v842 = vunpack.c.l.b16 %v810
      %v843 = vunpack.c.l.b16 %v811
      %v844 = vunpack.c.l.b16 %v812
      %v845 = vunpack.c.l.b16 %v813
      %v846 = vunpack.c.l.b16 %v814
      %v847 = vunpack.c.l.b16 %v815
      %v848 = vunpack.c.l.b16 %v816
      %v849 = vunpack.c.l.b16 %v817
      %v850 = vunpack.c.l.b16 %v818
      %v851 = vpack.c.b16 %v836, %v835
      %v852 = vpack.c.b16 %v838, %v837
      %v853 = vpack.c.b16 %v840, %v839
      %v854 = vpack.c.b16 %v842, %v841
      %v855 = vpack.c.b16 %v844, %v843
      %v856 = vpack.c.b16 %v846, %v845
      %v857 = vpack.c.b16 %v848, %v847
      %v858 = vpack.c.b16 %v850, %v849
      %867 = vmatprep.subr.bf16.mxu0 0
      %868 = vmatpush1.bf16.msra.mxu0 %v851
      %869 = vmatprep.subr.bf16.mxu0 0
      %870 = vmatpush1.bf16.msra.mxu0 %v852
      %871 = vmatprep.subr.bf16.mxu0 0
      %872 = vmatpush1.bf16.msra.mxu0 %v853
      %873 = vmatprep.subr.bf16.mxu0 0
      %874 = vmatpush1.bf16.msra.mxu0 %v854
      %875 = vmatprep.subr.bf16.mxu0 0
      %876 = vmatpush1.bf16.msra.mxu0 %v855
      %877 = vmatprep.subr.bf16.mxu0 0
      %878 = vmatpush1.bf16.msra.mxu0 %v856
      %879 = vmatprep.subr.bf16.mxu0 0
      %880 = vmatpush1.bf16.msra.mxu0 %v857
      %881 = vmatprep.subr.bf16.mxu0 0
      %882 = vmatpush1.bf16.msra.mxu0 %v858
      %883 = vmatprep.subr.bf16.mxu0 0
      %884 = vmatpush1.bf16.msra.mxu0 0
      %885 = vmatprep.subr.bf16.mxu0 0
      %886 = vmatpush1.bf16.msra.mxu0 0
      %887 = vmatprep.subr.bf16.mxu0 0
      %888 = vmatpush1.bf16.msra.mxu0 0
      %889 = vmatprep.subr.bf16.mxu0 0
      %890 = vmatpush1.bf16.msra.mxu0 0
      %891 = vmatprep.subr.bf16.mxu0 0
      %892 = vmatpush1.bf16.msra.mxu0 0
      %893 = vmatprep.subr.bf16.mxu0 0
      %894 = vmatpush1.bf16.msra.mxu0 0
      %895 = vmatprep.subr.bf16.mxu0 0
      %896 = vmatpush1.bf16.msra.mxu0 0
      %897 = vmatprep.subr.bf16.mxu0 0
      %898 = vmatpush1.bf16.msra.mxu0 0
      %899 = vmatprep.mubr.bf16.mxu0 0
      %900 = vmatmul.mubr.bf16.gmra.mrb[0].mxu0 %v291
      %v901 = vpop.f32.mrb[0].mxu0
      %v902 = vpop.f32.mrb[0].mxu0
      %v903 = vpop.f32.mrb[0].mxu0
      %v904 = vadd.f32 0.0, %v903
      %v905 = vpop.f32.mrb[0].mxu0
      %906 = vmatprep.mubr.bf16.mxu0 0
      %907 = vmatmul.mubr.bf16.gmra.mrb[0].mxu0 %v292
      %v908 = vpop.f32.mrb[0].mxu0
      %v909 = vadd.f32 0.0, %v908
      %v910 = vpop.f32.mrb[0].mxu0
      %v911 = vpop.f32.mrb[0].mxu0
      %v912 = vadd.f32 0.0, %v911
      %v913 = vpop.f32.mrb[0].mxu0
      %914 = vmatprep.mubr.bf16.mxu0 0
      %915 = vmatmul.mubr.bf16.gmra.mrb[0].mxu0 %v293
      %v916 = vpop.f32.mrb[0].mxu0
      %v917 = vadd.f32 0.0, %v916
      %v918 = vpop.f32.mrb[0].mxu0
      %v919 = vpop.f32.mrb[0].mxu0
      %v920 = vadd.f32 0.0, %v919
      %v921 = vpop.f32.mrb[0].mxu0
      %922 = vmatprep.mubr.bf16.mxu0 0
      %923 = vmatmul.mubr.bf16.gmra.mrb[0].mxu0 %v294
      %v924 = vpop.f32.mrb[0].mxu0
      %v925 = vadd.f32 0.0, %v924
      %v926 = vpop.f32.mrb[0].mxu0
      %v927 = vpop.f32.mrb[0].mxu0
      %v928 = vadd.f32 0.0, %v927
      %v929 = vpop.f32.mrb[0].mxu0
      %930 = vmatprep.mubr.bf16.mxu0 0
      %931 = vmatmul.mubr.bf16.gmra.mrb[0].mxu0 %v295
      %v932 = vpop.f32.mrb[0].mxu0
      %v933 = vadd.f32 0.0, %v932
      %v934 = vpop.f32.mrb[0].mxu0
      %v935 = vpop.f32.mrb[0].mxu0
      %v936 = vadd.f32 0.0, %v935
      %v937 = vpop.f32.mrb[0].mxu0
      %938 = vmatprep.mubr.bf16.mxu0 0
      %939 = vmatmul.mubr.bf16.gmra.mrb[0].mxu0 %v296
      %v940 = vpop.f32.mrb[0].mxu0
      %v941 = vadd.f32 0.0, %v940
      %v942 = vpop.f32.mrb[0].mxu0
      %v943 = vpop.f32.mrb[0].mxu0
      %v944 = vadd.f32 0.0, %v943
      %v945 = vpop.f32.mrb[0].mxu0
      %946 = vmatprep.mubr.bf16.mxu0 0
      %947 = vmatmul.mubr.bf16.gmra.mrb[0].mxu0 %v297
      %v948 = vpop.f32.mrb[0].mxu0
      %v949 = vpop.f32.mrb[0].mxu0
      %v950 = vpop.f32.mrb[0].mxu0
      %v951 = vpop.f32.mrb[0].mxu0
      %952 = vdwg.mxu0
      %v964 = vrot.slane %v904, 1
      %v965 = vrot.slane %v909, 1
      %v966 = vsel %vm600, %v964, %v965
      %v967 = vrot.slane %v912, 1
      %v968 = vsel %vm600, %v965, %v967
      %v969 = vrot.slane %v917, 1
      %v970 = vsel %vm600, %v967, %v969
      %v971 = vrot.slane %v920, 1
      %v972 = vsel %vm600, %v969, %v971
      %v973 = vrot.slane %v925, 1
      %v974 = vsel %vm600, %v971, %v973
      %v975 = vrot.slane %v928, 1
      %v976 = vsel %vm600, %v973, %v975
      %v977 = vrot.slane %v933, 1
      %v978 = vsel %vm600, %v975, %v977
      %v979 = vrot.slane %v936, 1
      %v980 = vsel %vm600, %v977, %v979
      %v981 = vrot.slane %v941, 1
      %v982 = vsel %vm600, %v979, %v981
      %v983 = vrot.slane %v944, 1
      %v984 = vsel %vm600, %v981, %v983
      %v995 = vadd.f32 %v792, %v966
      %v996 = vadd.f32 %v793, %v968
      %v997 = vadd.f32 %v794, %v970
      %v998 = vadd.f32 %v795, %v972
      %v999 = vadd.f32 %v796, %v974
      %v1000 = vadd.f32 %v797, %v976
      %v1001 = vadd.f32 %v798, %v978
      %v1002 = vadd.f32 %v799, %v980
      %v1003 = vadd.f32 %v800, %v982
      %v1004 = vadd.f32 %v801, %v984
      %p1005 = scmp.eq.s32.totalorder %s16, 0
      // Predicated region
      $region41: #{_lambda_.6} parent=39 // pred_check
        %p1006 = pneg %p1005
      $region42: #{_lambda_.6} parent=39 // pred_check_branch
        %1008 = sbr.rel (%p1006) target = $region44
      $region43: #{_lambda_.6} parent=39 // pred_region
        %1009 = vst [vmem:[#allocation2] sm:$0xff] %v995
        %1010 = vst [vmem:[#allocation2 + $0x8] sm:$0xff] %v996
        %1011 = vst [vmem:[#allocation2 + $0x10] sm:$0xff] %v997
        %1012 = vst [vmem:[#allocation2 + $0x18] sm:$0xff] %v998
        %1013 = vst [vmem:[#allocation2 + $0x20] sm:$0xff] %v999
        %1014 = vst [vmem:[#allocation2 + $0x28] sm:$0xff] %v1000
        %1015 = vst [vmem:[#allocation2 + $0x30] sm:$0xff] %v1001
        %1016 = vst [vmem:[#allocation2 + $0x38] sm:$0xff] %v1002
        %1017 = vst [vmem:[#allocation2 + $0x40] sm:$0xff] %v1003
        %1018 = vst [vmem:[#allocation2 + $0x48] sm:$0xff] %v1004
      $region44: #{_lambda_.6} parent=39 // pred_fallthru
        _
      %p1019 = scmp.ne.s32.totalorder %s16, 0
      // Predicated region
      $region45: #{_lambda_.6} parent=39 // pred_check
        %p1020 = pneg %p1019
      $region46: #{_lambda_.6} parent=39 // pred_check_branch
        %1022 = sbr.rel (%p1020) target = $region48
      $region47: #{_lambda_.6} parent=39 // pred_region
        %v1023 = vld [vmem:[#allocation2] sm:$0xff]
        %v1024 = vld [vmem:[#allocation2 + $0x8] sm:$0xff]
        %v1025 = vld [vmem:[#allocation2 + $0x10] sm:$0xff]
        %v1026 = vld [vmem:[#allocation2 + $0x18] sm:$0xff]
        %v1027 = vld [vmem:[#allocation2 + $0x20] sm:$0xff]
        %v1028 = vld [vmem:[#allocation2 + $0x28] sm:$0xff]
        %v1029 = vld [vmem:[#allocation2 + $0x30] sm:$0xff]
        %v1030 = vld [vmem:[#allocation2 + $0x38] sm:$0xff]
        %v1031 = vld [vmem:[#allocation2 + $0x40] sm:$0xff]
        %v1032 = vld [vmem:[#allocation2 + $0x48] sm:$0xff]
        %v1033 = vadd.f32 %v1023, %v995
        %v1034 = vadd.f32 %v1024, %v996
        %v1035 = vadd.f32 %v1025, %v997
        %v1036 = vadd.f32 %v1026, %v998
        %v1037 = vadd.f32 %v1027, %v999
        %v1038 = vadd.f32 %v1028, %v1000
        %v1039 = vadd.f32 %v1029, %v1001
        %v1040 = vadd.f32 %v1030, %v1002
        %v1041 = vadd.f32 %v1031, %v1003
        %v1042 = vadd.f32 %v1032, %v1004
        %1043 = vst [vmem:[#allocation2] sm:$0xff] %v1033
        %1044 = vst [vmem:[#allocation2 + $0x8] sm:$0xff] %v1034
        %1045 = vst [vmem:[#allocation2 + $0x10] sm:$0xff] %v1035
        %1046 = vst [vmem:[#allocation2 + $0x18] sm:$0xff] %v1036
        %1047 = vst [vmem:[#allocation2 + $0x20] sm:$0xff] %v1037
        %1048 = vst [vmem:[#allocation2 + $0x28] sm:$0xff] %v1038
        %1049 = vst [vmem:[#allocation2 + $0x30] sm:$0xff] %v1039
        %1050 = vst [vmem:[#allocation2 + $0x38] sm:$0xff] %v1040
        %1051 = vst [vmem:[#allocation2 + $0x40] sm:$0xff] %v1041
        %1052 = vst [vmem:[#allocation2 + $0x48] sm:$0xff] %v1042
      $region48: #{_lambda_.6} parent=39 // pred_fallthru
        _
      %p1053 = scmp.eq.s32.totalorder %s16, 3
      // Predicated region
      $region49: #{_lambda_.6} parent=39 // pred_check
        %p1054 = pneg %p1053
      $region50: #{_lambda_.6} parent=39 // pred_check_branch
        %1056 = sbr.rel (%p1054) target = $region52
      $region51: #{_lambda_.6} parent=39 // pred_region
        %v1057 = vld [vmem:[#allocation2] sm:$0xff]
        %v1058 = vld [vmem:[#allocation2 + $0x8] sm:$0xff]
        %v1059 = vld [vmem:[#allocation2 + $0x10] sm:$0xff]
        %v1060 = vld [vmem:[#allocation2 + $0x18] sm:$0xff]
        %v1061 = vld [vmem:[#allocation2 + $0x20] sm:$0xff]
        %v1062 = vld [vmem:[#allocation2 + $0x28] sm:$0xff]
        %v1063 = vld [vmem:[#allocation2 + $0x30] sm:$0xff]
        %v1064 = vld [vmem:[#allocation2 + $0x38] sm:$0xff]
        %v1065 = vld [vmem:[#allocation2 + $0x40] sm:$0xff]
        %v1066 = vld [vmem:[#allocation2 + $0x48] sm:$0xff]
        %v1067 = vld [vmem:[%s4] sm:$0xff]
        %v1068 = vld [vmem:[%s4 + $0x8] sm:$0xff]
        %v1069 = vld [vmem:[%s4 + $0x10] sm:$0xff]
        %v1070 = vld [vmem:[%s4 + $0x18] sm:$0xff]
        %v1071 = vld [vmem:[%s4 + $0x20] sm:$0xff]
        %v1072 = vld [vmem:[%s4 + $0x28] sm:$0xff]
        %v1073 = vld [vmem:[%s4 + $0x30] sm:$0xff]
        %v1074 = vld [vmem:[%s4 + $0x38] sm:$0xff]
        %v1075 = vld [vmem:[%s4 + $0x40] sm:$0xff]
        %v1076 = vld [vmem:[%s4 + $0x48] sm:$0xff]
        %1078 = vset.pattern.permute.xlu0 0
        %1079 = vperm.xlu0 %1078, %v1067
        %v1080 = vpop.permute.xlu0 %1079
        %1083 = vset.pattern.permute.xlu0 0
        %1084 = vperm.xlu0 %1083, %v1068
        %v1085 = vpop.permute.xlu0 %1084
        %1088 = vset.pattern.permute.xlu0 0
        %1089 = vperm.xlu0 %1088, %v1069
        %v1090 = vpop.permute.xlu0 %1089
        %1093 = vset.pattern.permute.xlu0 0
        %1094 = vperm.xlu0 %1093, %v1070
        %v1095 = vpop.permute.xlu0 %1094
        %1098 = vset.pattern.permute.xlu0 0
        %1099 = vperm.xlu0 %1098, %v1071
        %v1100 = vpop.permute.xlu0 %1099
        %1103 = vset.pattern.permute.xlu0 0
        %1104 = vperm.xlu0 %1103, %v1072
        %v1105 = vpop.permute.xlu0 %1104
        %1108 = vset.pattern.permute.xlu0 0
        %1109 = vperm.xlu0 %1108, %v1073
        %v1110 = vpop.permute.xlu0 %1109
        %1113 = vset.pattern.permute.xlu0 0
        %1114 = vperm.xlu0 %1113, %v1074
        %v1115 = vpop.permute.xlu0 %1114
        %1118 = vset.pattern.permute.xlu0 0
        %1119 = vperm.xlu0 %1118, %v1075
        %v1120 = vpop.permute.xlu0 %1119
        %1123 = vset.pattern.permute.xlu0 0
        %1124 = vperm.xlu0 %1123, %v1076
        %v1125 = vpop.permute.xlu0 %1124
        %v1127 = vmul.f32 %v1057, %v1080
        %v1128 = vmul.f32 %v1058, %v1085
        %v1129 = vmul.f32 %v1059, %v1090
        %v1130 = vmul.f32 %v1060, %v1095
        %v1131 = vmul.f32 %v1061, %v1100
        %v1132 = vmul.f32 %v1062, %v1105
        %v1133 = vmul.f32 %v1063, %v1110
        %v1134 = vmul.f32 %v1064, %v1115
        %v1135 = vmul.f32 %v1065, %v1120
        %v1136 = vmul.f32 %v1066, %v1125
        %v1137 = vadd.f32 %v1127, %v1128
        %v1138 = vadd.f32 %v1137, %v1129
        %v1139 = vadd.f32 %v1138, %v1130
        %v1140 = vadd.f32 %v1139, %v1131
        %v1141 = vadd.f32 %v1140, %v1132
        %v1142 = vadd.f32 %v1141, %v1133
        %v1143 = vadd.f32 %v1142, %v1134
        %v1144 = vadd.f32 %v1143, %v1135
        %v1145 = vadd.f32 %v1144, %v1136
        %v1146 = vrot.slane %v1145, 4
        %v1147 = vadd.f32 %v1145, %v1146
        %v1148 = vrot.slane %v1147, 2
        %v1149 = vadd.f32 %v1147, %v1148
        %v1150 = vrot.slane %v1149, 1
        %v1151 = vadd.f32 %v1149, %v1150
        %v1152 = vmul.f32 %v1151, 0.03125
        %v1153 = vsub.f32 %v1057, %v1152
        %v1154 = vsub.f32 %v1058, %v1152
        %v1155 = vsub.f32 %v1059, %v1152
        %v1156 = vsub.f32 %v1060, %v1152
        %v1157 = vsub.f32 %v1061, %v1152
        %v1158 = vsub.f32 %v1062, %v1152
        %v1159 = vsub.f32 %v1063, %v1152
        %v1160 = vsub.f32 %v1064, %v1152
        %v1161 = vsub.f32 %v1065, %v1152
        %v1162 = vsub.f32 %v1066, %v1152
        %v1163 = vmul.f32 %v1153, %v1080
        %v1164 = vmul.f32 %v1154, %v1085
        %v1165 = vmul.f32 %v1155, %v1090
        %v1166 = vmul.f32 %v1156, %v1095
        %v1167 = vmul.f32 %v1157, %v1100
        %v1168 = vmul.f32 %v1158, %v1105
        %v1169 = vmul.f32 %v1159, %v1110
        %v1170 = vmul.f32 %v1160, %v1115
        %v1171 = vmul.f32 %v1161, %v1120
        %v1172 = vmul.f32 %v1162, %v1125
        %v1173 = vmul.f32 %v1163, %v1163
        %v1174 = vmul.f32 %v1164, %v1164
        %v1175 = vmul.f32 %v1165, %v1165
        %v1176 = vmul.f32 %v1166, %v1166
        %v1177 = vmul.f32 %v1167, %v1167
        %v1178 = vmul.f32 %v1168, %v1168
        %v1179 = vmul.f32 %v1169, %v1169
        %v1180 = vmul.f32 %v1170, %v1170
        %v1181 = vmul.f32 %v1171, %v1171
        %v1182 = vmul.f32 %v1172, %v1172
        %v1183 = vadd.f32 %v1173, %v1174
        %v1184 = vadd.f32 %v1183, %v1175
        %v1185 = vadd.f32 %v1184, %v1176
        %v1186 = vadd.f32 %v1185, %v1177
        %v1187 = vadd.f32 %v1186, %v1178
        %v1188 = vadd.f32 %v1187, %v1179
        %v1189 = vadd.f32 %v1188, %v1180
        %v1190 = vadd.f32 %v1189, %v1181
        %v1191 = vadd.f32 %v1190, %v1182
        %v1192 = vrot.slane %v1191, 4
        %v1193 = vadd.f32 %v1191, %v1192
        %v1194 = vrot.slane %v1193, 2
        %v1195 = vadd.f32 %v1193, %v1194
        %v1196 = vrot.slane %v1195, 1
        %v1197 = vadd.f32 %v1195, %v1196
        %v1198 = vmul.f32 %v1197, 0.03125
        %v1199 = vadd.f32 %v1198, 1e-05
        %v1200 = vrsqrt.pop %v1199
        %v1201 = vmul.f32 %v1153, %v1200
        %v1202 = vmul.f32 %v1154, %v1200
        %v1203 = vmul.f32 %v1155, %v1200
        %v1204 = vmul.f32 %v1156, %v1200
        %v1205 = vmul.f32 %v1157, %v1200
        %v1206 = vmul.f32 %v1158, %v1200
        %v1207 = vmul.f32 %v1159, %v1200
        %v1208 = vmul.f32 %v1160, %v1200
        %v1209 = vmul.f32 %v1161, %v1200
        %v1210 = vmul.f32 %v1162, %v1200
        %v1211 = vld [vmem:[%s2] sm:$0x1]
        %v1213 = vlaneseq
        %v1214 = vshrl.u32 %v1213, 7
        %v1215 = vsub.s32 0, %v1214
        %v1216 = vrot.slane %v1211, %v1215
        %v1218 = vmul.f32 %v1201, %v1216
        %v1219 = vmul.f32 %v1202, %v1216
        %v1220 = vmul.f32 %v1203, %v1216
        %v1221 = vmul.f32 %v1204, %v1216
        %v1222 = vmul.f32 %v1205, %v1216
        %v1223 = vmul.f32 %v1206, %v1216
        %v1224 = vmul.f32 %v1207, %v1216
        %v1225 = vmul.f32 %v1208, %v1216
        %v1226 = vmul.f32 %v1209, %v1216
        %v1227 = vmul.f32 %v1210, %v1216
        %v1228 = vld [vmem:[%s3] sm:$0x1]
        %v1230 = vlaneseq
        %v1231 = vshrl.u32 %v1230, 7
        %v1232 = vsub.s32 0, %v1231
        %v1233 = vrot.slane %v1228, %v1232
        %v1235 = vadd.f32 %v1218, %v1233
        %v1236 = vadd.f32 %v1219, %v1233
        %v1237 = vadd.f32 %v1220, %v1233
        %v1238 = vadd.f32 %v1221, %v1233
        %v1239 = vadd.f32 %v1222, %v1233
        %v1240 = vadd.f32 %v1223, %v1233
        %v1241 = vadd.f32 %v1224, %v1233
        %v1242 = vadd.f32 %v1225, %v1233
        %v1243 = vadd.f32 %v1226, %v1233
        %v1244 = vadd.f32 %v1227, %v1233
        %v1245 = vmax.f32 %v1235, 0.0
        %v1246 = vmax.f32 %v1236, 0.0
        %v1247 = vmax.f32 %v1237, 0.0
        %v1248 = vmax.f32 %v1238, 0.0
        %v1249 = vmax.f32 %v1239, 0.0
        %v1250 = vmax.f32 %v1240, 0.0
        %v1251 = vmax.f32 %v1241, 0.0
        %v1252 = vmax.f32 %v1242, 0.0
        %v1253 = vmax.f32 %v1243, 0.0
        %v1254 = vmax.f32 %v1244, 0.0
        %v1255 = vpack.c.bf16 %v1246, %v1245
        %v1256 = vpack.c.bf16 %v1248, %v1247
        %v1257 = vpack.c.bf16 %v1250, %v1249
        %v1258 = vpack.c.bf16 %v1252, %v1251
        %v1259 = vpack.c.bf16 %v1254, %v1253
        %v1265 = vunpack.c.l.b16 %v1255
        %v1266 = vunpack.c.h.b16 %v1255
        %v1267 = vunpack.c.l.b16 %v1256
        %v1268 = vunpack.c.h.b16 %v1256
        %v1269 = vunpack.c.l.b16 %v1257
        %v1270 = vunpack.c.h.b16 %v1257
        %v1271 = vunpack.c.l.b16 %v1258
        %v1272 = vunpack.c.h.b16 %v1258
        %v1273 = vunpack.c.l.b16 %v1259
        %v1274 = vunpack.c.h.b16 %v1259
        %v1275 = vpack.c.b16 %v1265, %v1265
        %v1276 = vpack.c.b16 %v1266, %v1266
        %v1277 = vpack.c.b16 %v1267, %v1267
        %v1278 = vpack.c.b16 %v1268, %v1268
        %v1279 = vpack.c.b16 %v1269, %v1269
        %v1280 = vpack.c.b16 %v1270, %v1270
        %v1281 = vpack.c.b16 %v1271, %v1271
        %v1282 = vpack.c.b16 %v1272, %v1272
        %v1283 = vpack.c.b16 %v1273, %v1273
        %v1284 = vpack.c.b16 %v1274, %v1274
        %1295 = vst [vmem:[%s5] sm:$0xf] %v1275
        %1296 = vst [vmem:[%s5 + $0x4] sm:$0xf] %v1276
        %1297 = vst [vmem:[%s5 + $0x8] sm:$0xf] %v1277
        %1298 = vst [vmem:[%s5 + $0xc] sm:$0xf] %v1278
        %1299 = vst [vmem:[%s5 + $0x10] sm:$0xf] %v1279
        %1300 = vst [vmem:[%s5 + $0x14] sm:$0xf] %v1280
        %1301 = vst [vmem:[%s5 + $0x18] sm:$0xf] %v1281
        %1302 = vst [vmem:[%s5 + $0x1c] sm:$0xf] %v1282
        %1303 = vst [vmem:[%s5 + $0x20] sm:$0xf] %v1283
        %1304 = vst [vmem:[%s5 + $0x24] sm:$0xf] %v1284
      $region52: #{_lambda_.6} parent=39 // pred_fallthru
        _
      // Predicated region
      $region53: #{_lambda_.6} parent=39 // pred_check
        %p1305 = pneg %p144
      $region54: #{_lambda_.6} parent=39 // pred_check_branch
        %1307 = sbr.rel (%p1305) target = $region56
      $region55: #{_lambda_.6} parent=39 // pred_region
        _
      $region56: #{_lambda_.6} parent=39 // pred_fallthru
        _
      // Predicated region
      $region57: #{_lambda_.6} parent=39 // pred_check
        %p1308 = pneg %p144
      $region58: #{_lambda_.6} parent=39 // pred_check_branch
        %1310 = sbr.rel (%p1308) target = $region60
      $region59: #{_lambda_.6} parent=39 // pred_region
        _
      $region60: #{_lambda_.6} parent=39 // pred_fallthru
        _
    $region40: #{_lambda_.6} parent=5 // pred_fallthru
      _
    %p1311 = scmp.le.s32.totalorder 2, %s11
    // Predicated region
    $region61: #{_lambda_.6} parent=5 // pred_check
      %p1312 = pneg %p1311
    $region62: #{_lambda_.6} parent=5 // pred_check_branch
      %1314 = sbr.rel (%p1312) target = $region64
    $region63: #{_lambda_.6} parent=5 // pred_region
      %s1315 = ssub.s32 %s11, 2
    $region64: #{_lambda_.6} parent=5 // pred_fallthru
      _
  $region6: #{_lambda_.6} parent=0 // loop_footer
    %s15 = sadd.s32 1, %s11
  $region7: #{_lambda_.6} parent=0 // loop_footer_branch
    %10 = sbr.rel target = $region3
  $region8: #{_lambda_.6} parent=0 // loop_exit
    _

// kernel: _lambda_.7
$region0: #{_lambda_.7}
  #allocation0 [shape = 'u32[]', space=smem, size = 0x4, offset = 0x4, fixed_abs, tag = 'smem constant byte address 0x4 - core index']
  #allocation1 [shape = 'u32[144,128]{1,0:T(1,128)}', space=vmem, size = 0x12000, scoped, tag = 'internal scratch']
  #allocation2 [shape = 'f32[48,128]{1,0:T(8,128)}', space=vmem, size = 0x6000, scoped, tag = 'scratch operand']
  %s0 = inlined_call_operand.vmem [shape: bf16[4,72,128], index: 0, kind: input, shape index: {}]
  %s1 = inlined_call_operand.vmem [shape: bf16[16,128,128], index: 1, kind: input, shape index: {}]
  %s2 = inlined_call_operand.vmem [shape: f32[1,128], index: 2, kind: input, shape index: {}]
  %s3 = inlined_call_operand.vmem [shape: f32[1,128], index: 3, kind: input, shape index: {}]
  %s4 = inlined_call_operand.vmem [shape: f32[48,1], index: 4, kind: input, shape index: {}]
  %s5 = inlined_call_operand.vmem [shape: bf16[48,128], index: 5, kind: output, shape index: {}]
  %s6 = sld [smem:[#allocation0]]
  $region65: #{_lambda_.7} parent=0
    _
  %s8 = ssub.s32 1, %s6
  %s9 = scalar_select 0, %s8, %s6
  loop: start=0, step=1, limit=6
  $region2: #{_lambda_.7} parent=0 // loop_pre_header
    _
  $region3: #{_lambda_.7} parent=0 // loop_header
    %s11 = sphi 0, %s15
    %p12 = scmp.ge.s32.totalorder %s11, 6
    %s21 = sphi 0, %s23
    %s24 = sphi 0, %s21
    %s25 = sphi 0, %s24
    %s41 = sphi 0, %s25
    %s47 = sphi 0, %s49
    %s50 = sphi 0, %s47
    %s51 = sphi 0, %s50
    %s67 = sphi 0, %s51
    %s71 = sphi 0, %s71
    %s73 = sphi 0, %s71
    %s74 = sphi 0, %s73
    %s88 = sphi 0, %s74
    %s92 = sphi 0, %s92
    %s94 = sphi 0, %s92
    %s95 = sphi 0, %s94
    %s109 = sphi 0, %s95
    %s113 = sphi 0, %s113
    %s115 = sphi 0, %s113
    %s116 = sphi 0, %s115
    %s130 = sphi 0, %s116
    %s134 = sphi 0, %s134
    %s136 = sphi 0, %s134
    %s137 = sphi 0, %s136
    %s151 = sphi 0, %s137
  $region4: #{_lambda_.7} parent=0 // loop_header_branch
    %14 = sbr.rel (%p12) target = $region8
  $region5: #{_lambda_.7} parent=0 // loop_body
    %s16 = ssub.s32 %s11, 1
    %s17 = ssub.s32 %s11, 2
    %s18 = sadd.s32 %s11, 1
    %s19 = ssub.s32 %s11, %s18
    %p20 = scmp.eq.s32.totalorder %s19, 0
    %s22 = sadd.s32 %s21, 1
    %s23 = scalar_select %p20, %s21, %s22
    %p26 = pneg %p20
    %p27 = scmp.eq.s32.totalorder %s11, 3
    %p28 = por %p26, %p27
    %p29 = scmp.ne.s32.totalorder %s21, %s24
    %p30 = scmp.eq.s32.totalorder %s11, 0
    %p31 = por %p29, %p30
    %p32 = scmp.ne.s32.totalorder %s21, %s24
    %p33 = scmp.eq.s32.totalorder %s16, 3
    %p34 = por %p32, %p33
    %p35 = scmp.ne.s32.totalorder %s24, %s25
    %p36 = scmp.eq.s32.totalorder %s16, 0
    %p37 = por %p35, %p36
    %p38 = scmp.ne.s32.totalorder %s24, %s25
    %p39 = scmp.eq.s32.totalorder %s17, 3
    %p40 = por %p38, %p39
    %p42 = scmp.ne.s32.totalorder %s25, %s41
    %p43 = scmp.eq.s32.totalorder %s17, 0
    %p44 = por %p42, %p43
    %s45 = ssub.s32 %s11, %s18
    %p46 = scmp.eq.s32.totalorder %s45, 0
    %s48 = sadd.s32 %s47, 1
    %s49 = scalar_select %p46, %s47, %s48
    %p52 = pneg %p46
    %p53 = scmp.eq.s32.totalorder %s11, 3
    %p54 = por %p52, %p53
    %p55 = scmp.ne.s32.totalorder %s47, %s50
    %p56 = scmp.eq.s32.totalorder %s11, 0
    %p57 = por %p55, %p56
    %p58 = scmp.ne.s32.totalorder %s47, %s50
    %p59 = scmp.eq.s32.totalorder %s16, 3
    %p60 = por %p58, %p59
    %p61 = scmp.ne.s32.totalorder %s50, %s51
    %p62 = scmp.eq.s32.totalorder %s16, 0
    %p63 = por %p61, %p62
    %p64 = scmp.ne.s32.totalorder %s50, %s51
    %p65 = scmp.eq.s32.totalorder %s17, 3
    %p66 = por %p64, %p65
    %p68 = scmp.ne.s32.totalorder %s51, %s67
    %p69 = scmp.eq.s32.totalorder %s17, 0
    %p70 = por %p68, %p69
    %s72 = sadd.s32 %s71, 1
    %p75 = scmp.eq.s32.totalorder %s11, 3
    %p76 = scmp.ne.s32.totalorder %s71, %s73
    %p77 = scmp.eq.s32.totalorder %s11, 0
    %p78 = por %p76, %p77
    %p79 = scmp.ne.s32.totalorder %s71, %s73
    %p80 = scmp.eq.s32.totalorder %s16, 3
    %p81 = por %p79, %p80
    %p82 = scmp.ne.s32.totalorder %s73, %s74
    %p83 = scmp.eq.s32.totalorder %s16, 0
    %p84 = por %p82, %p83
    %p85 = scmp.ne.s32.totalorder %s73, %s74
    %p86 = scmp.eq.s32.totalorder %s17, 3
    %p87 = por %p85, %p86
    %p89 = scmp.ne.s32.totalorder %s74, %s88
    %p90 = scmp.eq.s32.totalorder %s17, 0
    %p91 = por %p89, %p90
    %s93 = sadd.s32 %s92, 1
    %p96 = scmp.eq.s32.totalorder %s11, 3
    %p97 = scmp.ne.s32.totalorder %s92, %s94
    %p98 = scmp.eq.s32.totalorder %s11, 0
    %p99 = por %p97, %p98
    %p100 = scmp.ne.s32.totalorder %s92, %s94
    %p101 = scmp.eq.s32.totalorder %s16, 3
    %p102 = por %p100, %p101
    %p103 = scmp.ne.s32.totalorder %s94, %s95
    %p104 = scmp.eq.s32.totalorder %s16, 0
    %p105 = por %p103, %p104
    %p106 = scmp.ne.s32.totalorder %s94, %s95
    %p107 = scmp.eq.s32.totalorder %s17, 3
    %p108 = por %p106, %p107
    %p110 = scmp.ne.s32.totalorder %s95, %s109
    %p111 = scmp.eq.s32.totalorder %s17, 0
    %p112 = por %p110, %p111
    %s114 = sadd.s32 %s113, 1
    %p117 = scmp.eq.s32.totalorder %s11, 3
    %p118 = scmp.ne.s32.totalorder %s113, %s115
    %p119 = scmp.eq.s32.totalorder %s11, 0
    %p120 = por %p118, %p119
    %p121 = scmp.ne.s32.totalorder %s113, %s115
    %p122 = scmp.eq.s32.totalorder %s16, 3
    %p123 = por %p121, %p122
    %p124 = scmp.ne.s32.totalorder %s115, %s116
    %p125 = scmp.eq.s32.totalorder %s16, 0
    %p126 = por %p124, %p125
    %p127 = scmp.ne.s32.totalorder %s115, %s116
    %p128 = scmp.eq.s32.totalorder %s17, 3
    %p129 = por %p127, %p128
    %p131 = scmp.ne.s32.totalorder %s116, %s130
    %p132 = scmp.eq.s32.totalorder %s17, 0
    %p133 = por %p131, %p132
    %s135 = sadd.s32 %s134, 1
    %p138 = scmp.eq.s32.totalorder %s11, 3
    %p139 = scmp.ne.s32.totalorder %s134, %s136
    %p140 = scmp.eq.s32.totalorder %s11, 0
    %p141 = por %p139, %p140
    %p142 = scmp.ne.s32.totalorder %s134, %s136
    %p143 = scmp.eq.s32.totalorder %s16, 3
    %p144 = por %p142, %p143
    %p145 = scmp.ne.s32.totalorder %s136, %s137
    %p146 = scmp.eq.s32.totalorder %s16, 0
    %p147 = por %p145, %p146
    %p148 = scmp.ne.s32.totalorder %s136, %s137
    %p149 = scmp.eq.s32.totalorder %s17, 3
    %p150 = por %p148, %p149
    %p152 = scmp.ne.s32.totalorder %s137, %s151
    %p153 = scmp.eq.s32.totalorder %s17, 0
    %p154 = por %p152, %p153
    %p155 = scmp.le.s32.totalorder 1, %s11
    %p156 = scmp.lt.s32.totalorder %s11, 5
    %p157 = pnand %p155, %p156
    %p158 = pneg %p157
    // Predicated region
    $region9: #{_lambda_.7} parent=5 // pred_check
      _
    $region10: #{_lambda_.7} parent=5 // pred_check_branch
      %160 = sbr.rel (%p157) target = $region12
    $region11: #{_lambda_.7} parent=5 // pred_region
      %s161 = ssub.s32 %s11, 1
      // Predicated region
      $region13: #{_lambda_.7} parent=11 // pred_check
        %p162 = pneg %p84
      $region14: #{_lambda_.7} parent=11 // pred_check_branch
        %164 = sbr.rel (%p162) target = $region16
      $region15: #{_lambda_.7} parent=11 // pred_region
        _
      $region16: #{_lambda_.7} parent=11 // pred_fallthru
        _
      // Predicated region
      $region17: #{_lambda_.7} parent=11 // pred_check
        %p165 = pneg %p105
      $region18: #{_lambda_.7} parent=11 // pred_check_branch
        %167 = sbr.rel (%p165) target = $region20
      $region19: #{_lambda_.7} parent=11 // pred_region
        _
      $region20: #{_lambda_.7} parent=11 // pred_fallthru
        _
      // Predicated region
      $region21: #{_lambda_.7} parent=11 // pred_check
        %p168 = pneg %p126
      $region22: #{_lambda_.7} parent=11 // pred_check_branch
        %170 = sbr.rel (%p168) target = $region24
      $region23: #{_lambda_.7} parent=11 // pred_region
        _
      $region24: #{_lambda_.7} parent=11 // pred_fallthru
        _
    $region12: #{_lambda_.7} parent=5 // pred_fallthru
      _
    %p171 = scmp.lt.s32.totalorder %s11, 4
    // Predicated region
    $region25: #{_lambda_.7} parent=5 // pred_check
      %p172 = pneg %p171
    $region26: #{_lambda_.7} parent=5 // pred_check_branch
      %174 = sbr.rel (%p172) target = $region28
    $region27: #{_lambda_.7} parent=5 // pred_region
      // Predicated region
      $region29: #{_lambda_.7} parent=27 // pred_check
        %p175 = pneg %p31
      $region30: #{_lambda_.7} parent=27 // pred_check_branch
        %177 = sbr.rel (%p175) target = $region32
      $region31: #{_lambda_.7} parent=27 // pred_region
        %p178 = scmp.lt.s32.totalorder %s11, 3
        %s179 = scalar_select %p178, %s11, 3
        %s180 = smul.addr %s179, 9
        %s181 = smul.addr %s180, 4
        %s182 = scalar_lea.vmem %s0, %s181
      $region32: #{_lambda_.7} parent=27 // pred_fallthru
        _
      // Predicated region
      $region33: #{_lambda_.7} parent=27 // pred_check
        %p183 = pneg %p57
      $region34: #{_lambda_.7} parent=27 // pred_check_branch
        %185 = sbr.rel (%p183) target = $region36
      $region35: #{_lambda_.7} parent=27 // pred_region
        %s186 = smul.u32 4, %s11
        %p187 = scmp.lt.s32.totalorder %s186, 15
        %s188 = scalar_select %p187, %s186, 15
        %s189 = smul.addr %s188, 16
        %s190 = smul.addr %s189, 4
        %s191 = scalar_lea.vmem %s1, %s190
        %s192 = smul.u32 4, %s11
      $region36: #{_lambda_.7} parent=27 // pred_fallthru
        _
    $region28: #{_lambda_.7} parent=5 // pred_fallthru
      _
    %p193 = scmp.le.s32.totalorder 1, %s11
    %p194 = scmp.lt.s32.totalorder %s11, 5
    %p195 = pnand %p193, %p194
    %p196 = pneg %p195
    // Predicated region
    $region37: #{_lambda_.7} parent=5 // pred_check
      _
    $region38: #{_lambda_.7} parent=5 // pred_check_branch
      %198 = sbr.rel (%p195) target = $region40
    $region39: #{_lambda_.7} parent=5 // pred_region
      %s199 = ssub.s32 %s11, 1
      %p200 = scmp.lt.s32.totalorder %s16, 3
      %s201 = scalar_select %p200, %s16, 3
      %s202 = smul.addr %s201, 9
      %s203 = smul.addr %s202, 4
      %s204 = scalar_lea.vmem %s0, %s203
      %p205 = pneg %p37
      %p206 = pneg %p34
      %s207 = smul.u32 4, %s16
      %p208 = scmp.lt.s32.totalorder %s207, 15
      %s209 = scalar_select %p208, %s207, 15
      %s210 = smul.addr %s209, 16
      %s211 = smul.addr %s210, 4
      %s212 = scalar_lea.vmem %s1, %s211
      %p213 = pneg %p63
      %p214 = pneg %p60
      %p215 = pneg %p84
      %p216 = pneg %p81
      %p217 = pneg %p105
      %p218 = pneg %p102
      %p219 = pneg %p126
      %p220 = pneg %p123
      %p221 = pneg %p147
      %p222 = pneg %p144
      %p223 = scmp.lt.s32.totalorder %s16, 3
      %s224 = scalar_select %p223, %s16, 3
      %s225 = smul.addr %s224, 9
      %s226 = smul.addr %s225, 4
      %s227 = scalar_lea.vmem %s0, %s226
      %s228 = smul.u32 4, %s16
      %p229 = scmp.lt.s32.totalorder %s228, 15
      %s230 = scalar_select %p229, %s228, 15
      %s231 = smul.addr %s230, 16
      %s232 = smul.addr %s231, 4
      %s233 = scalar_lea.vmem %s1, %s232
      %s234 = smul.u32 4, %s16
      %v236 = vld [vmem:[%s227] sm:$0xf]
      %v237 = vld [vmem:[%s227 + $0x4] sm:$0xf]
      %v238 = vld [vmem:[%s227 + $0x8] sm:$0xf]
      %v239 = vld [vmem:[%s227 + $0xc] sm:$0xf]
      %v240 = vld [vmem:[%s227 + $0x10] sm:$0xf]
      %v241 = vld [vmem:[%s227 + $0x14] sm:$0xf]
      %v242 = vld [vmem:[%s227 + $0x18] sm:$0xf]
      %v243 = vld [vmem:[%s227 + $0x1c] sm:$0xf]
      %v244 = vld [vmem:[%s227 + $0x20] sm:$0xf]
      %v245 = vld [vmem:[%s233] sm:$0xf]
      %v246 = vld [vmem:[%s233 + $0x4] sm:$0xf]
      %v247 = vld [vmem:[%s233 + $0x8] sm:$0xf]
      %v248 = vld [vmem:[%s233 + $0xc] sm:$0xf]
      %v249 = vld [vmem:[%s233 + $0x10] sm:$0xf]
      %v250 = vld [vmem:[%s233 + $0x14] sm:$0xf]
      %v251 = vld [vmem:[%s233 + $0x18] sm:$0xf]
      %v252 = vld [vmem:[%s233 + $0x1c] sm:$0xf]
      %v253 = vld [vmem:[%s233 + $0x20] sm:$0xf]
      %v254 = vld [vmem:[%s233 + $0x24] sm:$0xf]
      %v255 = vld [vmem:[%s233 + $0x28] sm:$0xf]
      %v256 = vld [vmem:[%s233 + $0x2c] sm:$0xf]
      %v257 = vld [vmem:[%s233 + $0x30] sm:$0xf]
      %v258 = vld [vmem:[%s233 + $0x34] sm:$0xf]
      %v259 = vld [vmem:[%s233 + $0x38] sm:$0xf]
      %v260 = vld [vmem:[%s233 + $0x3c] sm:$0xf]
      %v270 = vunpack.c.l.b16 %v236
      %v271 = vunpack.c.l.b16 %v237
      %v272 = vunpack.c.l.b16 %v238
      %v273 = vunpack.c.l.b16 %v239
      %v274 = vunpack.c.l.b16 %v240
      %v275 = vunpack.c.l.b16 %v241
      %v276 = vunpack.c.l.b16 %v242
      %v277 = vunpack.c.l.b16 %v243
      %v278 = vunpack.c.l.b16 %v244
      %v279 = vpack.c.b16 %v271, %v270
      %v280 = vpack.c.b16 %v273, %v272
      %v281 = vpack.c.b16 %v275, %v274
      %v282 = vpack.c.b16 %v277, %v276
      %v283 = vpack.c.b16 %v278, %v278
      %v305 = vunpack.c.l.b16 %v245
      %v306 = vunpack.c.l.b16 %v246
      %v307 = vunpack.c.l.b16 %v247
      %v308 = vunpack.c.l.b16 %v248
      %v309 = vunpack.c.l.b16 %v249
      %v310 = vunpack.c.l.b16 %v250
      %v311 = vunpack.c.l.b16 %v251
      %v312 = vunpack.c.l.b16 %v252
      %v313 = vunpack.c.l.b16 %v253
      %v314 = vunpack.c.l.b16 %v254
      %v315 = vunpack.c.l.b16 %v255
      %v316 = vunpack.c.l.b16 %v256
      %v317 = vunpack.c.l.b16 %v257
      %v318 = vunpack.c.l.b16 %v258
      %v319 = vunpack.c.l.b16 %v259
      %v320 = vunpack.c.l.b16 %v260
      %v321 = vpack.c.b16 %v306, %v305
      %v322 = vpack.c.b16 %v308, %v307
      %v323 = vpack.c.b16 %v310, %v309
      %v324 = vpack.c.b16 %v312, %v311
      %v325 = vpack.c.b16 %v314, %v313
      %v326 = vpack.c.b16 %v316, %v315
      %v327 = vpack.c.b16 %v318, %v317
      %v328 = vpack.c.b16 %v320, %v319
      %337 = vmatprep.subr.bf16.mxu0 0
      %338 = vmatpush1.bf16.msra.mxu0 %v321
      %339 = vmatprep.subr.bf16.mxu0 0
      %340 = vmatpush1.bf16.msra.mxu0 %v322
      %341 = vmatprep.subr.bf16.mxu0 0
      %342 = vmatpush1.bf16.msra.mxu0 %v323
      %343 = vmatprep.subr.bf16.mxu0 0
      %344 = vmatpush1.bf16.msra.mxu0 %v324
      %345 = vmatprep.subr.bf16.mxu0 0
      %346 = vmatpush1.bf16.msra.mxu0 %v325
      %347 = vmatprep.subr.bf16.mxu0 0
      %348 = vmatpush1.bf16.msra.mxu0 %v326
      %349 = vmatprep.subr.bf16.mxu0 0
      %350 = vmatpush1.bf16.msra.mxu0 %v327
      %351 = vmatprep.subr.bf16.mxu0 0
      %352 = vmatpush1.bf16.msra.mxu0 %v328
      %353 = vmatprep.subr.bf16.mxu0 0
      %354 = vmatpush1.bf16.msra.mxu0 0
      %355 = vmatprep.subr.bf16.mxu0 0
      %356 = vmatpush1.bf16.msra.mxu0 0
      %357 = vmatprep.subr.bf16.mxu0 0
      %358 = vmatpush1.bf16.msra.mxu0 0
      %359 = vmatprep.subr.bf16.mxu0 0
      %360 = vmatpush1.bf16.msra.mxu0 0
      %361 = vmatprep.subr.bf16.mxu0 0
      %362 = vmatpush1.bf16.msra.mxu0 0
      %363 = vmatprep.subr.bf16.mxu0 0
      %364 = vmatpush1.bf16.msra.mxu0 0
      %365 = vmatprep.subr.bf16.mxu0 0
      %366 = vmatpush1.bf16.msra.mxu0 0
      %367 = vmatprep.subr.bf16.mxu0 0
      %368 = vmatpush1.bf16.msra.mxu0 0
      %369 = vmatprep.mubr.bf16.mxu0 0
      %370 = vmatmul.mubr.bf16.gmra.mrb[0].mxu0 %v279
      %v371 = vpop.f32.mrb[0].mxu0
      %v372 = vadd.f32 0.0, %v371
      %v373 = vpop.f32.mrb[0].mxu0
      %v374 = vpop.f32.mrb[0].mxu0
      %v375 = vadd.f32 0.0, %v374
      %v376 = vpop.f32.mrb[0].mxu0
      %377 = vmatprep.mubr.bf16.mxu0 0
      %378 = vmatmul.mubr.bf16.gmra.mrb[0].mxu0 %v280
      %v379 = vpop.f32.mrb[0].mxu0
      %v380 = vadd.f32 0.0, %v379
      %v381 = vpop.f32.mrb[0].mxu0
      %v382 = vpop.f32.mrb[0].mxu0
      %v383 = vadd.f32 0.0, %v382
      %v384 = vpop.f32.mrb[0].mxu0
      %385 = vmatprep.mubr.bf16.mxu0 0
      %386 = vmatmul.mubr.bf16.gmra.mrb[0].mxu0 %v281
      %v387 = vpop.f32.mrb[0].mxu0
      %v388 = vadd.f32 0.0, %v387
      %v389 = vpop.f32.mrb[0].mxu0
      %v390 = vpop.f32.mrb[0].mxu0
      %v391 = vadd.f32 0.0, %v390
      %v392 = vpop.f32.mrb[0].mxu0
      %393 = vmatprep.mubr.bf16.mxu0 0
      %394 = vmatmul.mubr.bf16.gmra.mrb[0].mxu0 %v282
      %v395 = vpop.f32.mrb[0].mxu0
      %v396 = vpop.f32.mrb[0].mxu0
      %v397 = vpop.f32.mrb[0].mxu0
      %v398 = vpop.f32.mrb[0].mxu0
      %399 = vmatprep.mubr.bf16.mxu0 0
      %400 = vmatmul.mubr.bf16.gmra.mrb[0].mxu0 %v283
      %v401 = vpop.f32.mrb[0].mxu0
      %v402 = vpop.f32.mrb[0].mxu0
      %v403 = vpop.f32.mrb[0].mxu0
      %v404 = vpop.f32.mrb[0].mxu0
      %405 = vdwg.mxu0
      %s406 = scalar_lea.vmem %s233, 64
      %v407 = vld [vmem:[%s406] sm:$0xf]
      %v408 = vld [vmem:[%s406 + $0x4] sm:$0xf]
      %v409 = vld [vmem:[%s406 + $0x8] sm:$0xf]
      %v410 = vld [vmem:[%s406 + $0xc] sm:$0xf]
      %v411 = vld [vmem:[%s406 + $0x10] sm:$0xf]
      %v412 = vld [vmem:[%s406 + $0x14] sm:$0xf]
      %v413 = vld [vmem:[%s406 + $0x18] sm:$0xf]
      %v414 = vld [vmem:[%s406 + $0x1c] sm:$0xf]
      %v415 = vld [vmem:[%s406 + $0x20] sm:$0xf]
      %v416 = vld [vmem:[%s406 + $0x24] sm:$0xf]
      %v417 = vld [vmem:[%s406 + $0x28] sm:$0xf]
      %v418 = vld [vmem:[%s406 + $0x2c] sm:$0xf]
      %v419 = vld [vmem:[%s406 + $0x30] sm:$0xf]
      %v420 = vld [vmem:[%s406 + $0x34] sm:$0xf]
      %v421 = vld [vmem:[%s406 + $0x38] sm:$0xf]
      %v422 = vld [vmem:[%s406 + $0x3c] sm:$0xf]
      %v439 = vunpack.c.l.b16 %v407
      %v440 = vunpack.c.l.b16 %v408
      %v441 = vunpack.c.l.b16 %v409
      %v442 = vunpack.c.l.b16 %v410
      %v443 = vunpack.c.l.b16 %v411
      %v444 = vunpack.c.l.b16 %v412
      %v445 = vunpack.c.l.b16 %v413
      %v446 = vunpack.c.l.b16 %v414
      %v447 = vunpack.c.l.b16 %v415
      %v448 = vunpack.c.l.b16 %v416
      %v449 = vunpack.c.l.b16 %v417
      %v450 = vunpack.c.l.b16 %v418
      %v451 = vunpack.c.l.b16 %v419
      %v452 = vunpack.c.l.b16 %v420
      %v453 = vunpack.c.l.b16 %v421
      %v454 = vunpack.c.l.b16 %v422
      %v455 = vpack.c.b16 %v440, %v439
      %v456 = vpack.c.b16 %v442, %v441
      %v457 = vpack.c.b16 %v444, %v443
      %v458 = vpack.c.b16 %v446, %v445
      %v459 = vpack.c.b16 %v448, %v447
      %v460 = vpack.c.b16 %v450, %v449
      %v461 = vpack.c.b16 %v452, %v451
      %v462 = vpack.c.b16 %v454, %v453
      %471 = vmatprep.subr.bf16.mxu0 0
      %472 = vmatpush1.bf16.msra.mxu0 %v455
      %473 = vmatprep.subr.bf16.mxu0 0
      %474 = vmatpush1.bf16.msra.mxu0 %v456
      %475 = vmatprep.subr.bf16.mxu0 0
      %476 = vmatpush1.bf16.msra.mxu0 %v457
      %477 = vmatprep.subr.bf16.mxu0 0
      %478 = vmatpush1.bf16.msra.mxu0 %v458
      %479 = vmatprep.subr.bf16.mxu0 0
      %480 = vmatpush1.bf16.msra.mxu0 %v459
      %481 = vmatprep.subr.bf16.mxu0 0
      %482 = vmatpush1.bf16.msra.mxu0 %v460
      %483 = vmatprep.subr.bf16.mxu0 0
      %484 = vmatpush1.bf16.msra.mxu0 %v461
      %485 = vmatprep.subr.bf16.mxu0 0
      %486 = vmatpush1.bf16.msra.mxu0 %v462
      %487 = vmatprep.subr.bf16.mxu0 0
      %488 = vmatpush1.bf16.msra.mxu0 0
      %489 = vmatprep.subr.bf16.mxu0 0
      %490 = vmatpush1.bf16.msra.mxu0 0
      %491 = vmatprep.subr.bf16.mxu0 0
      %492 = vmatpush1.bf16.msra.mxu0 0
      %493 = vmatprep.subr.bf16.mxu0 0
      %494 = vmatpush1.bf16.msra.mxu0 0
      %495 = vmatprep.subr.bf16.mxu0 0
      %496 = vmatpush1.bf16.msra.mxu0 0
      %497 = vmatprep.subr.bf16.mxu0 0
      %498 = vmatpush1.bf16.msra.mxu0 0
      %499 = vmatprep.subr.bf16.mxu0 0
      %500 = vmatpush1.bf16.msra.mxu0 0
      %501 = vmatprep.subr.bf16.mxu0 0
      %502 = vmatpush1.bf16.msra.mxu0 0
      %503 = vmatprep.mubr.bf16.mxu0 0
      %504 = vmatmul.mubr.bf16.gmra.mrb[0].mxu0 %v279
      %v505 = vpop.f32.mrb[0].mxu0
      %v506 = vadd.f32 0.0, %v505
      %v507 = vpop.f32.mrb[0].mxu0
      %v508 = vpop.f32.mrb[0].mxu0
      %v509 = vadd.f32 0.0, %v508
      %v510 = vpop.f32.mrb[0].mxu0
      %511 = vmatprep.mubr.bf16.mxu0 0
      %512 = vmatmul.mubr.bf16.gmra.mrb[0].mxu0 %v280
      %v513 = vpop.f32.mrb[0].mxu0
      %v514 = vadd.f32 0.0, %v513
      %v515 = vpop.f32.mrb[0].mxu0
      %v516 = vpop.f32.mrb[0].mxu0
      %v517 = vadd.f32 0.0, %v516
      %v518 = vpop.f32.mrb[0].mxu0
      %519 = vmatprep.mubr.bf16.mxu0 0
      %520 = vmatmul.mubr.bf16.gmra.mrb[0].mxu0 %v281
      %v521 = vpop.f32.mrb[0].mxu0
      %v522 = vadd.f32 0.0, %v521
      %v523 = vpop.f32.mrb[0].mxu0
      %v524 = vpop.f32.mrb[0].mxu0
      %v525 = vadd.f32 0.0, %v524
      %v526 = vpop.f32.mrb[0].mxu0
      %527 = vmatprep.mubr.bf16.mxu0 0
      %528 = vmatmul.mubr.bf16.gmra.mrb[0].mxu0 %v282
      %v529 = vpop.f32.mrb[0].mxu0
      %v530 = vadd.f32 0.0, %v529
      %v531 = vpop.f32.mrb[0].mxu0
      %v532 = vpop.f32.mrb[0].mxu0
      %v533 = vpop.f32.mrb[0].mxu0
      %534 = vmatprep.mubr.bf16.mxu0 0
      %535 = vmatmul.mubr.bf16.gmra.mrb[0].mxu0 %v283
      %v536 = vpop.f32.mrb[0].mxu0
      %v537 = vpop.f32.mrb[0].mxu0
      %v538 = vpop.f32.mrb[0].mxu0
      %v539 = vpop.f32.mrb[0].mxu0
      %540 = vdwg.mxu0
      %vm548 = vcmask 1046528
      %v549 = vrot.slane %v506, 1
      %v550 = vrot.slane %v509, 1
      %v551 = vsel %vm548, %v549, %v550
      %v552 = vrot.slane %v514, 1
      %v553 = vsel %vm548, %v550, %v552
      %v554 = vrot.slane %v517, 1
      %v555 = vsel %vm548, %v552, %v554
      %v556 = vrot.slane %v522, 1
      %v557 = vsel %vm548, %v554, %v556
      %v558 = vrot.slane %v525, 1
      %v559 = vsel %vm548, %v556, %v558
      %v560 = vrot.slane %v530, 1
      %v561 = vsel %vm548, %v558, %v560
      %v568 = vadd.f32 %v372, %v551
      %v569 = vadd.f32 %v375, %v553
      %v570 = vadd.f32 %v380, %v555
      %v571 = vadd.f32 %v383, %v557
      %v572 = vadd.f32 %v388, %v559
      %v573 = vadd.f32 %v391, %v561
      %s574 = scalar_lea.vmem %s233, 128
      %v575 = vld [vmem:[%s574] sm:$0xf]
      %v576 = vld [vmem:[%s574 + $0x4] sm:$0xf]
      %v577 = vld [vmem:[%s574 + $0x8] sm:$0xf]
      %v578 = vld [vmem:[%s574 + $0xc] sm:$0xf]
      %v579 = vld [vmem:[%s574 + $0x10] sm:$0xf]
      %v580 = vld [vmem:[%s574 + $0x14] sm:$0xf]
      %v581 = vld [vmem:[%s574 + $0x18] sm:$0xf]
      %v582 = vld [vmem:[%s574 + $0x1c] sm:$0xf]
      %v583 = vld [vmem:[%s574 + $0x20] sm:$0xf]
      %v584 = vld [vmem:[%s574 + $0x24] sm:$0xf]
      %v585 = vld [vmem:[%s574 + $0x28] sm:$0xf]
      %v586 = vld [vmem:[%s574 + $0x2c] sm:$0xf]
      %v587 = vld [vmem:[%s574 + $0x30] sm:$0xf]
      %v588 = vld [vmem:[%s574 + $0x34] sm:$0xf]
      %v589 = vld [vmem:[%s574 + $0x38] sm:$0xf]
      %v590 = vld [vmem:[%s574 + $0x3c] sm:$0xf]
      %v607 = vunpack.c.l.b16 %v575
      %v608 = vunpack.c.l.b16 %v576
      %v609 = vunpack.c.l.b16 %v577
      %v610 = vunpack.c.l.b16 %v578
      %v611 = vunpack.c.l.b16 %v579
      %v612 = vunpack.c.l.b16 %v580
      %v613 = vunpack.c.l.b16 %v581
      %v614 = vunpack.c.l.b16 %v582
      %v615 = vunpack.c.l.b16 %v583
      %v616 = vunpack.c.l.b16 %v584
      %v617 = vunpack.c.l.b16 %v585
      %v618 = vunpack.c.l.b16 %v586
      %v619 = vunpack.c.l.b16 %v587
      %v620 = vunpack.c.l.b16 %v588
      %v621 = vunpack.c.l.b16 %v589
      %v622 = vunpack.c.l.b16 %v590
      %v623 = vpack.c.b16 %v608, %v607
      %v624 = vpack.c.b16 %v610, %v609
      %v625 = vpack.c.b16 %v612, %v611
      %v626 = vpack.c.b16 %v614, %v613
      %v627 = vpack.c.b16 %v616, %v615
      %v628 = vpack.c.b16 %v618, %v617
      %v629 = vpack.c.b16 %v620, %v619
      %v630 = vpack.c.b16 %v622, %v621
      %639 = vmatprep.subr.bf16.mxu0 0
      %640 = vmatpush1.bf16.msra.mxu0 %v623
      %641 = vmatprep.subr.bf16.mxu0 0
      %642 = vmatpush1.bf16.msra.mxu0 %v624
      %643 = vmatprep.subr.bf16.mxu0 0
      %644 = vmatpush1.bf16.msra.mxu0 %v625
      %645 = vmatprep.subr.bf16.mxu0 0
      %646 = vmatpush1.bf16.msra.mxu0 %v626
      %647 = vmatprep.subr.bf16.mxu0 0
      %648 = vmatpush1.bf16.msra.mxu0 %v627
      %649 = vmatprep.subr.bf16.mxu0 0
      %650 = vmatpush1.bf16.msra.mxu0 %v628
      %651 = vmatprep.subr.bf16.mxu0 0
      %652 = vmatpush1.bf16.msra.mxu0 %v629
      %653 = vmatprep.subr.bf16.mxu0 0
      %654 = vmatpush1.bf16.msra.mxu0 %v630
      %655 = vmatprep.subr.bf16.mxu0 0
      %656 = vmatpush1.bf16.msra.mxu0 0
      %657 = vmatprep.subr.bf16.mxu0 0
      %658 = vmatpush1.bf16.msra.mxu0 0
      %659 = vmatprep.subr.bf16.mxu0 0
      %660 = vmatpush1.bf16.msra.mxu0 0
      %661 = vmatprep.subr.bf16.mxu0 0
      %662 = vmatpush1.bf16.msra.mxu0 0
      %663 = vmatprep.subr.bf16.mxu0 0
      %664 = vmatpush1.bf16.msra.mxu0 0
      %665 = vmatprep.subr.bf16.mxu0 0
      %666 = vmatpush1.bf16.msra.mxu0 0
      %667 = vmatprep.subr.bf16.mxu0 0
      %668 = vmatpush1.bf16.msra.mxu0 0
      %669 = vmatprep.subr.bf16.mxu0 0
      %670 = vmatpush1.bf16.msra.mxu0 0
      %671 = vmatprep.mubr.bf16.mxu0 0
      %672 = vmatmul.mubr.bf16.gmra.mrb[0].mxu0 %v279
      %v673 = vpop.f32.mrb[0].mxu0
      %v674 = vpop.f32.mrb[0].mxu0
      %v675 = vpop.f32.mrb[0].mxu0
      %v676 = vadd.f32 0.0, %v675
      %v677 = vpop.f32.mrb[0].mxu0
      %678 = vmatprep.mubr.bf16.mxu0 0
      %679 = vmatmul.mubr.bf16.gmra.mrb[0].mxu0 %v280
      %v680 = vpop.f32.mrb[0].mxu0
      %v681 = vadd.f32 0.0, %v680
      %v682 = vpop.f32.mrb[0].mxu0
      %v683 = vpop.f32.mrb[0].mxu0
      %v684 = vadd.f32 0.0, %v683
      %v685 = vpop.f32.mrb[0].mxu0
      %686 = vmatprep.mubr.bf16.mxu0 0
      %687 = vmatmul.mubr.bf16.gmra.mrb[0].mxu0 %v281
      %v688 = vpop.f32.mrb[0].mxu0
      %v689 = vadd.f32 0.0, %v688
      %v690 = vpop.f32.mrb[0].mxu0
      %v691 = vpop.f32.mrb[0].mxu0
      %v692 = vadd.f32 0.0, %v691
      %v693 = vpop.f32.mrb[0].mxu0
      %694 = vmatprep.mubr.bf16.mxu0 0
      %695 = vmatmul.mubr.bf16.gmra.mrb[0].mxu0 %v282
      %v696 = vpop.f32.mrb[0].mxu0
      %v697 = vadd.f32 0.0, %v696
      %v698 = vpop.f32.mrb[0].mxu0
      %v699 = vpop.f32.mrb[0].mxu0
      %v700 = vpop.f32.mrb[0].mxu0
      %701 = vmatprep.mubr.bf16.mxu0 0
      %702 = vmatmul.mubr.bf16.gmra.mrb[0].mxu0 %v283
      %v703 = vpop.f32.mrb[0].mxu0
      %v704 = vpop.f32.mrb[0].mxu0
      %v705 = vpop.f32.mrb[0].mxu0
      %v706 = vpop.f32.mrb[0].mxu0
      %707 = vdwg.mxu0
      %v708 = vadd.f32 %v568, %v676
      %v709 = vadd.f32 %v569, %v681
      %v710 = vadd.f32 %v570, %v684
      %v711 = vadd.f32 %v571, %v689
      %v712 = vadd.f32 %v572, %v692
      %v713 = vadd.f32 %v573, %v697
      %s714 = scalar_lea.vmem %s233, 192
      %v715 = vld [vmem:[%s714] sm:$0xf]
      %v716 = vld [vmem:[%s714 + $0x4] sm:$0xf]
      %v717 = vld [vmem:[%s714 + $0x8] sm:$0xf]
      %v718 = vld [vmem:[%s714 + $0xc] sm:$0xf]
      %v719 = vld [vmem:[%s714 + $0x10] sm:$0xf]
      %v720 = vld [vmem:[%s714 + $0x14] sm:$0xf]
      %v721 = vld [vmem:[%s714 + $0x18] sm:$0xf]
      %v722 = vld [vmem:[%s714 + $0x1c] sm:$0xf]
      %v723 = vld [vmem:[%s714 + $0x20] sm:$0xf]
      %v724 = vld [vmem:[%s714 + $0x24] sm:$0xf]
      %v725 = vld [vmem:[%s714 + $0x28] sm:$0xf]
      %v726 = vld [vmem:[%s714 + $0x2c] sm:$0xf]
      %v727 = vld [vmem:[%s714 + $0x30] sm:$0xf]
      %v728 = vld [vmem:[%s714 + $0x34] sm:$0xf]
      %v729 = vld [vmem:[%s714 + $0x38] sm:$0xf]
      %v730 = vld [vmem:[%s714 + $0x3c] sm:$0xf]
      %v747 = vunpack.c.l.b16 %v715
      %v748 = vunpack.c.l.b16 %v716
      %v749 = vunpack.c.l.b16 %v717
      %v750 = vunpack.c.l.b16 %v718
      %v751 = vunpack.c.l.b16 %v719
      %v752 = vunpack.c.l.b16 %v720
      %v753 = vunpack.c.l.b16 %v721
      %v754 = vunpack.c.l.b16 %v722
      %v755 = vunpack.c.l.b16 %v723
      %v756 = vunpack.c.l.b16 %v724
      %v757 = vunpack.c.l.b16 %v725
      %v758 = vunpack.c.l.b16 %v726
      %v759 = vunpack.c.l.b16 %v727
      %v760 = vunpack.c.l.b16 %v728
      %v761 = vunpack.c.l.b16 %v729
      %v762 = vunpack.c.l.b16 %v730
      %v763 = vpack.c.b16 %v748, %v747
      %v764 = vpack.c.b16 %v750, %v749
      %v765 = vpack.c.b16 %v752, %v751
      %v766 = vpack.c.b16 %v754, %v753
      %v767 = vpack.c.b16 %v756, %v755
      %v768 = vpack.c.b16 %v758, %v757
      %v769 = vpack.c.b16 %v760, %v759
      %v770 = vpack.c.b16 %v762, %v761
      %779 = vmatprep.subr.bf16.mxu0 0
      %780 = vmatpush1.bf16.msra.mxu0 %v763
      %781 = vmatprep.subr.bf16.mxu0 0
      %782 = vmatpush1.bf16.msra.mxu0 %v764
      %783 = vmatprep.subr.bf16.mxu0 0
      %784 = vmatpush1.bf16.msra.mxu0 %v765
      %785 = vmatprep.subr.bf16.mxu0 0
      %786 = vmatpush1.bf16.msra.mxu0 %v766
      %787 = vmatprep.subr.bf16.mxu0 0
      %788 = vmatpush1.bf16.msra.mxu0 %v767
      %789 = vmatprep.subr.bf16.mxu0 0
      %790 = vmatpush1.bf16.msra.mxu0 %v768
      %791 = vmatprep.subr.bf16.mxu0 0
      %792 = vmatpush1.bf16.msra.mxu0 %v769
      %793 = vmatprep.subr.bf16.mxu0 0
      %794 = vmatpush1.bf16.msra.mxu0 %v770
      %795 = vmatprep.subr.bf16.mxu0 0
      %796 = vmatpush1.bf16.msra.mxu0 0
      %797 = vmatprep.subr.bf16.mxu0 0
      %798 = vmatpush1.bf16.msra.mxu0 0
      %799 = vmatprep.subr.bf16.mxu0 0
      %800 = vmatpush1.bf16.msra.mxu0 0
      %801 = vmatprep.subr.bf16.mxu0 0
      %802 = vmatpush1.bf16.msra.mxu0 0
      %803 = vmatprep.subr.bf16.mxu0 0
      %804 = vmatpush1.bf16.msra.mxu0 0
      %805 = vmatprep.subr.bf16.mxu0 0
      %806 = vmatpush1.bf16.msra.mxu0 0
      %807 = vmatprep.subr.bf16.mxu0 0
      %808 = vmatpush1.bf16.msra.mxu0 0
      %809 = vmatprep.subr.bf16.mxu0 0
      %810 = vmatpush1.bf16.msra.mxu0 0
      %811 = vmatprep.mubr.bf16.mxu0 0
      %812 = vmatmul.mubr.bf16.gmra.mrb[0].mxu0 %v279
      %v813 = vpop.f32.mrb[0].mxu0
      %v814 = vpop.f32.mrb[0].mxu0
      %v815 = vpop.f32.mrb[0].mxu0
      %v816 = vadd.f32 0.0, %v815
      %v817 = vpop.f32.mrb[0].mxu0
      %818 = vmatprep.mubr.bf16.mxu0 0
      %819 = vmatmul.mubr.bf16.gmra.mrb[0].mxu0 %v280
      %v820 = vpop.f32.mrb[0].mxu0
      %v821 = vadd.f32 0.0, %v820
      %v822 = vpop.f32.mrb[0].mxu0
      %v823 = vpop.f32.mrb[0].mxu0
      %v824 = vadd.f32 0.0, %v823
      %v825 = vpop.f32.mrb[0].mxu0
      %826 = vmatprep.mubr.bf16.mxu0 0
      %827 = vmatmul.mubr.bf16.gmra.mrb[0].mxu0 %v281
      %v828 = vpop.f32.mrb[0].mxu0
      %v829 = vadd.f32 0.0, %v828
      %v830 = vpop.f32.mrb[0].mxu0
      %v831 = vpop.f32.mrb[0].mxu0
      %v832 = vadd.f32 0.0, %v831
      %v833 = vpop.f32.mrb[0].mxu0
      %834 = vmatprep.mubr.bf16.mxu0 0
      %835 = vmatmul.mubr.bf16.gmra.mrb[0].mxu0 %v282
      %v836 = vpop.f32.mrb[0].mxu0
      %v837 = vadd.f32 0.0, %v836
      %v838 = vpop.f32.mrb[0].mxu0
      %v839 = vpop.f32.mrb[0].mxu0
      %v840 = vadd.f32 0.0, %v839
      %v841 = vpop.f32.mrb[0].mxu0
      %842 = vmatprep.mubr.bf16.mxu0 0
      %843 = vmatmul.mubr.bf16.gmra.mrb[0].mxu0 %v283
      %v844 = vpop.f32.mrb[0].mxu0
      %v845 = vpop.f32.mrb[0].mxu0
      %v846 = vpop.f32.mrb[0].mxu0
      %v847 = vpop.f32.mrb[0].mxu0
      %848 = vdwg.mxu0
      %v856 = vrot.slane %v816, 1
      %v857 = vrot.slane %v821, 1
      %v858 = vsel %vm548, %v856, %v857
      %v859 = vrot.slane %v824, 1
      %v860 = vsel %vm548, %v857, %v859
      %v861 = vrot.slane %v829, 1
      %v862 = vsel %vm548, %v859, %v861
      %v863 = vrot.slane %v832, 1
      %v864 = vsel %vm548, %v861, %v863
      %v865 = vrot.slane %v837, 1
      %v866 = vsel %vm548, %v863, %v865
      %v867 = vrot.slane %v840, 1
      %v868 = vsel %vm548, %v865, %v867
      %v875 = vadd.f32 %v708, %v858
      %v876 = vadd.f32 %v709, %v860
      %v877 = vadd.f32 %v710, %v862
      %v878 = vadd.f32 %v711, %v864
      %v879 = vadd.f32 %v712, %v866
      %v880 = vadd.f32 %v713, %v868
      %p881 = scmp.eq.s32.totalorder %s16, 0
      // Predicated region
      $region41: #{_lambda_.7} parent=39 // pred_check
        %p882 = pneg %p881
      $region42: #{_lambda_.7} parent=39 // pred_check_branch
        %884 = sbr.rel (%p882) target = $region44
      $region43: #{_lambda_.7} parent=39 // pred_region
        %885 = vst [vmem:[#allocation2] sm:$0xff] %v875
        %886 = vst [vmem:[#allocation2 + $0x8] sm:$0xff] %v876
        %887 = vst [vmem:[#allocation2 + $0x10] sm:$0xff] %v877
        %888 = vst [vmem:[#allocation2 + $0x18] sm:$0xff] %v878
        %889 = vst [vmem:[#allocation2 + $0x20] sm:$0xff] %v879
        %890 = vst [vmem:[#allocation2 + $0x28] sm:$0xff] %v880
      $region44: #{_lambda_.7} parent=39 // pred_fallthru
        _
      %p891 = scmp.ne.s32.totalorder %s16, 0
      // Predicated region
      $region45: #{_lambda_.7} parent=39 // pred_check
        %p892 = pneg %p891
      $region46: #{_lambda_.7} parent=39 // pred_check_branch
        %894 = sbr.rel (%p892) target = $region48
      $region47: #{_lambda_.7} parent=39 // pred_region
        %v895 = vld [vmem:[#allocation2] sm:$0xff]
        %v896 = vld [vmem:[#allocation2 + $0x8] sm:$0xff]
        %v897 = vld [vmem:[#allocation2 + $0x10] sm:$0xff]
        %v898 = vld [vmem:[#allocation2 + $0x18] sm:$0xff]
        %v899 = vld [vmem:[#allocation2 + $0x20] sm:$0xff]
        %v900 = vld [vmem:[#allocation2 + $0x28] sm:$0xff]
        %v901 = vadd.f32 %v895, %v875
        %v902 = vadd.f32 %v896, %v876
        %v903 = vadd.f32 %v897, %v877
        %v904 = vadd.f32 %v898, %v878
        %v905 = vadd.f32 %v899, %v879
        %v906 = vadd.f32 %v900, %v880
        %907 = vst [vmem:[#allocation2] sm:$0xff] %v901
        %908 = vst [vmem:[#allocation2 + $0x8] sm:$0xff] %v902
        %909 = vst [vmem:[#allocation2 + $0x10] sm:$0xff] %v903
        %910 = vst [vmem:[#allocation2 + $0x18] sm:$0xff] %v904
        %911 = vst [vmem:[#allocation2 + $0x20] sm:$0xff] %v905
        %912 = vst [vmem:[#allocation2 + $0x28] sm:$0xff] %v906
      $region48: #{_lambda_.7} parent=39 // pred_fallthru
        _
      %p913 = scmp.eq.s32.totalorder %s16, 3
      // Predicated region
      $region49: #{_lambda_.7} parent=39 // pred_check
        %p914 = pneg %p913
      $region50: #{_lambda_.7} parent=39 // pred_check_branch
        %916 = sbr.rel (%p914) target = $region52
      $region51: #{_lambda_.7} parent=39 // pred_region
        %v917 = vld [vmem:[#allocation2] sm:$0xff]
        %v918 = vld [vmem:[#allocation2 + $0x8] sm:$0xff]
        %v919 = vld [vmem:[#allocation2 + $0x10] sm:$0xff]
        %v920 = vld [vmem:[#allocation2 + $0x18] sm:$0xff]
        %v921 = vld [vmem:[#allocation2 + $0x20] sm:$0xff]
        %v922 = vld [vmem:[#allocation2 + $0x28] sm:$0xff]
        %v923 = vld [vmem:[%s4] sm:$0xff]
        %v924 = vld [vmem:[%s4 + $0x8] sm:$0xff]
        %v925 = vld [vmem:[%s4 + $0x10] sm:$0xff]
        %v926 = vld [vmem:[%s4 + $0x18] sm:$0xff]
        %v927 = vld [vmem:[%s4 + $0x20] sm:$0xff]
        %v928 = vld [vmem:[%s4 + $0x28] sm:$0xff]
        %930 = vset.pattern.permute.xlu0 0
        %931 = vperm.xlu0 %930, %v923
        %v932 = vpop.permute.xlu0 %931
        %935 = vset.pattern.permute.xlu0 0
        %936 = vperm.xlu0 %935, %v924
        %v937 = vpop.permute.xlu0 %936
        %940 = vset.pattern.permute.xlu0 0
        %941 = vperm.xlu0 %940, %v925
        %v942 = vpop.permute.xlu0 %941
        %945 = vset.pattern.permute.xlu0 0
        %946 = vperm.xlu0 %945, %v926
        %v947 = vpop.permute.xlu0 %946
        %950 = vset.pattern.permute.xlu0 0
        %951 = vperm.xlu0 %950, %v927
        %v952 = vpop.permute.xlu0 %951
        %955 = vset.pattern.permute.xlu0 0
        %956 = vperm.xlu0 %955, %v928
        %v957 = vpop.permute.xlu0 %956
        %v959 = vmul.f32 %v917, %v932
        %v960 = vmul.f32 %v918, %v937
        %v961 = vmul.f32 %v919, %v942
        %v962 = vmul.f32 %v920, %v947
        %v963 = vmul.f32 %v921, %v952
        %v964 = vmul.f32 %v922, %v957
        %v965 = vadd.f32 %v959, %v960
        %v966 = vadd.f32 %v965, %v961
        %v967 = vadd.f32 %v966, %v962
        %v968 = vadd.f32 %v967, %v963
        %v969 = vadd.f32 %v968, %v964
        %v970 = vrot.slane %v969, 4
        %v971 = vadd.f32 %v969, %v970
        %v972 = vrot.slane %v971, 2
        %v973 = vadd.f32 %v971, %v972
        %v974 = vrot.slane %v973, 1
        %v975 = vadd.f32 %v973, %v974
        %v976 = vmul.f32 %v975, 0.125
        %v977 = vsub.f32 %v917, %v976
        %v978 = vsub.f32 %v918, %v976
        %v979 = vsub.f32 %v919, %v976
        %v980 = vsub.f32 %v920, %v976
        %v981 = vsub.f32 %v921, %v976
        %v982 = vsub.f32 %v922, %v976
        %v983 = vmul.f32 %v977, %v932
        %v984 = vmul.f32 %v978, %v937
        %v985 = vmul.f32 %v979, %v942
        %v986 = vmul.f32 %v980, %v947
        %v987 = vmul.f32 %v981, %v952
        %v988 = vmul.f32 %v982, %v957
        %v989 = vmul.f32 %v983, %v983
        %v990 = vmul.f32 %v984, %v984
        %v991 = vmul.f32 %v985, %v985
        %v992 = vmul.f32 %v986, %v986
        %v993 = vmul.f32 %v987, %v987
        %v994 = vmul.f32 %v988, %v988
        %v995 = vadd.f32 %v989, %v990
        %v996 = vadd.f32 %v995, %v991
        %v997 = vadd.f32 %v996, %v992
        %v998 = vadd.f32 %v997, %v993
        %v999 = vadd.f32 %v998, %v994
        %v1000 = vrot.slane %v999, 4
        %v1001 = vadd.f32 %v999, %v1000
        %v1002 = vrot.slane %v1001, 2
        %v1003 = vadd.f32 %v1001, %v1002
        %v1004 = vrot.slane %v1003, 1
        %v1005 = vadd.f32 %v1003, %v1004
        %v1006 = vmul.f32 %v1005, 0.125
        %v1007 = vadd.f32 %v1006, 1e-05
        %v1008 = vrsqrt.pop %v1007
        %v1009 = vmul.f32 %v977, %v1008
        %v1010 = vmul.f32 %v978, %v1008
        %v1011 = vmul.f32 %v979, %v1008
        %v1012 = vmul.f32 %v980, %v1008
        %v1013 = vmul.f32 %v981, %v1008
        %v1014 = vmul.f32 %v982, %v1008
        %v1015 = vld [vmem:[%s2] sm:$0x1]
        %v1017 = vlaneseq
        %v1018 = vshrl.u32 %v1017, 7
        %v1019 = vsub.s32 0, %v1018
        %v1020 = vrot.slane %v1015, %v1019
        %v1022 = vmul.f32 %v1009, %v1020
        %v1023 = vmul.f32 %v1010, %v1020
        %v1024 = vmul.f32 %v1011, %v1020
        %v1025 = vmul.f32 %v1012, %v1020
        %v1026 = vmul.f32 %v1013, %v1020
        %v1027 = vmul.f32 %v1014, %v1020
        %v1028 = vld [vmem:[%s3] sm:$0x1]
        %v1030 = vlaneseq
        %v1031 = vshrl.u32 %v1030, 7
        %v1032 = vsub.s32 0, %v1031
        %v1033 = vrot.slane %v1028, %v1032
        %v1035 = vadd.f32 %v1022, %v1033
        %v1036 = vadd.f32 %v1023, %v1033
        %v1037 = vadd.f32 %v1024, %v1033
        %v1038 = vadd.f32 %v1025, %v1033
        %v1039 = vadd.f32 %v1026, %v1033
        %v1040 = vadd.f32 %v1027, %v1033
        %v1041 = vmax.f32 %v1035, 0.0
        %v1042 = vmax.f32 %v1036, 0.0
        %v1043 = vmax.f32 %v1037, 0.0
        %v1044 = vmax.f32 %v1038, 0.0
        %v1045 = vmax.f32 %v1039, 0.0
        %v1046 = vmax.f32 %v1040, 0.0
        %v1047 = vpack.c.bf16 %v1042, %v1041
        %v1048 = vpack.c.bf16 %v1044, %v1043
        %v1049 = vpack.c.bf16 %v1046, %v1045
        %v1053 = vunpack.c.l.b16 %v1047
        %v1054 = vunpack.c.h.b16 %v1047
        %v1055 = vunpack.c.l.b16 %v1048
        %v1056 = vunpack.c.h.b16 %v1048
        %v1057 = vunpack.c.l.b16 %v1049
        %v1058 = vunpack.c.h.b16 %v1049
        %v1059 = vpack.c.b16 %v1053, %v1053
        %v1060 = vpack.c.b16 %v1054, %v1054
        %v1061 = vpack.c.b16 %v1055, %v1055
        %v1062 = vpack.c.b16 %v1056, %v1056
        %v1063 = vpack.c.b16 %v1057, %v1057
        %v1064 = vpack.c.b16 %v1058, %v1058
        %1071 = vst [vmem:[%s5] sm:$0xf] %v1059
        %1072 = vst [vmem:[%s5 + $0x4] sm:$0xf] %v1060
        %1073 = vst [vmem:[%s5 + $0x8] sm:$0xf] %v1061
        %1074 = vst [vmem:[%s5 + $0xc] sm:$0xf] %v1062
        %1075 = vst [vmem:[%s5 + $0x10] sm:$0xf] %v1063
        %1076 = vst [vmem:[%s5 + $0x14] sm:$0xf] %v1064
      $region52: #{_lambda_.7} parent=39 // pred_fallthru
        _
      // Predicated region
      $region53: #{_lambda_.7} parent=39 // pred_check
        %p1077 = pneg %p144
      $region54: #{_lambda_.7} parent=39 // pred_check_branch
        %1079 = sbr.rel (%p1077) target = $region56
      $region55: #{_lambda_.7} parent=39 // pred_region
        _
      $region56: #{_lambda_.7} parent=39 // pred_fallthru
        _
      // Predicated region
      $region57: #{_lambda_.7} parent=39 // pred_check
        %p1080 = pneg %p144
      $region58: #{_lambda_.7} parent=39 // pred_check_branch
        %1082 = sbr.rel (%p1080) target = $region60
      $region59: #{_lambda_.7} parent=39 // pred_region
        _
      $region60: #{_lambda_.7} parent=39 // pred_fallthru
        _
    $region40: #{_lambda_.7} parent=5 // pred_fallthru
      _
    %p1083 = scmp.le.s32.totalorder 2, %s11
    // Predicated region
    $region61: #{_lambda_.7} parent=5 // pred_check
      %p1084 = pneg %p1083
    $region62: #{_lambda_.7} parent=5 // pred_check_branch
      %1086 = sbr.rel (%p1084) target = $region64
    $region63: #{_lambda_.7} parent=5 // pred_region
      %s1087 = ssub.s32 %s11, 2
    $region64: #{_lambda_.7} parent=5 // pred_fallthru
      _
  $region6: #{_lambda_.7} parent=0 // loop_footer
    %s15 = sadd.s32 1, %s11
  $region7: #{_lambda_.7} parent=0 // loop_footer_branch
    %10 = sbr.rel target = $region3
  $region8: #{_lambda_.7} parent=0 // loop_exit
    _

// kernel: _lambda_.9
$region0: #{_lambda_.9}
  #allocation0 [shape = 'u32[]', space=smem, size = 0x4, offset = 0x4, fixed_abs, tag = 'smem constant byte address 0x4 - core index']
  #allocation1 [shape = 'u32[144,128]{1,0:T(1,128)}', space=vmem, size = 0x12000, scoped, tag = 'internal scratch']
  %s0 = inlined_call_operand.vmem [shape: bf16[2,128], index: 0, kind: input, shape index: {}]
  %s1 = inlined_call_operand.vmem [shape: bf16[128,128], index: 1, kind: input, shape index: {}]
  %s2 = inlined_call_operand.vmem [shape: f32[1,128], index: 2, kind: input, shape index: {}]
  %s3 = inlined_call_operand.hbm [shape: f32[2,128], index: 3, kind: output, shape index: {}]
  %s4 = sld [smem:[#allocation0]]
  $region22: #{_lambda_.9} parent=0
    _
  %s6 = ssub.s32 1, %s4
  %s7 = scalar_select 0, %s6, %s4
  $region1: #{_lambda_.9} parent=0
    #allocation2 [shape = 'u8[1024]{0}', space=vmem, size = 0x400, scoped, tag = 'output window, operand 0, single buffered']
    #allocation3 [shape = 's32[1]{0}', space=sflag, size = 0x4, scoped, tag = 'scoped memory for _lambda_.9']
    %8 = vsyncpa [#allocation3], 0
    // Predicated region
    $region2: #{_lambda_.9} parent=1 // pred_check
      _
    $region3: #{_lambda_.9} parent=1 // pred_check_branch
      %10 = sbr.rel (0) target = $region5
    $region4: #{_lambda_.9} parent=1 // pred_region
      _
    $region5: #{_lambda_.9} parent=1 // pred_fallthru
      _
    // Predicated region
    $region6: #{_lambda_.9} parent=1 // pred_check
      _
    $region7: #{_lambda_.9} parent=1 // pred_check_branch
      %12 = sbr.rel (0) target = $region9
    $region8: #{_lambda_.9} parent=1 // pred_region
      _
    $region9: #{_lambda_.9} parent=1 // pred_fallthru
      _
    // Predicated region
    $region10: #{_lambda_.9} parent=1 // pred_check
      _
    $region11: #{_lambda_.9} parent=1 // pred_check_branch
      %14 = sbr.rel (0) target = $region13
    $region12: #{_lambda_.9} parent=1 // pred_region
      _
    $region13: #{_lambda_.9} parent=1 // pred_fallthru
      _
    %v16 = vld [vmem:[%s0] sm:$0x1]
    %v17 = vld [vmem:[%s1] sm:$0xf]
    %v18 = vld [vmem:[%s1 + $0x4] sm:$0xf]
    %v19 = vld [vmem:[%s1 + $0x8] sm:$0xf]
    %v20 = vld [vmem:[%s1 + $0xc] sm:$0xf]
    %v21 = vld [vmem:[%s1 + $0x10] sm:$0xf]
    %v22 = vld [vmem:[%s1 + $0x14] sm:$0xf]
    %v23 = vld [vmem:[%s1 + $0x18] sm:$0xf]
    %v24 = vld [vmem:[%s1 + $0x1c] sm:$0xf]
    %v25 = vld [vmem:[%s1 + $0x20] sm:$0xf]
    %v26 = vld [vmem:[%s1 + $0x24] sm:$0xf]
    %v27 = vld [vmem:[%s1 + $0x28] sm:$0xf]
    %v28 = vld [vmem:[%s1 + $0x2c] sm:$0xf]
    %v29 = vld [vmem:[%s1 + $0x30] sm:$0xf]
    %v30 = vld [vmem:[%s1 + $0x34] sm:$0xf]
    %v31 = vld [vmem:[%s1 + $0x38] sm:$0xf]
    %v32 = vld [vmem:[%s1 + $0x3c] sm:$0xf]
    %v33 = vld [vmem:[%s2] sm:$0x1]
    %v35 = vlaneseq
    %v36 = vshrl.u32 %v35, 7
    %v37 = vsub.s32 0, %v36
    %v38 = vrot.slane %v33, %v37
    %v56 = vunpack.c.l.b16 %v17
    %v57 = vunpack.c.l.b16 %v18
    %v58 = vunpack.c.l.b16 %v19
    %v59 = vunpack.c.l.b16 %v20
    %v60 = vunpack.c.l.b16 %v21
    %v61 = vunpack.c.l.b16 %v22
    %v62 = vunpack.c.l.b16 %v23
    %v63 = vunpack.c.l.b16 %v24
    %v64 = vunpack.c.l.b16 %v25
    %v65 = vunpack.c.l.b16 %v26
    %v66 = vunpack.c.l.b16 %v27
    %v67 = vunpack.c.l.b16 %v28
    %v68 = vunpack.c.l.b16 %v29
    %v69 = vunpack.c.l.b16 %v30
    %v70 = vunpack.c.l.b16 %v31
    %v71 = vunpack.c.l.b16 %v32
    %v72 = vpack.c.b16 %v57, %v56
    %v73 = vpack.c.b16 %v59, %v58
    %v74 = vpack.c.b16 %v61, %v60
    %v75 = vpack.c.b16 %v63, %v62
    %v76 = vpack.c.b16 %v65, %v64
    %v77 = vpack.c.b16 %v67, %v66
    %v78 = vpack.c.b16 %v69, %v68
    %v79 = vpack.c.b16 %v71, %v70
    %88 = vmatprep.subr.bf16.mxu0 0
    %89 = vmatpush1.bf16.msra.mxu0 %v72
    %90 = vmatprep.subr.bf16.mxu0 0
    %91 = vmatpush1.bf16.msra.mxu0 %v73
    %92 = vmatprep.subr.bf16.mxu0 0
    %93 = vmatpush1.bf16.msra.mxu0 %v74
    %94 = vmatprep.subr.bf16.mxu0 0
    %95 = vmatpush1.bf16.msra.mxu0 %v75
    %96 = vmatprep.subr.bf16.mxu0 0
    %97 = vmatpush1.bf16.msra.mxu0 %v76
    %98 = vmatprep.subr.bf16.mxu0 0
    %99 = vmatpush1.bf16.msra.mxu0 %v77
    %100 = vmatprep.subr.bf16.mxu0 0
    %101 = vmatpush1.bf16.msra.mxu0 %v78
    %102 = vmatprep.subr.bf16.mxu0 0
    %103 = vmatpush1.bf16.msra.mxu0 %v79
    %104 = vmatprep.subr.bf16.mxu0 0
    %105 = vmatpush1.bf16.msra.mxu0 0
    %106 = vmatprep.subr.bf16.mxu0 0
    %107 = vmatpush1.bf16.msra.mxu0 0
    %108 = vmatprep.subr.bf16.mxu0 0
    %109 = vmatpush1.bf16.msra.mxu0 0
    %110 = vmatprep.subr.bf16.mxu0 0
    %111 = vmatpush1.bf16.msra.mxu0 0
    %112 = vmatprep.subr.bf16.mxu0 0
    %113 = vmatpush1.bf16.msra.mxu0 0
    %114 = vmatprep.subr.bf16.mxu0 0
    %115 = vmatpush1.bf16.msra.mxu0 0
    %116 = vmatprep.subr.bf16.mxu0 0
    %117 = vmatpush1.bf16.msra.mxu0 0
    %118 = vmatprep.subr.bf16.mxu0 0
    %119 = vmatpush1.bf16.msra.mxu0 0
    %120 = vmatprep.mubr.bf16.mxu0 0
    %121 = vmatmul.mubr.bf16.gmra.mrb[0].mxu0 %v16
    %v122 = vpop.f32.mrb[0].mxu0
    %v123 = vadd.f32 %v38, %v122
    %v124 = vpop.f32.mrb[0].mxu0
    %v125 = vpop.f32.mrb[0].mxu0
    %v126 = vpop.f32.mrb[0].mxu0
    %127 = vdwg.mxu0
    %128 = vst [vmem:[#allocation2] sm:$0x3] %v123
    // Predicated region
    $region14: #{_lambda_.9} parent=1 // pred_check
      _
    $region15: #{_lambda_.9} parent=1 // pred_check_branch
      %130 = sbr.rel (0) target = $region17
    $region16: #{_lambda_.9} parent=1 // pred_region
      %s132 = ssub.s32 32, 32
      %133 = vsyncadd [#allocation3], %s132
      %s135 = sshll.u32 [#allocation2], 4
      %s136 = int_to_ptr.vmem [resolvable:$true] %s135
      %138 = dma.vmem_to_hbm [thread:$0]  %s136, 32, %s3, [#allocation3]
    $region17: #{_lambda_.9} parent=1 // pred_fallthru
      _
    // Predicated region
    $region18: #{_lambda_.9} parent=1 // pred_check
      _
    $region19: #{_lambda_.9} parent=1 // pred_check_branch
      %140 = sbr.rel (0) target = $region21
    $region20: #{_lambda_.9} parent=1 // pred_region
      %141 = dma.done [#allocation3], 32
    $region21: #{_lambda_.9} parent=1 // pred_fallthru
      _
    %142 = vsyncpa [#allocation3], 1

// kernel: _lambda_.8
$region0: #{_lambda_.8}
  #allocation0 [shape = 'u32[]', space=smem, size = 0x4, offset = 0x4, fixed_abs, tag = 'smem constant byte address 0x4 - core index']
  #allocation1 [shape = 'u32[144,128]{1,0:T(1,128)}', space=vmem, size = 0x12000, scoped, tag = 'internal scratch']
  #allocation2 [shape = 'f32[32,128]{1,0:T(8,128)}', space=vmem, size = 0x4000, scoped, tag = 'scratch operand']
  %s0 = inlined_call_operand.vmem [shape: bf16[4,56,128], index: 0, kind: input, shape index: {}]
  %s1 = inlined_call_operand.vmem [shape: bf16[16,128,128], index: 1, kind: input, shape index: {}]
  %s2 = inlined_call_operand.vmem [shape: f32[1,128], index: 2, kind: input, shape index: {}]
  %s3 = inlined_call_operand.vmem [shape: f32[1,128], index: 3, kind: input, shape index: {}]
  %s4 = inlined_call_operand.vmem [shape: f32[32,1], index: 4, kind: input, shape index: {}]
  %s5 = inlined_call_operand.vmem [shape: bf16[32,128], index: 5, kind: output, shape index: {}]
  %s6 = sld [smem:[#allocation0]]
  $region65: #{_lambda_.8} parent=0
    _
  %s8 = ssub.s32 1, %s6
  %s9 = scalar_select 0, %s8, %s6
  loop: start=0, step=1, limit=6
  $region2: #{_lambda_.8} parent=0 // loop_pre_header
    _
  $region3: #{_lambda_.8} parent=0 // loop_header
    %s11 = sphi 0, %s15
    %p12 = scmp.ge.s32.totalorder %s11, 6
    %s21 = sphi 0, %s23
    %s24 = sphi 0, %s21
    %s25 = sphi 0, %s24
    %s41 = sphi 0, %s25
    %s47 = sphi 0, %s49
    %s50 = sphi 0, %s47
    %s51 = sphi 0, %s50
    %s67 = sphi 0, %s51
    %s71 = sphi 0, %s71
    %s73 = sphi 0, %s71
    %s74 = sphi 0, %s73
    %s88 = sphi 0, %s74
    %s92 = sphi 0, %s92
    %s94 = sphi 0, %s92
    %s95 = sphi 0, %s94
    %s109 = sphi 0, %s95
    %s113 = sphi 0, %s113
    %s115 = sphi 0, %s113
    %s116 = sphi 0, %s115
    %s130 = sphi 0, %s116
    %s134 = sphi 0, %s134
    %s136 = sphi 0, %s134
    %s137 = sphi 0, %s136
    %s151 = sphi 0, %s137
  $region4: #{_lambda_.8} parent=0 // loop_header_branch
    %14 = sbr.rel (%p12) target = $region8
  $region5: #{_lambda_.8} parent=0 // loop_body
    %s16 = ssub.s32 %s11, 1
    %s17 = ssub.s32 %s11, 2
    %s18 = sadd.s32 %s11, 1
    %s19 = ssub.s32 %s11, %s18
    %p20 = scmp.eq.s32.totalorder %s19, 0
    %s22 = sadd.s32 %s21, 1
    %s23 = scalar_select %p20, %s21, %s22
    %p26 = pneg %p20
    %p27 = scmp.eq.s32.totalorder %s11, 3
    %p28 = por %p26, %p27
    %p29 = scmp.ne.s32.totalorder %s21, %s24
    %p30 = scmp.eq.s32.totalorder %s11, 0
    %p31 = por %p29, %p30
    %p32 = scmp.ne.s32.totalorder %s21, %s24
    %p33 = scmp.eq.s32.totalorder %s16, 3
    %p34 = por %p32, %p33
    %p35 = scmp.ne.s32.totalorder %s24, %s25
    %p36 = scmp.eq.s32.totalorder %s16, 0
    %p37 = por %p35, %p36
    %p38 = scmp.ne.s32.totalorder %s24, %s25
    %p39 = scmp.eq.s32.totalorder %s17, 3
    %p40 = por %p38, %p39
    %p42 = scmp.ne.s32.totalorder %s25, %s41
    %p43 = scmp.eq.s32.totalorder %s17, 0
    %p44 = por %p42, %p43
    %s45 = ssub.s32 %s11, %s18
    %p46 = scmp.eq.s32.totalorder %s45, 0
    %s48 = sadd.s32 %s47, 1
    %s49 = scalar_select %p46, %s47, %s48
    %p52 = pneg %p46
    %p53 = scmp.eq.s32.totalorder %s11, 3
    %p54 = por %p52, %p53
    %p55 = scmp.ne.s32.totalorder %s47, %s50
    %p56 = scmp.eq.s32.totalorder %s11, 0
    %p57 = por %p55, %p56
    %p58 = scmp.ne.s32.totalorder %s47, %s50
    %p59 = scmp.eq.s32.totalorder %s16, 3
    %p60 = por %p58, %p59
    %p61 = scmp.ne.s32.totalorder %s50, %s51
    %p62 = scmp.eq.s32.totalorder %s16, 0
    %p63 = por %p61, %p62
    %p64 = scmp.ne.s32.totalorder %s50, %s51
    %p65 = scmp.eq.s32.totalorder %s17, 3
    %p66 = por %p64, %p65
    %p68 = scmp.ne.s32.totalorder %s51, %s67
    %p69 = scmp.eq.s32.totalorder %s17, 0
    %p70 = por %p68, %p69
    %s72 = sadd.s32 %s71, 1
    %p75 = scmp.eq.s32.totalorder %s11, 3
    %p76 = scmp.ne.s32.totalorder %s71, %s73
    %p77 = scmp.eq.s32.totalorder %s11, 0
    %p78 = por %p76, %p77
    %p79 = scmp.ne.s32.totalorder %s71, %s73
    %p80 = scmp.eq.s32.totalorder %s16, 3
    %p81 = por %p79, %p80
    %p82 = scmp.ne.s32.totalorder %s73, %s74
    %p83 = scmp.eq.s32.totalorder %s16, 0
    %p84 = por %p82, %p83
    %p85 = scmp.ne.s32.totalorder %s73, %s74
    %p86 = scmp.eq.s32.totalorder %s17, 3
    %p87 = por %p85, %p86
    %p89 = scmp.ne.s32.totalorder %s74, %s88
    %p90 = scmp.eq.s32.totalorder %s17, 0
    %p91 = por %p89, %p90
    %s93 = sadd.s32 %s92, 1
    %p96 = scmp.eq.s32.totalorder %s11, 3
    %p97 = scmp.ne.s32.totalorder %s92, %s94
    %p98 = scmp.eq.s32.totalorder %s11, 0
    %p99 = por %p97, %p98
    %p100 = scmp.ne.s32.totalorder %s92, %s94
    %p101 = scmp.eq.s32.totalorder %s16, 3
    %p102 = por %p100, %p101
    %p103 = scmp.ne.s32.totalorder %s94, %s95
    %p104 = scmp.eq.s32.totalorder %s16, 0
    %p105 = por %p103, %p104
    %p106 = scmp.ne.s32.totalorder %s94, %s95
    %p107 = scmp.eq.s32.totalorder %s17, 3
    %p108 = por %p106, %p107
    %p110 = scmp.ne.s32.totalorder %s95, %s109
    %p111 = scmp.eq.s32.totalorder %s17, 0
    %p112 = por %p110, %p111
    %s114 = sadd.s32 %s113, 1
    %p117 = scmp.eq.s32.totalorder %s11, 3
    %p118 = scmp.ne.s32.totalorder %s113, %s115
    %p119 = scmp.eq.s32.totalorder %s11, 0
    %p120 = por %p118, %p119
    %p121 = scmp.ne.s32.totalorder %s113, %s115
    %p122 = scmp.eq.s32.totalorder %s16, 3
    %p123 = por %p121, %p122
    %p124 = scmp.ne.s32.totalorder %s115, %s116
    %p125 = scmp.eq.s32.totalorder %s16, 0
    %p126 = por %p124, %p125
    %p127 = scmp.ne.s32.totalorder %s115, %s116
    %p128 = scmp.eq.s32.totalorder %s17, 3
    %p129 = por %p127, %p128
    %p131 = scmp.ne.s32.totalorder %s116, %s130
    %p132 = scmp.eq.s32.totalorder %s17, 0
    %p133 = por %p131, %p132
    %s135 = sadd.s32 %s134, 1
    %p138 = scmp.eq.s32.totalorder %s11, 3
    %p139 = scmp.ne.s32.totalorder %s134, %s136
    %p140 = scmp.eq.s32.totalorder %s11, 0
    %p141 = por %p139, %p140
    %p142 = scmp.ne.s32.totalorder %s134, %s136
    %p143 = scmp.eq.s32.totalorder %s16, 3
    %p144 = por %p142, %p143
    %p145 = scmp.ne.s32.totalorder %s136, %s137
    %p146 = scmp.eq.s32.totalorder %s16, 0
    %p147 = por %p145, %p146
    %p148 = scmp.ne.s32.totalorder %s136, %s137
    %p149 = scmp.eq.s32.totalorder %s17, 3
    %p150 = por %p148, %p149
    %p152 = scmp.ne.s32.totalorder %s137, %s151
    %p153 = scmp.eq.s32.totalorder %s17, 0
    %p154 = por %p152, %p153
    %p155 = scmp.le.s32.totalorder 1, %s11
    %p156 = scmp.lt.s32.totalorder %s11, 5
    %p157 = pnand %p155, %p156
    %p158 = pneg %p157
    // Predicated region
    $region9: #{_lambda_.8} parent=5 // pred_check
      _
    $region10: #{_lambda_.8} parent=5 // pred_check_branch
      %160 = sbr.rel (%p157) target = $region12
    $region11: #{_lambda_.8} parent=5 // pred_region
      %s161 = ssub.s32 %s11, 1
      // Predicated region
      $region13: #{_lambda_.8} parent=11 // pred_check
        %p162 = pneg %p84
      $region14: #{_lambda_.8} parent=11 // pred_check_branch
        %164 = sbr.rel (%p162) target = $region16
      $region15: #{_lambda_.8} parent=11 // pred_region
        _
      $region16: #{_lambda_.8} parent=11 // pred_fallthru
        _
      // Predicated region
      $region17: #{_lambda_.8} parent=11 // pred_check
        %p165 = pneg %p105
      $region18: #{_lambda_.8} parent=11 // pred_check_branch
        %167 = sbr.rel (%p165) target = $region20
      $region19: #{_lambda_.8} parent=11 // pred_region
        _
      $region20: #{_lambda_.8} parent=11 // pred_fallthru
        _
      // Predicated region
      $region21: #{_lambda_.8} parent=11 // pred_check
        %p168 = pneg %p126
      $region22: #{_lambda_.8} parent=11 // pred_check_branch
        %170 = sbr.rel (%p168) target = $region24
      $region23: #{_lambda_.8} parent=11 // pred_region
        _
      $region24: #{_lambda_.8} parent=11 // pred_fallthru
        _
    $region12: #{_lambda_.8} parent=5 // pred_fallthru
      _
    %p171 = scmp.lt.s32.totalorder %s11, 4
    // Predicated region
    $region25: #{_lambda_.8} parent=5 // pred_check
      %p172 = pneg %p171
    $region26: #{_lambda_.8} parent=5 // pred_check_branch
      %174 = sbr.rel (%p172) target = $region28
    $region27: #{_lambda_.8} parent=5 // pred_region
      // Predicated region
      $region29: #{_lambda_.8} parent=27 // pred_check
        %p175 = pneg %p31
      $region30: #{_lambda_.8} parent=27 // pred_check_branch
        %177 = sbr.rel (%p175) target = $region32
      $region31: #{_lambda_.8} parent=27 // pred_region
        %p178 = scmp.lt.s32.totalorder %s11, 3
        %s179 = scalar_select %p178, %s11, 3
        %s180 = smul.addr %s179, 7
        %s181 = smul.addr %s180, 4
        %s182 = scalar_lea.vmem %s0, %s181
      $region32: #{_lambda_.8} parent=27 // pred_fallthru
        _
      // Predicated region
      $region33: #{_lambda_.8} parent=27 // pred_check
        %p183 = pneg %p57
      $region34: #{_lambda_.8} parent=27 // pred_check_branch
        %185 = sbr.rel (%p183) target = $region36
      $region35: #{_lambda_.8} parent=27 // pred_region
        %s186 = smul.u32 4, %s11
        %p187 = scmp.lt.s32.totalorder %s186, 15
        %s188 = scalar_select %p187, %s186, 15
        %s189 = smul.addr %s188, 16
        %s190 = smul.addr %s189, 4
        %s191 = scalar_lea.vmem %s1, %s190
        %s192 = smul.u32 4, %s11
      $region36: #{_lambda_.8} parent=27 // pred_fallthru
        _
    $region28: #{_lambda_.8} parent=5 // pred_fallthru
      _
    %p193 = scmp.le.s32.totalorder 1, %s11
    %p194 = scmp.lt.s32.totalorder %s11, 5
    %p195 = pnand %p193, %p194
    %p196 = pneg %p195
    // Predicated region
    $region37: #{_lambda_.8} parent=5 // pred_check
      _
    $region38: #{_lambda_.8} parent=5 // pred_check_branch
      %198 = sbr.rel (%p195) target = $region40
    $region39: #{_lambda_.8} parent=5 // pred_region
      %s199 = ssub.s32 %s11, 1
      %p200 = scmp.lt.s32.totalorder %s16, 3
      %s201 = scalar_select %p200, %s16, 3
      %s202 = smul.addr %s201, 7
      %s203 = smul.addr %s202, 4
      %s204 = scalar_lea.vmem %s0, %s203
      %p205 = pneg %p37
      %p206 = pneg %p34
      %s207 = smul.u32 4, %s16
      %p208 = scmp.lt.s32.totalorder %s207, 15
      %s209 = scalar_select %p208, %s207, 15
      %s210 = smul.addr %s209, 16
      %s211 = smul.addr %s210, 4
      %s212 = scalar_lea.vmem %s1, %s211
      %p213 = pneg %p63
      %p214 = pneg %p60
      %p215 = pneg %p84
      %p216 = pneg %p81
      %p217 = pneg %p105
      %p218 = pneg %p102
      %p219 = pneg %p126
      %p220 = pneg %p123
      %p221 = pneg %p147
      %p222 = pneg %p144
      %p223 = scmp.lt.s32.totalorder %s16, 3
      %s224 = scalar_select %p223, %s16, 3
      %s225 = smul.addr %s224, 7
      %s226 = smul.addr %s225, 4
      %s227 = scalar_lea.vmem %s0, %s226
      %s228 = smul.u32 4, %s16
      %p229 = scmp.lt.s32.totalorder %s228, 15
      %s230 = scalar_select %p229, %s228, 15
      %s231 = smul.addr %s230, 16
      %s232 = smul.addr %s231, 4
      %s233 = scalar_lea.vmem %s1, %s232
      %s234 = smul.u32 4, %s16
      %v236 = vld [vmem:[%s227] sm:$0xf]
      %v237 = vld [vmem:[%s227 + $0x4] sm:$0xf]
      %v238 = vld [vmem:[%s227 + $0x8] sm:$0xf]
      %v239 = vld [vmem:[%s227 + $0xc] sm:$0xf]
      %v240 = vld [vmem:[%s227 + $0x10] sm:$0xf]
      %v241 = vld [vmem:[%s227 + $0x14] sm:$0xf]
      %v242 = vld [vmem:[%s227 + $0x18] sm:$0xf]
      %v243 = vld [vmem:[%s233] sm:$0xf]
      %v244 = vld [vmem:[%s233 + $0x4] sm:$0xf]
      %v245 = vld [vmem:[%s233 + $0x8] sm:$0xf]
      %v246 = vld [vmem:[%s233 + $0xc] sm:$0xf]
      %v247 = vld [vmem:[%s233 + $0x10] sm:$0xf]
      %v248 = vld [vmem:[%s233 + $0x14] sm:$0xf]
      %v249 = vld [vmem:[%s233 + $0x18] sm:$0xf]
      %v250 = vld [vmem:[%s233 + $0x1c] sm:$0xf]
      %v251 = vld [vmem:[%s233 + $0x20] sm:$0xf]
      %v252 = vld [vmem:[%s233 + $0x24] sm:$0xf]
      %v253 = vld [vmem:[%s233 + $0x28] sm:$0xf]
      %v254 = vld [vmem:[%s233 + $0x2c] sm:$0xf]
      %v255 = vld [vmem:[%s233 + $0x30] sm:$0xf]
      %v256 = vld [vmem:[%s233 + $0x34] sm:$0xf]
      %v257 = vld [vmem:[%s233 + $0x38] sm:$0xf]
      %v258 = vld [vmem:[%s233 + $0x3c] sm:$0xf]
      %v266 = vunpack.c.l.b16 %v236
      %v267 = vunpack.c.l.b16 %v237
      %v268 = vunpack.c.l.b16 %v238
      %v269 = vunpack.c.l.b16 %v239
      %v270 = vunpack.c.l.b16 %v240
      %v271 = vunpack.c.l.b16 %v241
      %v272 = vunpack.c.l.b16 %v242
      %v273 = vpack.c.b16 %v267, %v266
      %v274 = vpack.c.b16 %v269, %v268
      %v275 = vpack.c.b16 %v271, %v270
      %v276 = vpack.c.b16 %v272, %v272
      %v297 = vunpack.c.l.b16 %v243
      %v298 = vunpack.c.l.b16 %v244
      %v299 = vunpack.c.l.b16 %v245
      %v300 = vunpack.c.l.b16 %v246
      %v301 = vunpack.c.l.b16 %v247
      %v302 = vunpack.c.l.b16 %v248
      %v303 = vunpack.c.l.b16 %v249
      %v304 = vunpack.c.l.b16 %v250
      %v305 = vunpack.c.l.b16 %v251
      %v306 = vunpack.c.l.b16 %v252
      %v307 = vunpack.c.l.b16 %v253
      %v308 = vunpack.c.l.b16 %v254
      %v309 = vunpack.c.l.b16 %v255
      %v310 = vunpack.c.l.b16 %v256
      %v311 = vunpack.c.l.b16 %v257
      %v312 = vunpack.c.l.b16 %v258
      %v313 = vpack.c.b16 %v298, %v297
      %v314 = vpack.c.b16 %v300, %v299
      %v315 = vpack.c.b16 %v302, %v301
      %v316 = vpack.c.b16 %v304, %v303
      %v317 = vpack.c.b16 %v306, %v305
      %v318 = vpack.c.b16 %v308, %v307
      %v319 = vpack.c.b16 %v310, %v309
      %v320 = vpack.c.b16 %v312, %v311
      %329 = vmatprep.subr.bf16.mxu0 0
      %330 = vmatpush1.bf16.msra.mxu0 %v313
      %331 = vmatprep.subr.bf16.mxu0 0
      %332 = vmatpush1.bf16.msra.mxu0 %v314
      %333 = vmatprep.subr.bf16.mxu0 0
      %334 = vmatpush1.bf16.msra.mxu0 %v315
      %335 = vmatprep.subr.bf16.mxu0 0
      %336 = vmatpush1.bf16.msra.mxu0 %v316
      %337 = vmatprep.subr.bf16.mxu0 0
      %338 = vmatpush1.bf16.msra.mxu0 %v317
      %339 = vmatprep.subr.bf16.mxu0 0
      %340 = vmatpush1.bf16.msra.mxu0 %v318
      %341 = vmatprep.subr.bf16.mxu0 0
      %342 = vmatpush1.bf16.msra.mxu0 %v319
      %343 = vmatprep.subr.bf16.mxu0 0
      %344 = vmatpush1.bf16.msra.mxu0 %v320
      %345 = vmatprep.subr.bf16.mxu0 0
      %346 = vmatpush1.bf16.msra.mxu0 0
      %347 = vmatprep.subr.bf16.mxu0 0
      %348 = vmatpush1.bf16.msra.mxu0 0
      %349 = vmatprep.subr.bf16.mxu0 0
      %350 = vmatpush1.bf16.msra.mxu0 0
      %351 = vmatprep.subr.bf16.mxu0 0
      %352 = vmatpush1.bf16.msra.mxu0 0
      %353 = vmatprep.subr.bf16.mxu0 0
      %354 = vmatpush1.bf16.msra.mxu0 0
      %355 = vmatprep.subr.bf16.mxu0 0
      %356 = vmatpush1.bf16.msra.mxu0 0
      %357 = vmatprep.subr.bf16.mxu0 0
      %358 = vmatpush1.bf16.msra.mxu0 0
      %359 = vmatprep.subr.bf16.mxu0 0
      %360 = vmatpush1.bf16.msra.mxu0 0
      %361 = vmatprep.mubr.bf16.mxu0 0
      %362 = vmatmul.mubr.bf16.gmra.mrb[0].mxu0 %v273
      %v363 = vpop.f32.mrb[0].mxu0
      %v364 = vadd.f32 0.0, %v363
      %v365 = vpop.f32.mrb[0].mxu0
      %v366 = vpop.f32.mrb[0].mxu0
      %v367 = vadd.f32 0.0, %v366
      %v368 = vpop.f32.mrb[0].mxu0
      %369 = vmatprep.mubr.bf16.mxu0 0
      %370 = vmatmul.mubr.bf16.gmra.mrb[0].mxu0 %v274
      %v371 = vpop.f32.mrb[0].mxu0
      %v372 = vadd.f32 0.0, %v371
      %v373 = vpop.f32.mrb[0].mxu0
      %v374 = vpop.f32.mrb[0].mxu0
      %v375 = vadd.f32 0.0, %v374
      %v376 = vpop.f32.mrb[0].mxu0
      %377 = vmatprep.mubr.bf16.mxu0 0
      %378 = vmatmul.mubr.bf16.gmra.mrb[0].mxu0 %v275
      %v379 = vpop.f32.mrb[0].mxu0
      %v380 = vpop.f32.mrb[0].mxu0
      %v381 = vpop.f32.mrb[0].mxu0
      %v382 = vpop.f32.mrb[0].mxu0
      %383 = vmatprep.mubr.bf16.mxu0 0
      %384 = vmatmul.mubr.bf16.gmra.mrb[0].mxu0 %v276
      %v385 = vpop.f32.mrb[0].mxu0
      %v386 = vpop.f32.mrb[0].mxu0
      %v387 = vpop.f32.mrb[0].mxu0
      %v388 = vpop.f32.mrb[0].mxu0
      %389 = vdwg.mxu0
      %s390 = scalar_lea.vmem %s233, 64
      %v391 = vld [vmem:[%s390] sm:$0xf]
      %v392 = vld [vmem:[%s390 + $0x4] sm:$0xf]
      %v393 = vld [vmem:[%s390 + $0x8] sm:$0xf]
      %v394 = vld [vmem:[%s390 + $0xc] sm:$0xf]
      %v395 = vld [vmem:[%s390 + $0x10] sm:$0xf]
      %v396 = vld [vmem:[%s390 + $0x14] sm:$0xf]
      %v397 = vld [vmem:[%s390 + $0x18] sm:$0xf]
      %v398 = vld [vmem:[%s390 + $0x1c] sm:$0xf]
      %v399 = vld [vmem:[%s390 + $0x20] sm:$0xf]
      %v400 = vld [vmem:[%s390 + $0x24] sm:$0xf]
      %v401 = vld [vmem:[%s390 + $0x28] sm:$0xf]
      %v402 = vld [vmem:[%s390 + $0x2c] sm:$0xf]
      %v403 = vld [vmem:[%s390 + $0x30] sm:$0xf]
      %v404 = vld [vmem:[%s390 + $0x34] sm:$0xf]
      %v405 = vld [vmem:[%s390 + $0x38] sm:$0xf]
      %v406 = vld [vmem:[%s390 + $0x3c] sm:$0xf]
      %v423 = vunpack.c.l.b16 %v391
      %v424 = vunpack.c.l.b16 %v392
      %v425 = vunpack.c.l.b16 %v393
      %v426 = vunpack.c.l.b16 %v394
      %v427 = vunpack.c.l.b16 %v395
      %v428 = vunpack.c.l.b16 %v396
      %v429 = vunpack.c.l.b16 %v397
      %v430 = vunpack.c.l.b16 %v398
      %v431 = vunpack.c.l.b16 %v399
      %v432 = vunpack.c.l.b16 %v400
      %v433 = vunpack.c.l.b16 %v401
      %v434 = vunpack.c.l.b16 %v402
      %v435 = vunpack.c.l.b16 %v403
      %v436 = vunpack.c.l.b16 %v404
      %v437 = vunpack.c.l.b16 %v405
      %v438 = vunpack.c.l.b16 %v406
      %v439 = vpack.c.b16 %v424, %v423
      %v440 = vpack.c.b16 %v426, %v425
      %v441 = vpack.c.b16 %v428, %v427
      %v442 = vpack.c.b16 %v430, %v429
      %v443 = vpack.c.b16 %v432, %v431
      %v444 = vpack.c.b16 %v434, %v433
      %v445 = vpack.c.b16 %v436, %v435
      %v446 = vpack.c.b16 %v438, %v437
      %455 = vmatprep.subr.bf16.mxu0 0
      %456 = vmatpush1.bf16.msra.mxu0 %v439
      %457 = vmatprep.subr.bf16.mxu0 0
      %458 = vmatpush1.bf16.msra.mxu0 %v440
      %459 = vmatprep.subr.bf16.mxu0 0
      %460 = vmatpush1.bf16.msra.mxu0 %v441
      %461 = vmatprep.subr.bf16.mxu0 0
      %462 = vmatpush1.bf16.msra.mxu0 %v442
      %463 = vmatprep.subr.bf16.mxu0 0
      %464 = vmatpush1.bf16.msra.mxu0 %v443
      %465 = vmatprep.subr.bf16.mxu0 0
      %466 = vmatpush1.bf16.msra.mxu0 %v444
      %467 = vmatprep.subr.bf16.mxu0 0
      %468 = vmatpush1.bf16.msra.mxu0 %v445
      %469 = vmatprep.subr.bf16.mxu0 0
      %470 = vmatpush1.bf16.msra.mxu0 %v446
      %471 = vmatprep.subr.bf16.mxu0 0
      %472 = vmatpush1.bf16.msra.mxu0 0
      %473 = vmatprep.subr.bf16.mxu0 0
      %474 = vmatpush1.bf16.msra.mxu0 0
      %475 = vmatprep.subr.bf16.mxu0 0
      %476 = vmatpush1.bf16.msra.mxu0 0
      %477 = vmatprep.subr.bf16.mxu0 0
      %478 = vmatpush1.bf16.msra.mxu0 0
      %479 = vmatprep.subr.bf16.mxu0 0
      %480 = vmatpush1.bf16.msra.mxu0 0
      %481 = vmatprep.subr.bf16.mxu0 0
      %482 = vmatpush1.bf16.msra.mxu0 0
      %483 = vmatprep.subr.bf16.mxu0 0
      %484 = vmatpush1.bf16.msra.mxu0 0
      %485 = vmatprep.subr.bf16.mxu0 0
      %486 = vmatpush1.bf16.msra.mxu0 0
      %487 = vmatprep.mubr.bf16.mxu0 0
      %488 = vmatmul.mubr.bf16.gmra.mrb[0].mxu0 %v273
      %v489 = vpop.f32.mrb[0].mxu0
      %v490 = vadd.f32 0.0, %v489
      %v491 = vpop.f32.mrb[0].mxu0
      %v492 = vpop.f32.mrb[0].mxu0
      %v493 = vadd.f32 0.0, %v492
      %v494 = vpop.f32.mrb[0].mxu0
      %495 = vmatprep.mubr.bf16.mxu0 0
      %496 = vmatmul.mubr.bf16.gmra.mrb[0].mxu0 %v274
      %v497 = vpop.f32.mrb[0].mxu0
      %v498 = vadd.f32 0.0, %v497
      %v499 = vpop.f32.mrb[0].mxu0
      %v500 = vpop.f32.mrb[0].mxu0
      %v501 = vadd.f32 0.0, %v500
      %v502 = vpop.f32.mrb[0].mxu0
      %503 = vmatprep.mubr.bf16.mxu0 0
      %504 = vmatmul.mubr.bf16.gmra.mrb[0].mxu0 %v275
      %v505 = vpop.f32.mrb[0].mxu0
      %v506 = vadd.f32 0.0, %v505
      %v507 = vpop.f32.mrb[0].mxu0
      %v508 = vpop.f32.mrb[0].mxu0
      %v509 = vpop.f32.mrb[0].mxu0
      %510 = vmatprep.mubr.bf16.mxu0 0
      %511 = vmatmul.mubr.bf16.gmra.mrb[0].mxu0 %v276
      %v512 = vpop.f32.mrb[0].mxu0
      %v513 = vpop.f32.mrb[0].mxu0
      %v514 = vpop.f32.mrb[0].mxu0
      %v515 = vpop.f32.mrb[0].mxu0
      %516 = vdwg.mxu0
      %vm522 = vcmask 1046528
      %v523 = vrot.slane %v490, 1
      %v524 = vrot.slane %v493, 1
      %v525 = vsel %vm522, %v523, %v524
      %v526 = vrot.slane %v498, 1
      %v527 = vsel %vm522, %v524, %v526
      %v528 = vrot.slane %v501, 1
      %v529 = vsel %vm522, %v526, %v528
      %v530 = vrot.slane %v506, 1
      %v531 = vsel %vm522, %v528, %v530
      %v536 = vadd.f32 %v364, %v525
      %v537 = vadd.f32 %v367, %v527
      %v538 = vadd.f32 %v372, %v529
      %v539 = vadd.f32 %v375, %v531
      %s540 = scalar_lea.vmem %s233, 128
      %v541 = vld [vmem:[%s540] sm:$0xf]
      %v542 = vld [vmem:[%s540 + $0x4] sm:$0xf]
      %v543 = vld [vmem:[%s540 + $0x8] sm:$0xf]
      %v544 = vld [vmem:[%s540 + $0xc] sm:$0xf]
      %v545 = vld [vmem:[%s540 + $0x10] sm:$0xf]
      %v546 = vld [vmem:[%s540 + $0x14] sm:$0xf]
      %v547 = vld [vmem:[%s540 + $0x18] sm:$0xf]
      %v548 = vld [vmem:[%s540 + $0x1c] sm:$0xf]
      %v549 = vld [vmem:[%s540 + $0x20] sm:$0xf]
      %v550 = vld [vmem:[%s540 + $0x24] sm:$0xf]
      %v551 = vld [vmem:[%s540 + $0x28] sm:$0xf]
      %v552 = vld [vmem:[%s540 + $0x2c] sm:$0xf]
      %v553 = vld [vmem:[%s540 + $0x30] sm:$0xf]
      %v554 = vld [vmem:[%s540 + $0x34] sm:$0xf]
      %v555 = vld [vmem:[%s540 + $0x38] sm:$0xf]
      %v556 = vld [vmem:[%s540 + $0x3c] sm:$0xf]
      %v573 = vunpack.c.l.b16 %v541
      %v574 = vunpack.c.l.b16 %v542
      %v575 = vunpack.c.l.b16 %v543
      %v576 = vunpack.c.l.b16 %v544
      %v577 = vunpack.c.l.b16 %v545
      %v578 = vunpack.c.l.b16 %v546
      %v579 = vunpack.c.l.b16 %v547
      %v580 = vunpack.c.l.b16 %v548
      %v581 = vunpack.c.l.b16 %v549
      %v582 = vunpack.c.l.b16 %v550
      %v583 = vunpack.c.l.b16 %v551
      %v584 = vunpack.c.l.b16 %v552
      %v585 = vunpack.c.l.b16 %v553
      %v586 = vunpack.c.l.b16 %v554
      %v587 = vunpack.c.l.b16 %v555
      %v588 = vunpack.c.l.b16 %v556
      %v589 = vpack.c.b16 %v574, %v573
      %v590 = vpack.c.b16 %v576, %v575
      %v591 = vpack.c.b16 %v578, %v577
      %v592 = vpack.c.b16 %v580, %v579
      %v593 = vpack.c.b16 %v582, %v581
      %v594 = vpack.c.b16 %v584, %v583
      %v595 = vpack.c.b16 %v586, %v585
      %v596 = vpack.c.b16 %v588, %v587
      %605 = vmatprep.subr.bf16.mxu0 0
      %606 = vmatpush1.bf16.msra.mxu0 %v589
      %607 = vmatprep.subr.bf16.mxu0 0
      %608 = vmatpush1.bf16.msra.mxu0 %v590
      %609 = vmatprep.subr.bf16.mxu0 0
      %610 = vmatpush1.bf16.msra.mxu0 %v591
      %611 = vmatprep.subr.bf16.mxu0 0
      %612 = vmatpush1.bf16.msra.mxu0 %v592
      %613 = vmatprep.subr.bf16.mxu0 0
      %614 = vmatpush1.bf16.msra.mxu0 %v593
      %615 = vmatprep.subr.bf16.mxu0 0
      %616 = vmatpush1.bf16.msra.mxu0 %v594
      %617 = vmatprep.subr.bf16.mxu0 0
      %618 = vmatpush1.bf16.msra.mxu0 %v595
      %619 = vmatprep.subr.bf16.mxu0 0
      %620 = vmatpush1.bf16.msra.mxu0 %v596
      %621 = vmatprep.subr.bf16.mxu0 0
      %622 = vmatpush1.bf16.msra.mxu0 0
      %623 = vmatprep.subr.bf16.mxu0 0
      %624 = vmatpush1.bf16.msra.mxu0 0
      %625 = vmatprep.subr.bf16.mxu0 0
      %626 = vmatpush1.bf16.msra.mxu0 0
      %627 = vmatprep.subr.bf16.mxu0 0
      %628 = vmatpush1.bf16.msra.mxu0 0
      %629 = vmatprep.subr.bf16.mxu0 0
      %630 = vmatpush1.bf16.msra.mxu0 0
      %631 = vmatprep.subr.bf16.mxu0 0
      %632 = vmatpush1.bf16.msra.mxu0 0
      %633 = vmatprep.subr.bf16.mxu0 0
      %634 = vmatpush1.bf16.msra.mxu0 0
      %635 = vmatprep.subr.bf16.mxu0 0
      %636 = vmatpush1.bf16.msra.mxu0 0
      %637 = vmatprep.mubr.bf16.mxu0 0
      %638 = vmatmul.mubr.bf16.gmra.mrb[0].mxu0 %v273
      %v639 = vpop.f32.mrb[0].mxu0
      %v640 = vpop.f32.mrb[0].mxu0
      %v641 = vpop.f32.mrb[0].mxu0
      %v642 = vadd.f32 0.0, %v641
      %v643 = vpop.f32.mrb[0].mxu0
      %644 = vmatprep.mubr.bf16.mxu0 0
      %645 = vmatmul.mubr.bf16.gmra.mrb[0].mxu0 %v274
      %v646 = vpop.f32.mrb[0].mxu0
      %v647 = vadd.f32 0.0, %v646
      %v648 = vpop.f32.mrb[0].mxu0
      %v649 = vpop.f32.mrb[0].mxu0
      %v650 = vadd.f32 0.0, %v649
      %v651 = vpop.f32.mrb[0].mxu0
      %652 = vmatprep.mubr.bf16.mxu0 0
      %653 = vmatmul.mubr.bf16.gmra.mrb[0].mxu0 %v275
      %v654 = vpop.f32.mrb[0].mxu0
      %v655 = vadd.f32 0.0, %v654
      %v656 = vpop.f32.mrb[0].mxu0
      %v657 = vpop.f32.mrb[0].mxu0
      %v658 = vpop.f32.mrb[0].mxu0
      %659 = vmatprep.mubr.bf16.mxu0 0
      %660 = vmatmul.mubr.bf16.gmra.mrb[0].mxu0 %v276
      %v661 = vpop.f32.mrb[0].mxu0
      %v662 = vpop.f32.mrb[0].mxu0
      %v663 = vpop.f32.mrb[0].mxu0
      %v664 = vpop.f32.mrb[0].mxu0
      %665 = vdwg.mxu0
      %v666 = vadd.f32 %v536, %v642
      %v667 = vadd.f32 %v537, %v647
      %v668 = vadd.f32 %v538, %v650
      %v669 = vadd.f32 %v539, %v655
      %s670 = scalar_lea.vmem %s233, 192
      %v671 = vld [vmem:[%s670] sm:$0xf]
      %v672 = vld [vmem:[%s670 + $0x4] sm:$0xf]
      %v673 = vld [vmem:[%s670 + $0x8] sm:$0xf]
      %v674 = vld [vmem:[%s670 + $0xc] sm:$0xf]
      %v675 = vld [vmem:[%s670 + $0x10] sm:$0xf]
      %v676 = vld [vmem:[%s670 + $0x14] sm:$0xf]
      %v677 = vld [vmem:[%s670 + $0x18] sm:$0xf]
      %v678 = vld [vmem:[%s670 + $0x1c] sm:$0xf]
      %v679 = vld [vmem:[%s670 + $0x20] sm:$0xf]
      %v680 = vld [vmem:[%s670 + $0x24] sm:$0xf]
      %v681 = vld [vmem:[%s670 + $0x28] sm:$0xf]
      %v682 = vld [vmem:[%s670 + $0x2c] sm:$0xf]
      %v683 = vld [vmem:[%s670 + $0x30] sm:$0xf]
      %v684 = vld [vmem:[%s670 + $0x34] sm:$0xf]
      %v685 = vld [vmem:[%s670 + $0x38] sm:$0xf]
      %v686 = vld [vmem:[%s670 + $0x3c] sm:$0xf]
      %v703 = vunpack.c.l.b16 %v671
      %v704 = vunpack.c.l.b16 %v672
      %v705 = vunpack.c.l.b16 %v673
      %v706 = vunpack.c.l.b16 %v674
      %v707 = vunpack.c.l.b16 %v675
      %v708 = vunpack.c.l.b16 %v676
      %v709 = vunpack.c.l.b16 %v677
      %v710 = vunpack.c.l.b16 %v678
      %v711 = vunpack.c.l.b16 %v679
      %v712 = vunpack.c.l.b16 %v680
      %v713 = vunpack.c.l.b16 %v681
      %v714 = vunpack.c.l.b16 %v682
      %v715 = vunpack.c.l.b16 %v683
      %v716 = vunpack.c.l.b16 %v684
      %v717 = vunpack.c.l.b16 %v685
      %v718 = vunpack.c.l.b16 %v686
      %v719 = vpack.c.b16 %v704, %v703
      %v720 = vpack.c.b16 %v706, %v705
      %v721 = vpack.c.b16 %v708, %v707
      %v722 = vpack.c.b16 %v710, %v709
      %v723 = vpack.c.b16 %v712, %v711
      %v724 = vpack.c.b16 %v714, %v713
      %v725 = vpack.c.b16 %v716, %v715
      %v726 = vpack.c.b16 %v718, %v717
      %735 = vmatprep.subr.bf16.mxu0 0
      %736 = vmatpush1.bf16.msra.mxu0 %v719
      %737 = vmatprep.subr.bf16.mxu0 0
      %738 = vmatpush1.bf16.msra.mxu0 %v720
      %739 = vmatprep.subr.bf16.mxu0 0
      %740 = vmatpush1.bf16.msra.mxu0 %v721
      %741 = vmatprep.subr.bf16.mxu0 0
      %742 = vmatpush1.bf16.msra.mxu0 %v722
      %743 = vmatprep.subr.bf16.mxu0 0
      %744 = vmatpush1.bf16.msra.mxu0 %v723
      %745 = vmatprep.subr.bf16.mxu0 0
      %746 = vmatpush1.bf16.msra.mxu0 %v724
      %747 = vmatprep.subr.bf16.mxu0 0
      %748 = vmatpush1.bf16.msra.mxu0 %v725
      %749 = vmatprep.subr.bf16.mxu0 0
      %750 = vmatpush1.bf16.msra.mxu0 %v726
      %751 = vmatprep.subr.bf16.mxu0 0
      %752 = vmatpush1.bf16.msra.mxu0 0
      %753 = vmatprep.subr.bf16.mxu0 0
      %754 = vmatpush1.bf16.msra.mxu0 0
      %755 = vmatprep.subr.bf16.mxu0 0
      %756 = vmatpush1.bf16.msra.mxu0 0
      %757 = vmatprep.subr.bf16.mxu0 0
      %758 = vmatpush1.bf16.msra.mxu0 0
      %759 = vmatprep.subr.bf16.mxu0 0
      %760 = vmatpush1.bf16.msra.mxu0 0
      %761 = vmatprep.subr.bf16.mxu0 0
      %762 = vmatpush1.bf16.msra.mxu0 0
      %763 = vmatprep.subr.bf16.mxu0 0
      %764 = vmatpush1.bf16.msra.mxu0 0
      %765 = vmatprep.subr.bf16.mxu0 0
      %766 = vmatpush1.bf16.msra.mxu0 0
      %767 = vmatprep.mubr.bf16.mxu0 0
      %768 = vmatmul.mubr.bf16.gmra.mrb[0].mxu0 %v273
      %v769 = vpop.f32.mrb[0].mxu0
      %v770 = vpop.f32.mrb[0].mxu0
      %v771 = vpop.f32.mrb[0].mxu0
      %v772 = vadd.f32 0.0, %v771
      %v773 = vpop.f32.mrb[0].mxu0
      %774 = vmatprep.mubr.bf16.mxu0 0
      %775 = vmatmul.mubr.bf16.gmra.mrb[0].mxu0 %v274
      %v776 = vpop.f32.mrb[0].mxu0
      %v777 = vadd.f32 0.0, %v776
      %v778 = vpop.f32.mrb[0].mxu0
      %v779 = vpop.f32.mrb[0].mxu0
      %v780 = vadd.f32 0.0, %v779
      %v781 = vpop.f32.mrb[0].mxu0
      %782 = vmatprep.mubr.bf16.mxu0 0
      %783 = vmatmul.mubr.bf16.gmra.mrb[0].mxu0 %v275
      %v784 = vpop.f32.mrb[0].mxu0
      %v785 = vadd.f32 0.0, %v784
      %v786 = vpop.f32.mrb[0].mxu0
      %v787 = vpop.f32.mrb[0].mxu0
      %v788 = vadd.f32 0.0, %v787
      %v789 = vpop.f32.mrb[0].mxu0
      %790 = vmatprep.mubr.bf16.mxu0 0
      %791 = vmatmul.mubr.bf16.gmra.mrb[0].mxu0 %v276
      %v792 = vpop.f32.mrb[0].mxu0
      %v793 = vpop.f32.mrb[0].mxu0
      %v794 = vpop.f32.mrb[0].mxu0
      %v795 = vpop.f32.mrb[0].mxu0
      %796 = vdwg.mxu0
      %v802 = vrot.slane %v772, 1
      %v803 = vrot.slane %v777, 1
      %v804 = vsel %vm522, %v802, %v803
      %v805 = vrot.slane %v780, 1
      %v806 = vsel %vm522, %v803, %v805
      %v807 = vrot.slane %v785, 1
      %v808 = vsel %vm522, %v805, %v807
      %v809 = vrot.slane %v788, 1
      %v810 = vsel %vm522, %v807, %v809
      %v815 = vadd.f32 %v666, %v804
      %v816 = vadd.f32 %v667, %v806
      %v817 = vadd.f32 %v668, %v808
      %v818 = vadd.f32 %v669, %v810
      %p819 = scmp.eq.s32.totalorder %s16, 0
      // Predicated region
      $region41: #{_lambda_.8} parent=39 // pred_check
        %p820 = pneg %p819
      $region42: #{_lambda_.8} parent=39 // pred_check_branch
        %822 = sbr.rel (%p820) target = $region44
      $region43: #{_lambda_.8} parent=39 // pred_region
        %823 = vst [vmem:[#allocation2] sm:$0xff] %v815
        %824 = vst [vmem:[#allocation2 + $0x8] sm:$0xff] %v816
        %825 = vst [vmem:[#allocation2 + $0x10] sm:$0xff] %v817
        %826 = vst [vmem:[#allocation2 + $0x18] sm:$0xff] %v818
      $region44: #{_lambda_.8} parent=39 // pred_fallthru
        _
      %p827 = scmp.ne.s32.totalorder %s16, 0
      // Predicated region
      $region45: #{_lambda_.8} parent=39 // pred_check
        %p828 = pneg %p827
      $region46: #{_lambda_.8} parent=39 // pred_check_branch
        %830 = sbr.rel (%p828) target = $region48
      $region47: #{_lambda_.8} parent=39 // pred_region
        %v831 = vld [vmem:[#allocation2] sm:$0xff]
        %v832 = vld [vmem:[#allocation2 + $0x8] sm:$0xff]
        %v833 = vld [vmem:[#allocation2 + $0x10] sm:$0xff]
        %v834 = vld [vmem:[#allocation2 + $0x18] sm:$0xff]
        %v835 = vadd.f32 %v831, %v815
        %v836 = vadd.f32 %v832, %v816
        %v837 = vadd.f32 %v833, %v817
        %v838 = vadd.f32 %v834, %v818
        %839 = vst [vmem:[#allocation2] sm:$0xff] %v835
        %840 = vst [vmem:[#allocation2 + $0x8] sm:$0xff] %v836
        %841 = vst [vmem:[#allocation2 + $0x10] sm:$0xff] %v837
        %842 = vst [vmem:[#allocation2 + $0x18] sm:$0xff] %v838
      $region48: #{_lambda_.8} parent=39 // pred_fallthru
        _
      %p843 = scmp.eq.s32.totalorder %s16, 3
      // Predicated region
      $region49: #{_lambda_.8} parent=39 // pred_check
        %p844 = pneg %p843
      $region50: #{_lambda_.8} parent=39 // pred_check_branch
        %846 = sbr.rel (%p844) target = $region52
      $region51: #{_lambda_.8} parent=39 // pred_region
        %v847 = vld [vmem:[#allocation2] sm:$0xff]
        %v848 = vld [vmem:[#allocation2 + $0x8] sm:$0xff]
        %v849 = vld [vmem:[#allocation2 + $0x10] sm:$0xff]
        %v850 = vld [vmem:[#allocation2 + $0x18] sm:$0xff]
        %v851 = vld [vmem:[%s4] sm:$0xff]
        %v852 = vld [vmem:[%s4 + $0x8] sm:$0xff]
        %v853 = vld [vmem:[%s4 + $0x10] sm:$0xff]
        %v854 = vld [vmem:[%s4 + $0x18] sm:$0xff]
        %856 = vset.pattern.permute.xlu0 0
        %857 = vperm.xlu0 %856, %v851
        %v858 = vpop.permute.xlu0 %857
        %861 = vset.pattern.permute.xlu0 0
        %862 = vperm.xlu0 %861, %v852
        %v863 = vpop.permute.xlu0 %862
        %866 = vset.pattern.permute.xlu0 0
        %867 = vperm.xlu0 %866, %v853
        %v868 = vpop.permute.xlu0 %867
        %871 = vset.pattern.permute.xlu0 0
        %872 = vperm.xlu0 %871, %v854
        %v873 = vpop.permute.xlu0 %872
        %v875 = vmul.f32 %v847, %v858
        %v876 = vmul.f32 %v848, %v863
        %v877 = vmul.f32 %v849, %v868
        %v878 = vmul.f32 %v850, %v873
        %v879 = vadd.f32 %v875, %v876
        %v880 = vadd.f32 %v879, %v877
        %v881 = vadd.f32 %v880, %v878
        %v882 = vrot.slane %v881, 4
        %v883 = vadd.f32 %v881, %v882
        %v884 = vrot.slane %v883, 2
        %v885 = vadd.f32 %v883, %v884
        %v886 = vrot.slane %v885, 1
        %v887 = vadd.f32 %v885, %v886
        %v888 = vmul.f32 %v887, 0.5
        %v889 = vsub.f32 %v847, %v888
        %v890 = vsub.f32 %v848, %v888
        %v891 = vsub.f32 %v849, %v888
        %v892 = vsub.f32 %v850, %v888
        %v893 = vmul.f32 %v889, %v858
        %v894 = vmul.f32 %v890, %v863
        %v895 = vmul.f32 %v891, %v868
        %v896 = vmul.f32 %v892, %v873
        %v897 = vmul.f32 %v893, %v893
        %v898 = vmul.f32 %v894, %v894
        %v899 = vmul.f32 %v895, %v895
        %v900 = vmul.f32 %v896, %v896
        %v901 = vadd.f32 %v897, %v898
        %v902 = vadd.f32 %v901, %v899
        %v903 = vadd.f32 %v902, %v900
        %v904 = vrot.slane %v903, 4
        %v905 = vadd.f32 %v903, %v904
        %v906 = vrot.slane %v905, 2
        %v907 = vadd.f32 %v905, %v906
        %v908 = vrot.slane %v907, 1
        %v909 = vadd.f32 %v907, %v908
        %v910 = vmul.f32 %v909, 0.5
        %v911 = vadd.f32 %v910, 1e-05
        %v912 = vrsqrt.pop %v911
        %v913 = vmul.f32 %v889, %v912
        %v914 = vmul.f32 %v890, %v912
        %v915 = vmul.f32 %v891, %v912
        %v916 = vmul.f32 %v892, %v912
        %v917 = vld [vmem:[%s2] sm:$0x1]
        %v919 = vlaneseq
        %v920 = vshrl.u32 %v919, 7
        %v921 = vsub.s32 0, %v920
        %v922 = vrot.slane %v917, %v921
        %v924 = vmul.f32 %v913, %v922
        %v925 = vmul.f32 %v914, %v922
        %v926 = vmul.f32 %v915, %v922
        %v927 = vmul.f32 %v916, %v922
        %v928 = vld [vmem:[%s3] sm:$0x1]
        %v930 = vlaneseq
        %v931 = vshrl.u32 %v930, 7
        %v932 = vsub.s32 0, %v931
        %v933 = vrot.slane %v928, %v932
        %v935 = vadd.f32 %v924, %v933
        %v936 = vadd.f32 %v925, %v933
        %v937 = vadd.f32 %v926, %v933
        %v938 = vadd.f32 %v927, %v933
        %v939 = vmax.f32 %v935, 0.0
        %v940 = vmax.f32 %v936, 0.0
        %v941 = vmax.f32 %v937, 0.0
        %v942 = vmax.f32 %v938, 0.0
        %v943 = vpack.c.bf16 %v940, %v939
        %v944 = vpack.c.bf16 %v942, %v941
        %v947 = vunpack.c.l.b16 %v943
        %v948 = vunpack.c.h.b16 %v943
        %v949 = vunpack.c.l.b16 %v944
        %v950 = vunpack.c.h.b16 %v944
        %v951 = vpack.c.b16 %v947, %v947
        %v952 = vpack.c.b16 %v948, %v948
        %v953 = vpack.c.b16 %v949, %v949
        %v954 = vpack.c.b16 %v950, %v950
        %959 = vst [vmem:[%s5] sm:$0xf] %v951
        %960 = vst [vmem:[%s5 + $0x4] sm:$0xf] %v952
        %961 = vst [vmem:[%s5 + $0x8] sm:$0xf] %v953
        %962 = vst [vmem:[%s5 + $0xc] sm:$0xf] %v954
      $region52: #{_lambda_.8} parent=39 // pred_fallthru
        _
      // Predicated region
      $region53: #{_lambda_.8} parent=39 // pred_check
        %p963 = pneg %p144
      $region54: #{_lambda_.8} parent=39 // pred_check_branch
        %965 = sbr.rel (%p963) target = $region56
      $region55: #{_lambda_.8} parent=39 // pred_region
        _
      $region56: #{_lambda_.8} parent=39 // pred_fallthru
        _
      // Predicated region
      $region57: #{_lambda_.8} parent=39 // pred_check
        %p966 = pneg %p144
      $region58: #{_lambda_.8} parent=39 // pred_check_branch
        %968 = sbr.rel (%p966) target = $region60
      $region59: #{_lambda_.8} parent=39 // pred_region
        _
      $region60: #{_lambda_.8} parent=39 // pred_fallthru
        _
    $region40: #{_lambda_.8} parent=5 // pred_fallthru
      _
    %p969 = scmp.le.s32.totalorder 2, %s11
    // Predicated region
    $region61: #{_lambda_.8} parent=5 // pred_check
      %p970 = pneg %p969
    $region62: #{_lambda_.8} parent=5 // pred_check_branch
      %972 = sbr.rel (%p970) target = $region64
    $region63: #{_lambda_.8} parent=5 // pred_region
      %s973 = ssub.s32 %s11, 2
    $region64: #{_lambda_.8} parent=5 // pred_fallthru
      _
  $region6: #{_lambda_.8} parent=0 // loop_footer
    %s15 = sadd.s32 1, %s11
  $region7: #{_lambda_.8} parent=0 // loop_footer_branch
    %10 = sbr.rel target = $region3
  $region8: #{_lambda_.8} parent=0 // loop_exit
    _

</llo_original>
